<compile_context>
chip_gen: v7x
topology: tpu7x:2x2x1
jax: 0.10.0
libtpu: 0.0.40
codegen_flags: <defaults>
</compile_context>

<pallas_src>
import functools

import jax
import jax.numpy as jnp
from jax.experimental import pallas as pl
from jax.experimental.pallas import tpu as pltpu


# ----------------------------------------------------------------------------
# Fused kernel
# ----------------------------------------------------------------------------
def _gin_fused_kernel(a_ref, x_ref,
                      w1a_ref, b1a_ref, w2a_ref, b2a_ref,
                      w1b_ref, b1b_ref, w2b_ref, b2b_ref,
                      w1c_ref, b1c_ref, w2c_ref, b2c_ref,
                      wl1_ref, bl1_ref, wl2_ref, bl2_ref,
                      o_ref,
                      acc_ref, h1_scr, h2_scr,
                      *, nclass):
    l = pl.program_id(0)          # layer (0,1,2)
    i = pl.program_id(1)          # destination-row tile
    k = pl.program_id(2)          # source-col tile (reduction)
    nk = pl.num_programs(2)

    tm, tk = a_ref.shape
    din = x_ref.shape[1]
    dh = h1_scr.shape[1]

    # ---- init accumulator at the start of each reduction -------------------
    @pl.when(k == 0)
    def _():
        acc_ref[...] = jnp.zeros_like(acc_ref)

    # ---- accumulate (A + I)[i, k] @ src[k] ---------------------------------
    a_blk = a_ref[...]                                     # (tm, tk) bf16
    col = pl.ds(pl.multiple_of(k * tk, tk), tk)

    @pl.when(l == 0)
    def _():
        acc_ref[:, :din] += jnp.dot(a_blk, x_ref[...],
                                    preferred_element_type=jnp.float32)

    @pl.when(l == 1)
    def _():
        acc_ref[:, :dh] += jnp.dot(a_blk, h1_scr[col, :],
                                   preferred_element_type=jnp.float32)

    @pl.when(l == 2)
    def _():
        acc_ref[:, :dh] += jnp.dot(a_blk, h2_scr[col, :],
                                   preferred_element_type=jnp.float32)

    # ---- finalize: per-layer MLP, and the head after the last layer --------
    @pl.when(k == nk - 1)
    def _():
        rows = pl.ds(pl.multiple_of(i * tm, tm), tm)

        def mlp(z, w1, b1, w2, b2):
            h = jnp.dot(z.astype(jnp.bfloat16), w1[...],
                        preferred_element_type=jnp.float32) + b1[...]
            h = jnp.maximum(h, 0.0)
            h = jnp.dot(h.astype(jnp.bfloat16), w2[...],
                        preferred_element_type=jnp.float32) + b2[...]
            return jnp.maximum(h, 0.0)

        @pl.when(l == 0)
        def _():
            h1_scr[rows, :] = mlp(acc_ref[:, :din], w1a_ref, b1a_ref,
                                  w2a_ref, b2a_ref).astype(jnp.bfloat16)

        @pl.when(l == 1)
        def _():
            h2_scr[rows, :] = mlp(acc_ref[:, :dh], w1b_ref, b1b_ref,
                                  w2b_ref, b2b_ref).astype(jnp.bfloat16)

        @pl.when(l == 2)
        def _():
            h3 = mlp(acc_ref[:, :dh], w1c_ref, b1c_ref,
                     w2c_ref, b2c_ref).astype(jnp.bfloat16)
            h1 = h1_scr[rows, :]
            h2 = h2_scr[rows, :]
            # lin1 over concat(h1, h2, h3) as three partial matmuls.
            p = jnp.dot(h1, wl1_ref[0], preferred_element_type=jnp.float32)
            p = p + jnp.dot(h2, wl1_ref[1], preferred_element_type=jnp.float32)
            p = p + jnp.dot(h3, wl1_ref[2], preferred_element_type=jnp.float32)
            p = jnp.maximum(p + bl1_ref[...], 0.0)
            logits = jnp.dot(p.astype(jnp.bfloat16), wl2_ref[...],
                             preferred_element_type=jnp.float32) + bl2_ref[...]
            # Mask padded class columns so they cannot affect the log-softmax.
            cls = jax.lax.broadcasted_iota(jnp.int32, logits.shape, 1)
            logits = jnp.where(cls < nclass, logits, -1e30)
            m = jnp.max(logits, axis=1, keepdims=True)
            lse = jnp.log(jnp.sum(jnp.exp(logits - m), axis=1, keepdims=True)) + m
            o_ref[...] = (logits - lse).astype(o_ref.dtype)


# ----------------------------------------------------------------------------
# Glue: padding, tiling, pallas_call wrapper
# ----------------------------------------------------------------------------
def _round_up(v, m):
    return ((v + m - 1) // m) * m


def _pad_to(a, shape, dtype):
    out = jnp.zeros(shape, dtype)
    return out.at[tuple(slice(0, s) for s in a.shape)].set(a.astype(dtype))


def _pick_tile(n_pad, cap):
    t = min(cap, n_pad)
    while n_pad % t != 0:
        t -= 128
    return t


def _resident_spec(shape):
    # Whole (small) array kept VMEM-resident: block index never changes.
    return pl.BlockSpec(shape, lambda l, i, k: (0,) * len(shape))


def _vmem_limit_bytes():
    # Budget ~3/4 of this generation's physical VMEM (v5e/v6e: 128 MiB,
    # v7x: 64 MiB) so larger row tiles / h-scratch still compile with headroom.
    try:
        return int(pltpu.get_tpu_info().vmem_capacity_bytes * 3 // 4)
    except Exception:
        return 48 * 1024 * 1024


@jax.jit
def gin_forward(params, x, adj):
    n, nfeat = x.shape
    nhid = params["gc1"][2].shape[1]
    nclass = params["lin2"][0].shape[1]

    n_pad = _round_up(n, 128)
    din = _round_up(nfeat, 128)
    dh = _round_up(nhid, 128)
    hp = _round_up(3 * nhid, 128)
    cp = _round_up(nclass, 128)
    dmax = max(din, dh)

    # Fold the GIN self term (eps = 0) into the adjacency once: (A + I).
    a_plus = _pad_to(adj + jnp.eye(n, dtype=adj.dtype), (n_pad, n_pad), jnp.bfloat16)
    x_p = _pad_to(x, (n_pad, din), jnp.bfloat16)

    def conv_p(w1, b1, w2, b2, in_dim):
        return (_pad_to(w1, (in_dim, dh), jnp.bfloat16),
                _pad_to(b1, (1, dh), jnp.float32),
                _pad_to(w2, (dh, dh), jnp.bfloat16),
                _pad_to(b2, (1, dh), jnp.float32))

    gc1 = conv_p(*params["gc1"], din)
    gc2 = conv_p(*params["gc2"], dh)
    gc3 = conv_p(*params["gc3"], dh)

    # lin1: split (3*nhid, 3*nhid) into three (nhid, 3*nhid) row blocks so the
    # kernel never materializes concat(h1, h2, h3).
    wl1_full, bl1 = params["lin1"]
    wl1 = jnp.stack(
        [_pad_to(wl1_full[j * nhid:(j + 1) * nhid, :], (dh, hp), jnp.bfloat16)
         for j in range(3)], axis=0)                       # (3, dh, hp)
    bl1_p = _pad_to(bl1, (1, hp), jnp.float32)
    wl2_full, bl2 = params["lin2"]
    wl2 = _pad_to(wl2_full, (hp, cp), jnp.bfloat16)
    bl2_p = _pad_to(bl2, (1, cp), jnp.float32)

    tm = _pick_tile(n_pad, 512)
    tk = _pick_tile(n_pad, 1024)
    ni, nk = n_pad // tm, n_pad // tk

    in_specs = [
        pl.BlockSpec((tm, tk), lambda l, i, k: (i, k)),                         # A + I
        pl.BlockSpec((tk, din), lambda l, i, k: (jnp.where(l == 0, k, 0), 0)),  # X
        _resident_spec((din, dh)), _resident_spec((1, dh)),   # gc1
        _resident_spec((dh, dh)), _resident_spec((1, dh)),
        _resident_spec((dh, dh)), _resident_spec((1, dh)),    # gc2
        _resident_spec((dh, dh)), _resident_spec((1, dh)),
        _resident_spec((dh, dh)), _resident_spec((1, dh)),    # gc3
        _resident_spec((dh, dh)), _resident_spec((1, dh)),
        _resident_spec((3, dh, hp)), _resident_spec((1, hp)),  # lin1
        _resident_spec((hp, cp)), _resident_spec((1, cp)),     # lin2
    ]
    # Output block index only moves during the last layer -> no garbage
    # write-backs while layers 0/1 are still filling the VMEM scratch.
    out_spec = pl.BlockSpec((tm, cp), lambda l, i, k: (jnp.where(l == 2, i, 0), 0))

    out_pad = pl.pallas_call(
        functools.partial(_gin_fused_kernel, nclass=nclass),
        out_shape=jax.ShapeDtypeStruct((n_pad, cp), jnp.float32),
        grid_spec=pltpu.PrefetchScalarGridSpec(
            num_scalar_prefetch=0,
            grid=(3, ni, nk),
            in_specs=in_specs,
            out_specs=out_spec,
            scratch_shapes=[
                pltpu.VMEM((tm, dmax), jnp.float32),       # reduction accumulator
                pltpu.VMEM((n_pad, dh), jnp.bfloat16),     # h1 (all rows)
                pltpu.VMEM((n_pad, dh), jnp.bfloat16),     # h2 (all rows)
            ]),
        compiler_params=pltpu.CompilerParams(
            dimension_semantics=("arbitrary", "arbitrary", "arbitrary"),
            vmem_limit_bytes=_vmem_limit_bytes()),
    )(a_plus, x_p, *gc1, *gc2, *gc3, wl1, bl1_p, wl2, bl2_p)

    return out_pad[:n, :nclass]


# ----------------------------------------------------------------------------
# Parameter init (PyTorch nn.Linear default: U(-1/sqrt(fan_in), 1/sqrt(fan_in)))
# Weights are stored as (in, out) so kernels compute x @ W + b directly.
# ----------------------------------------------------------------------------
def linear_params(key, fan_in, fan_out):
    kw, kb = jax.random.split(key)
    bound = 1.0 / jnp.sqrt(fan_in)
    w = jax.random.uniform(kw, (fan_in, fan_out), jnp.float32, -bound, bound)
    b = jax.random.uniform(kb, (1, fan_out), jnp.float32, -bound, bound)
    return w, b


def init_gin_params(key, nfeat, nhid, nclass):
    keys = jax.random.split(key, 8)
    params = {}
    params["gc1"] = (*linear_params(keys[0], nfeat, nhid), *linear_params(keys[1], nhid, nhid))
    params["gc2"] = (*linear_params(keys[2], nhid, nhid), *linear_params(keys[3], nhid, nhid))
    params["gc3"] = (*linear_params(keys[4], nhid, nhid), *linear_params(keys[5], nhid, nhid))
    params["lin1"] = linear_params(keys[6], nhid * 3, nhid * 3)
    params["lin2"] = linear_params(keys[7], nhid * 3, nclass)
    return params


# ----------------------------------------------------------------------------
# Pure-JAX reference with the same bf16 matmul operands (f32 accumulation).
# ----------------------------------------------------------------------------
def reference_forward(params, x, adj):
    bf = jnp.bfloat16

    def dot(a, b):
        return jnp.dot(a.astype(bf), b.astype(bf), preferred_element_type=jnp.float32)

    a_plus = adj + jnp.eye(adj.shape[0], dtype=adj.dtype)

    def conv(xx, w1, b1, w2, b2):
        z = dot(a_plus, xx)
        h = jnp.maximum(dot(z, w1) + b1, 0.0)
        return jnp.maximum(dot(h, w2) + b2, 0.0)

    h1 = conv(x, *params["gc1"])
    h2 = conv(h1, *params["gc2"])
    h3 = conv(h2, *params["gc3"])
    h = jnp.concatenate((h1, h2, h3), axis=1)
    h = jnp.maximum(dot(h, params["lin1"][0]) + params["lin1"][1], 0.0)
    logits = dot(h, params["lin2"][0]) + params["lin2"][1]
    return jax.nn.log_softmax(logits, axis=1)


if __name__ == "__main__":
    # Small synthetic graph
    N, NFEAT, NHID, NCLASS, NEDGES = 64, 16, 32, 8, 256

    key = jax.random.PRNGKey(0)
    k_x, k_e, k_p = jax.random.split(key, 3)

    x = jax.random.normal(k_x, (N, NFEAT), jnp.float32)
    edge_index = jax.random.randint(k_e, (2, NEDGES), 0, N)  # row0=src, row1=dst

    # Dense adjacency with edge multiplicity: A[dst, src] += 1 (glue, not hot path)
    src, dst = edge_index[0], edge_index[1]
    adj = jnp.zeros((N, N), jnp.float32).at[dst, src].add(1.0)

    params = init_gin_params(k_p, NFEAT, NHID, NCLASS)

    out = gin_forward(params, x, adj)
    out = jax.block_until_ready(out)

    ref = reference_forward(params, x, adj)
    assert out.shape == (N, NCLASS)
    assert jnp.allclose(out, ref, atol=2e-3, rtol=2e-3), "mismatch vs JAX reference"

    print("KERNEL_OK")
</pallas_src>

<mosaic_0001>
module attributes {stable_mosaic.version = 11 : i64} {
  func.func @_gin_fused_kernel(%arg0: i32, %arg1: i32, %arg2: i32, %arg3: memref<128x128xbf16, #tpu.memory_space<vmem>>, %arg4: memref<128x128xbf16, #tpu.memory_space<vmem>>, %arg5: memref<128x128xbf16, #tpu.memory_space<vmem>>, %arg6: memref<1x128xf32, #tpu.memory_space<vmem>>, %arg7: memref<128x128xbf16, #tpu.memory_space<vmem>>, %arg8: memref<1x128xf32, #tpu.memory_space<vmem>>, %arg9: memref<128x128xbf16, #tpu.memory_space<vmem>>, %arg10: memref<1x128xf32, #tpu.memory_space<vmem>>, %arg11: memref<128x128xbf16, #tpu.memory_space<vmem>>, %arg12: memref<1x128xf32, #tpu.memory_space<vmem>>, %arg13: memref<128x128xbf16, #tpu.memory_space<vmem>>, %arg14: memref<1x128xf32, #tpu.memory_space<vmem>>, %arg15: memref<128x128xbf16, #tpu.memory_space<vmem>>, %arg16: memref<1x128xf32, #tpu.memory_space<vmem>>, %arg17: memref<3x128x128xbf16, #tpu.memory_space<vmem>>, %arg18: memref<1x128xf32, #tpu.memory_space<vmem>>, %arg19: memref<128x128xbf16, #tpu.memory_space<vmem>>, %arg20: memref<1x128xf32, #tpu.memory_space<vmem>>, %arg21: memref<128x128xf32, #tpu.memory_space<vmem>>, %arg22: memref<128x128xf32, #tpu.memory_space<vmem>>, %arg23: memref<128x128xbf16, #tpu.memory_space<vmem>>, %arg24: memref<128x128xbf16, #tpu.memory_space<vmem>>) attributes {dimension_semantics = [#tpu.dimension_semantics<arbitrary>, #tpu.dimension_semantics<arbitrary>, #tpu.dimension_semantics<arbitrary>], iteration_bounds = array<i64: 3, 1, 1>, scalar_prefetch = 0 : i64, scratch_operands = 3 : i64, tpu.core_type = #tpu.core_type<tc>, window_params = [{transform_indices = @transform_0, window_bounds = array<i64: 128, 128>}, {transform_indices = @transform_1, window_bounds = array<i64: 128, 128>}, {pipeline_mode = #tpu.pipeline_mode<synchronous>, transform_indices = @transform_2, window_bounds = array<i64: 128, 128>}, {pipeline_mode = #tpu.pipeline_mode<synchronous>, transform_indices = @transform_3, window_bounds = array<i64: 1, 128>}, {pipeline_mode = #tpu.pipeline_mode<synchronous>, transform_indices = @transform_4, window_bounds = array<i64: 128, 128>}, {pipeline_mode = #tpu.pipeline_mode<synchronous>, transform_indices = @transform_5, window_bounds = array<i64: 1, 128>}, {pipeline_mode = #tpu.pipeline_mode<synchronous>, transform_indices = @transform_6, window_bounds = array<i64: 128, 128>}, {pipeline_mode = #tpu.pipeline_mode<synchronous>, transform_indices = @transform_7, window_bounds = array<i64: 1, 128>}, {pipeline_mode = #tpu.pipeline_mode<synchronous>, transform_indices = @transform_8, window_bounds = array<i64: 128, 128>}, {pipeline_mode = #tpu.pipeline_mode<synchronous>, transform_indices = @transform_9, window_bounds = array<i64: 1, 128>}, {pipeline_mode = #tpu.pipeline_mode<synchronous>, transform_indices = @transform_10, window_bounds = array<i64: 128, 128>}, {pipeline_mode = #tpu.pipeline_mode<synchronous>, transform_indices = @transform_11, window_bounds = array<i64: 1, 128>}, {pipeline_mode = #tpu.pipeline_mode<synchronous>, transform_indices = @transform_12, window_bounds = array<i64: 128, 128>}, {pipeline_mode = #tpu.pipeline_mode<synchronous>, transform_indices = @transform_13, window_bounds = array<i64: 1, 128>}, {pipeline_mode = #tpu.pipeline_mode<synchronous>, transform_indices = @transform_14, window_bounds = array<i64: 3, 128, 128>}, {pipeline_mode = #tpu.pipeline_mode<synchronous>, transform_indices = @transform_15, window_bounds = array<i64: 1, 128>}, {pipeline_mode = #tpu.pipeline_mode<synchronous>, transform_indices = @transform_16, window_bounds = array<i64: 128, 128>}, {pipeline_mode = #tpu.pipeline_mode<synchronous>, transform_indices = @transform_17, window_bounds = array<i64: 1, 128>}, {transform_indices = @transform_18, window_bounds = array<i64: 128, 128>}]} {
    %c0_i32 = arith.constant 0 : i32
    %0 = arith.cmpi eq, %arg2, %c0_i32 : i32
    %1 = arith.extui %0 : i1 to i32
    %c0_i32_0 = arith.constant 0 : i32
    %2 = arith.cmpi ne, %1, %c0_i32_0 : i32
    scf.if %2 {
      %cst = arith.constant 0.000000e+00 : f32
      %18 = vector.broadcast %cst : f32 to vector<128x128xf32>
      %c0_8 = arith.constant 0 : index
      %c0_9 = arith.constant 0 : index
      %19 = vector.load %arg22[%c0_8, %c0_9] : memref<128x128xf32, #tpu.memory_space<vmem>>, vector<128x128xf32>
      tpu.vector_store %arg22[%c0_8, %c0_9], %18 {strides = array<i32>} : memref<128x128xf32, #tpu.memory_space<vmem>>, vector<128x128xf32>,
    } else {
    }
    %c0 = arith.constant 0 : index
    %c0_1 = arith.constant 0 : index
    %3 = vector.load %arg3[%c0, %c0_1] : memref<128x128xbf16, #tpu.memory_space<vmem>>, vector<128x128xbf16>
    %c128_i32 = arith.constant 128 : i32
    %4 = arith.muli %arg2, %c128_i32 : i32
    %5 = tpu.assume_multiple %4, 128 : i32
    %c0_i32_2 = arith.constant 0 : i32
    %6 = arith.cmpi eq, %arg0, %c0_i32_2 : i32
    %7 = arith.extui %6 : i1 to i32
    %c0_i32_3 = arith.constant 0 : i32
    %8 = arith.cmpi ne, %7, %c0_i32_3 : i32
    scf.if %8 {
      %c0_8 = arith.constant 0 : index
      %c0_9 = arith.constant 0 : index
      %18 = vector.load %arg22[%c0_8, %c0_9] : memref<128x128xf32, #tpu.memory_space<vmem>>, vector<128x128xf32>
      %c0_10 = arith.constant 0 : index
      %c0_11 = arith.constant 0 : index
      %19 = vector.load %arg4[%c0_10, %c0_11] : memref<128x128xbf16, #tpu.memory_space<vmem>>, vector<128x128xbf16>
      %cst = arith.constant dense<0.000000e+00> : vector<128x128xf32>
      %20 = tpu.matmul %3, %19, %cst {dimension_numbers = #tpu.dot_dimension_numbers<[1], [0], [0], [1], [0, 0, 1, 1], [], []>} : vector<128x128xbf16>, vector<128x128xbf16>, vector<128x128xf32> -> vector<128x128xf32>
      %21 = arith.addf %18, %20 : vector<128x128xf32>
      %c0_12 = arith.constant 0 : index
      %c0_13 = arith.constant 0 : index
      %22 = vector.load %arg22[%c0_12, %c0_13] : memref<128x128xf32, #tpu.memory_space<vmem>>, vector<128x128xf32>
      tpu.vector_store %arg22[%c0_12, %c0_13], %21 {strides = array<i32>} : memref<128x128xf32, #tpu.memory_space<vmem>>, vector<128x128xf32>,
    } else {
    }
    %c1_i32 = arith.constant 1 : i32
    %9 = arith.cmpi eq, %arg0, %c1_i32 : i32
    %10 = arith.extui %9 : i1 to i32
    %c0_i32_4 = arith.constant 0 : i32
    %11 = arith.cmpi ne, %10, %c0_i32_4 : i32
    scf.if %11 {
      %c0_8 = arith.constant 0 : index
      %c0_9 = arith.constant 0 : index
      %18 = vector.load %arg22[%c0_8, %c0_9] : memref<128x128xf32, #tpu.memory_space<vmem>>, vector<128x128xf32>
      %19 = arith.index_cast %5 : i32 to index
      %c0_10 = arith.constant 0 : index
      %20 = vector.load %arg23[%19, %c0_10] : memref<128x128xbf16, #tpu.memory_space<vmem>>, vector<128x128xbf16>
      %cst = arith.constant dense<0.000000e+00> : vector<128x128xf32>
      %21 = tpu.matmul %3, %20, %cst {dimension_numbers = #tpu.dot_dimension_numbers<[1], [0], [0], [1], [0, 0, 1, 1], [], []>} : vector<128x128xbf16>, vector<128x128xbf16>, vector<128x128xf32> -> vector<128x128xf32>
      %22 = arith.addf %18, %21 : vector<128x128xf32>
      %c0_11 = arith.constant 0 : index
      %c0_12 = arith.constant 0 : index
      %23 = vector.load %arg22[%c0_11, %c0_12] : memref<128x128xf32, #tpu.memory_space<vmem>>, vector<128x128xf32>
      tpu.vector_store %arg22[%c0_11, %c0_12], %22 {strides = array<i32>} : memref<128x128xf32, #tpu.memory_space<vmem>>, vector<128x128xf32>,
    } else {
    }
    %c2_i32 = arith.constant 2 : i32
    %12 = arith.cmpi eq, %arg0, %c2_i32 : i32
    %13 = arith.extui %12 : i1 to i32
    %c0_i32_5 = arith.constant 0 : i32
    %14 = arith.cmpi ne, %13, %c0_i32_5 : i32
    scf.if %14 {
      %c0_8 = arith.constant 0 : index
      %c0_9 = arith.constant 0 : index
      %18 = vector.load %arg22[%c0_8, %c0_9] : memref<128x128xf32, #tpu.memory_space<vmem>>, vector<128x128xf32>
      %19 = arith.index_cast %5 : i32 to index
      %c0_10 = arith.constant 0 : index
      %20 = vector.load %arg24[%19, %c0_10] : memref<128x128xbf16, #tpu.memory_space<vmem>>, vector<128x128xbf16>
      %cst = arith.constant dense<0.000000e+00> : vector<128x128xf32>
      %21 = tpu.matmul %3, %20, %cst {dimension_numbers = #tpu.dot_dimension_numbers<[1], [0], [0], [1], [0, 0, 1, 1], [], []>} : vector<128x128xbf16>, vector<128x128xbf16>, vector<128x128xf32> -> vector<128x128xf32>
      %22 = arith.addf %18, %21 : vector<128x128xf32>
      %c0_11 = arith.constant 0 : index
      %c0_12 = arith.constant 0 : index
      %23 = vector.load %arg22[%c0_11, %c0_12] : memref<128x128xf32, #tpu.memory_space<vmem>>, vector<128x128xf32>
      tpu.vector_store %arg22[%c0_11, %c0_12], %22 {strides = array<i32>} : memref<128x128xf32, #tpu.memory_space<vmem>>, vector<128x128xf32>,
    } else {
    }
    %c0_i32_6 = arith.constant 0 : i32
    %15 = arith.cmpi eq, %arg2, %c0_i32_6 : i32
    %16 = arith.extui %15 : i1 to i32
    %c0_i32_7 = arith.constant 0 : i32
    %17 = arith.cmpi ne, %16, %c0_i32_7 : i32
    scf.if %17 {
      %c128_i32_8 = arith.constant 128 : i32
      %18 = arith.muli %arg1, %c128_i32_8 : i32
      %19 = tpu.assume_multiple %18, 128 : i32
      %c0_i32_9 = arith.constant 0 : i32
      %20 = arith.cmpi eq, %arg0, %c0_i32_9 : i32
      %21 = arith.extui %20 : i1 to i32
      %c0_i32_10 = arith.constant 0 : i32
      %22 = arith.cmpi ne, %21, %c0_i32_10 : i32
      scf.if %22 {
        %c0_15 = arith.constant 0 : index
        %c0_16 = arith.constant 0 : index
        %29 = vector.load %arg22[%c0_15, %c0_16] : memref<128x128xf32, #tpu.memory_space<vmem>>, vector<128x128xf32>
        %30 = arith.truncf %29 : vector<128x128xf32> to vector<128x128xbf16>
        %c0_17 = arith.constant 0 : index
        %c0_18 = arith.constant 0 : index
        %31 = vector.load %arg5[%c0_17, %c0_18] : memref<128x128xbf16, #tpu.memory_space<vmem>>, vector<128x128xbf16>
        %cst = arith.constant dense<0.000000e+00> : vector<128x128xf32>
        %32 = tpu.matmul %30, %31, %cst {dimension_numbers = #tpu.dot_dimension_numbers<[1], [0], [0], [1], [0, 0, 1, 1], [], []>} : vector<128x128xbf16>, vector<128x128xbf16>, vector<128x128xf32> -> vector<128x128xf32>
        %c0_19 = arith.constant 0 : index
        %c0_20 = arith.constant 0 : index
        %33 = vector.load %arg6[%c0_19, %c0_20] : memref<1x128xf32, #tpu.memory_space<vmem>>, vector<1x128xf32>
        %34 = vector.broadcast %33 : vector<1x128xf32> to vector<128x128xf32>
        %35 = arith.addf %32, %34 : vector<128x128xf32>
        %cst_21 = arith.constant 0.000000e+00 : f32
        %36 = vector.broadcast %cst_21 : f32 to vector<128x128xf32>
        %37 = arith.maximumf %35, %36 : vector<128x128xf32>
        %38 = arith.truncf %37 : vector<128x128xf32> to vector<128x128xbf16>
        %c0_22 = arith.constant 0 : index
        %c0_23 = arith.constant 0 : index
        %39 = vector.load %arg7[%c0_22, %c0_23] : memref<128x128xbf16, #tpu.memory_space<vmem>>, vector<128x128xbf16>
        %cst_24 = arith.constant dense<0.000000e+00> : vector<128x128xf32>
        %40 = tpu.matmul %38, %39, %cst_24 {dimension_numbers = #tpu.dot_dimension_numbers<[1], [0], [0], [1], [0, 0, 1, 1], [], []>} : vector<128x128xbf16>, vector<128x128xbf16>, vector<128x128xf32> -> vector<128x128xf32>
        %c0_25 = arith.constant 0 : index
        %c0_26 = arith.constant 0 : index
        %41 = vector.load %arg8[%c0_25, %c0_26] : memref<1x128xf32, #tpu.memory_space<vmem>>, vector<1x128xf32>
        %42 = vector.broadcast %41 : vector<1x128xf32> to vector<128x128xf32>
        %43 = arith.addf %40, %42 : vector<128x128xf32>
        %cst_27 = arith.constant 0.000000e+00 : f32
        %44 = vector.broadcast %cst_27 : f32 to vector<128x128xf32>
        %45 = arith.maximumf %43, %44 : vector<128x128xf32>
        %46 = arith.truncf %45 : vector<128x128xf32> to vector<128x128xbf16>
        %47 = arith.index_cast %19 : i32 to index
        %c0_28 = arith.constant 0 : index
        %48 = vector.load %arg23[%47, %c0_28] : memref<128x128xbf16, #tpu.memory_space<vmem>>, vector<128x128xbf16>
        tpu.vector_store %arg23[%47, %c0_28], %46 {strides = array<i32>} : memref<128x128xbf16, #tpu.memory_space<vmem>>, vector<128x128xbf16>,
      } else {
      }
      %c1_i32_11 = arith.constant 1 : i32
      %23 = arith.cmpi eq, %arg0, %c1_i32_11 : i32
      %24 = arith.extui %23 : i1 to i32
      %c0_i32_12 = arith.constant 0 : i32
      %25 = arith.cmpi ne, %24, %c0_i32_12 : i32
      scf.if %25 {
        %c0_15 = arith.constant 0 : index
        %c0_16 = arith.constant 0 : index
        %29 = vector.load %arg22[%c0_15, %c0_16] : memref<128x128xf32, #tpu.memory_space<vmem>>, vector<128x128xf32>
        %30 = arith.truncf %29 : vector<128x128xf32> to vector<128x128xbf16>
        %c0_17 = arith.constant 0 : index
        %c0_18 = arith.constant 0 : index
        %31 = vector.load %arg9[%c0_17, %c0_18] : memref<128x128xbf16, #tpu.memory_space<vmem>>, vector<128x128xbf16>
        %cst = arith.constant dense<0.000000e+00> : vector<128x128xf32>
        %32 = tpu.matmul %30, %31, %cst {dimension_numbers = #tpu.dot_dimension_numbers<[1], [0], [0], [1], [0, 0, 1, 1], [], []>} : vector<128x128xbf16>, vector<128x128xbf16>, vector<128x128xf32> -> vector<128x128xf32>
        %c0_19 = arith.constant 0 : index
        %c0_20 = arith.constant 0 : index
        %33 = vector.load %arg10[%c0_19, %c0_20] : memref<1x128xf32, #tpu.memory_space<vmem>>, vector<1x128xf32>
        %34 = vector.broadcast %33 : vector<1x128xf32> to vector<128x128xf32>
        %35 = arith.addf %32, %34 : vector<128x128xf32>
        %cst_21 = arith.constant 0.000000e+00 : f32
        %36 = vector.broadcast %cst_21 : f32 to vector<128x128xf32>
        %37 = arith.maximumf %35, %36 : vector<128x128xf32>
        %38 = arith.truncf %37 : vector<128x128xf32> to vector<128x128xbf16>
        %c0_22 = arith.constant 0 : index
        %c0_23 = arith.constant 0 : index
        %39 = vector.load %arg11[%c0_22, %c0_23] : memref<128x128xbf16, #tpu.memory_space<vmem>>, vector<128x128xbf16>
        %cst_24 = arith.constant dense<0.000000e+00> : vector<128x128xf32>
        %40 = tpu.matmul %38, %39, %cst_24 {dimension_numbers = #tpu.dot_dimension_numbers<[1], [0], [0], [1], [0, 0, 1, 1], [], []>} : vector<128x128xbf16>, vector<128x128xbf16>, vector<128x128xf32> -> vector<128x128xf32>
        %c0_25 = arith.constant 0 : index
        %c0_26 = arith.constant 0 : index
        %41 = vector.load %arg12[%c0_25, %c0_26] : memref<1x128xf32, #tpu.memory_space<vmem>>, vector<1x128xf32>
        %42 = vector.broadcast %41 : vector<1x128xf32> to vector<128x128xf32>
        %43 = arith.addf %40, %42 : vector<128x128xf32>
        %cst_27 = arith.constant 0.000000e+00 : f32
        %44 = vector.broadcast %cst_27 : f32 to vector<128x128xf32>
        %45 = arith.maximumf %43, %44 : vector<128x128xf32>
        %46 = arith.truncf %45 : vector<128x128xf32> to vector<128x128xbf16>
        %47 = arith.index_cast %19 : i32 to index
        %c0_28 = arith.constant 0 : index
        %48 = vector.load %arg24[%47, %c0_28] : memref<128x128xbf16, #tpu.memory_space<vmem>>, vector<128x128xbf16>
        tpu.vector_store %arg24[%47, %c0_28], %46 {strides = array<i32>} : memref<128x128xbf16, #tpu.memory_space<vmem>>, vector<128x128xbf16>,
      } else {
      }
      %c2_i32_13 = arith.constant 2 : i32
      %26 = arith.cmpi eq, %arg0, %c2_i32_13 : i32
      %27 = arith.extui %26 : i1 to i32
      %c0_i32_14 = arith.constant 0 : i32
      %28 = arith.cmpi ne, %27, %c0_i32_14 : i32
      scf.if %28 {
        %c0_15 = arith.constant 0 : index
        %c0_16 = arith.constant 0 : index
        %29 = vector.load %arg22[%c0_15, %c0_16] : memref<128x128xf32, #tpu.memory_space<vmem>>, vector<128x128xf32>
        %30 = arith.truncf %29 : vector<128x128xf32> to vector<128x128xbf16>
        %c0_17 = arith.constant 0 : index
        %c0_18 = arith.constant 0 : index
        %31 = vector.load %arg13[%c0_17, %c0_18] : memref<128x128xbf16, #tpu.memory_space<vmem>>, vector<128x128xbf16>
        %cst = arith.constant dense<0.000000e+00> : vector<128x128xf32>
        %32 = tpu.matmul %30, %31, %cst {dimension_numbers = #tpu.dot_dimension_numbers<[1], [0], [0], [1], [0, 0, 1, 1], [], []>} : vector<128x128xbf16>, vector<128x128xbf16>, vector<128x128xf32> -> vector<128x128xf32>
        %c0_19 = arith.constant 0 : index
        %c0_20 = arith.constant 0 : index
        %33 = vector.load %arg14[%c0_19, %c0_20] : memref<1x128xf32, #tpu.memory_space<vmem>>, vector<1x128xf32>
        %34 = vector.broadcast %33 : vector<1x128xf32> to vector<128x128xf32>
        %35 = arith.addf %32, %34 : vector<128x128xf32>
        %cst_21 = arith.constant 0.000000e+00 : f32
        %36 = vector.broadcast %cst_21 : f32 to vector<128x128xf32>
        %37 = arith.maximumf %35, %36 : vector<128x128xf32>
        %38 = arith.truncf %37 : vector<128x128xf32> to vector<128x128xbf16>
        %c0_22 = arith.constant 0 : index
        %c0_23 = arith.constant 0 : index
        %39 = vector.load %arg15[%c0_22, %c0_23] : memref<128x128xbf16, #tpu.memory_space<vmem>>, vector<128x128xbf16>
        %cst_24 = arith.constant dense<0.000000e+00> : vector<128x128xf32>
        %40 = tpu.matmul %38, %39, %cst_24 {dimension_numbers = #tpu.dot_dimension_numbers<[1], [0], [0], [1], [0, 0, 1, 1], [], []>} : vector<128x128xbf16>, vector<128x128xbf16>, vector<128x128xf32> -> vector<128x128xf32>
        %c0_25 = arith.constant 0 : index
        %c0_26 = arith.constant 0 : index
        %41 = vector.load %arg16[%c0_25, %c0_26] : memref<1x128xf32, #tpu.memory_space<vmem>>, vector<1x128xf32>
        %42 = vector.broadcast %41 : vector<1x128xf32> to vector<128x128xf32>
        %43 = arith.addf %40, %42 : vector<128x128xf32>
        %cst_27 = arith.constant 0.000000e+00 : f32
        %44 = vector.broadcast %cst_27 : f32 to vector<128x128xf32>
        %45 = arith.maximumf %43, %44 : vector<128x128xf32>
        %46 = arith.truncf %45 : vector<128x128xf32> to vector<128x128xbf16>
        %47 = arith.index_cast %19 : i32 to index
        %c0_28 = arith.constant 0 : index
        %48 = vector.load %arg23[%47, %c0_28] : memref<128x128xbf16, #tpu.memory_space<vmem>>, vector<128x128xbf16>
        %49 = arith.index_cast %19 : i32 to index
        %c0_29 = arith.constant 0 : index
        %50 = vector.load %arg24[%49, %c0_29] : memref<128x128xbf16, #tpu.memory_space<vmem>>, vector<128x128xbf16>
        %c0_30 = arith.constant 0 : index
        %c0_31 = arith.constant 0 : index
        %c0_32 = arith.constant 0 : index
        %51 = vector.load %arg17[%c0_30, %c0_31, %c0_32] : memref<3x128x128xbf16, #tpu.memory_space<vmem>>, vector<1x128x128xbf16>
        %52 = vector.shape_cast %51 : vector<1x128x128xbf16> to vector<128x128xbf16>
        %cst_33 = arith.constant dense<0.000000e+00> : vector<128x128xf32>
        %53 = tpu.matmul %48, %52, %cst_33 {dimension_numbers = #tpu.dot_dimension_numbers<[1], [0], [0], [1], [0, 0, 1, 1], [], []>} : vector<128x128xbf16>, vector<128x128xbf16>, vector<128x128xf32> -> vector<128x128xf32>
        %c1 = arith.constant 1 : index
        %c0_34 = arith.constant 0 : index
        %c0_35 = arith.constant 0 : index
        %54 = vector.load %arg17[%c1, %c0_34, %c0_35] : memref<3x128x128xbf16, #tpu.memory_space<vmem>>, vector<1x128x128xbf16>
        %55 = vector.shape_cast %54 : vector<1x128x128xbf16> to vector<128x128xbf16>
        %cst_36 = arith.constant dense<0.000000e+00> : vector<128x128xf32>
        %56 = tpu.matmul %50, %55, %cst_36 {dimension_numbers = #tpu.dot_dimension_numbers<[1], [0], [0], [1], [0, 0, 1, 1], [], []>} : vector<128x128xbf16>, vector<128x128xbf16>, vector<128x128xf32> -> vector<128x128xf32>
        %57 = arith.addf %53, %56 : vector<128x128xf32>
        %c2 = arith.constant 2 : index
        %c0_37 = arith.constant 0 : index
        %c0_38 = arith.constant 0 : index
        %58 = vector.load %arg17[%c2, %c0_37, %c0_38] : memref<3x128x128xbf16, #tpu.memory_space<vmem>>, vector<1x128x128xbf16>
        %59 = vector.shape_cast %58 : vector<1x128x128xbf16> to vector<128x128xbf16>
        %cst_39 = arith.constant dense<0.000000e+00> : vector<128x128xf32>
        %60 = tpu.matmul %46, %59, %cst_39 {dimension_numbers = #tpu.dot_dimension_numbers<[1], [0], [0], [1], [0, 0, 1, 1], [], []>} : vector<128x128xbf16>, vector<128x128xbf16>, vector<128x128xf32> -> vector<128x128xf32>
        %61 = arith.addf %57, %60 : vector<128x128xf32>
        %c0_40 = arith.constant 0 : index
        %c0_41 = arith.constant 0 : index
        %62 = vector.load %arg18[%c0_40, %c0_41] : memref<1x128xf32, #tpu.memory_space<vmem>>, vector<1x128xf32>
        %63 = vector.broadcast %62 : vector<1x128xf32> to vector<128x128xf32>
        %64 = arith.addf %61, %63 : vector<128x128xf32>
        %cst_42 = arith.constant 0.000000e+00 : f32
        %65 = vector.broadcast %cst_42 : f32 to vector<128x128xf32>
        %66 = arith.maximumf %64, %65 : vector<128x128xf32>
        %67 = arith.truncf %66 : vector<128x128xf32> to vector<128x128xbf16>
        %c0_43 = arith.constant 0 : index
        %c0_44 = arith.constant 0 : index
        %68 = vector.load %arg19[%c0_43, %c0_44] : memref<128x128xbf16, #tpu.memory_space<vmem>>, vector<128x128xbf16>
        %cst_45 = arith.constant dense<0.000000e+00> : vector<128x128xf32>
        %69 = tpu.matmul %67, %68, %cst_45 {dimension_numbers = #tpu.dot_dimension_numbers<[1], [0], [0], [1], [0, 0, 1, 1], [], []>} : vector<128x128xbf16>, vector<128x128xbf16>, vector<128x128xf32> -> vector<128x128xf32>
        %c0_46 = arith.constant 0 : index
        %c0_47 = arith.constant 0 : index
        %70 = vector.load %arg20[%c0_46, %c0_47] : memref<1x128xf32, #tpu.memory_space<vmem>>, vector<1x128xf32>
        %71 = vector.broadcast %70 : vector<1x128xf32> to vector<128x128xf32>
        %72 = arith.addf %69, %71 : vector<128x128xf32>
        %73 = tpu.iota {dimensions = array<i32: 1>} : vector<128x128xi32>
        %c8_i32 = arith.constant 8 : i32
        %74 = vector.broadcast %c8_i32 : i32 to vector<128x128xi32>
        %75 = arith.cmpi slt, %73, %74 : vector<128x128xi32>
        %cst_48 = arith.constant -1.000000e+30 : f32
        %76 = vector.broadcast %cst_48 : f32 to vector<128x128xf32>
        %77 = arith.select %75, %72, %76 : vector<128x128xi1>, vector<128x128xf32>
        %cst_49 = arith.constant dense<0xFF800000> : vector<128xf32>
        %78 = vector.multi_reduction <maximumf>, %77, %cst_49 [1] : vector<128x128xf32> to vector<128xf32>
        %79 = vector.shape_cast %78 : vector<128xf32> to vector<128x1xf32>
        %80 = vector.broadcast %79 : vector<128x1xf32> to vector<128x128xf32>
        %81 = arith.subf %77, %80 : vector<128x128xf32>
        %82 = math.exp %81 : vector<128x128xf32>
        %cst_50 = arith.constant dense<0.000000e+00> : vector<128xf32>
        %83 = vector.multi_reduction <add>, %82, %cst_50 [1] : vector<128x128xf32> to vector<128xf32>
        %84 = vector.shape_cast %83 : vector<128xf32> to vector<128x1xf32>
        %85 = math.log %84 : vector<128x1xf32>
        %86 = arith.addf %85, %79 : vector<128x1xf32>
        %87 = vector.broadcast %86 : vector<128x1xf32> to vector<128x128xf32>
        %88 = arith.subf %77, %87 : vector<128x128xf32>
        %c0_51 = arith.constant 0 : index
        %c0_52 = arith.constant 0 : index
        %89 = vector.load %arg21[%c0_51, %c0_52] : memref<128x128xf32, #tpu.memory_space<vmem>>, vector<128x128xf32>
        tpu.vector_store %arg21[%c0_51, %c0_52], %88 {strides = array<i32>} : memref<128x128xf32, #tpu.memory_space<vmem>>, vector<128x128xf32>,
      } else {
      }
    } else {
    }
    return
  }
  func.func @transform_0(%arg0: i32, %arg1: i32, %arg2: i32) -> (i32, i32) {
    %c0_i32 = arith.constant 0 : i32
    return %arg1, %arg2 : i32, i32
  }
  func.func @transform_1(%arg0: i32, %arg1: i32, %arg2: i32) -> (i32, i32) {
    %c0_i32 = arith.constant 0 : i32
    %0 = arith.cmpi eq, %arg0, %c0_i32 : i32
    %c0_i32_0 = arith.constant 0 : i32
    %1 = arith.select %0, %arg2, %c0_i32_0 : i32
    %c0_i32_1 = arith.constant 0 : i32
    %c0_i32_2 = arith.constant 0 : i32
    return %1, %c0_i32_1 : i32, i32
  }
  func.func @transform_2(%arg0: i32, %arg1: i32, %arg2: i32) -> (i32, i32) {
    %c0_i32 = arith.constant 0 : i32
    %c0_i32_0 = arith.constant 0 : i32
    %c0_i32_1 = arith.constant 0 : i32
    return %c0_i32, %c0_i32_0 : i32, i32
  }
  func.func @transform_3(%arg0: i32, %arg1: i32, %arg2: i32) -> (i32, i32) {
    %c0_i32 = arith.constant 0 : i32
    %c0_i32_0 = arith.constant 0 : i32
    %c0_i32_1 = arith.constant 0 : i32
    return %c0_i32, %c0_i32_0 : i32, i32
  }
  func.func @transform_4(%arg0: i32, %arg1: i32, %arg2: i32) -> (i32, i32) {
    %c0_i32 = arith.constant 0 : i32
    %c0_i32_0 = arith.constant 0 : i32
    %c0_i32_1 = arith.constant 0 : i32
    return %c0_i32, %c0_i32_0 : i32, i32
  }
  func.func @transform_5(%arg0: i32, %arg1: i32, %arg2: i32) -> (i32, i32) {
    %c0_i32 = arith.constant 0 : i32
    %c0_i32_0 = arith.constant 0 : i32
    %c0_i32_1 = arith.constant 0 : i32
    return %c0_i32, %c0_i32_0 : i32, i32
  }
  func.func @transform_6(%arg0: i32, %arg1: i32, %arg2: i32) -> (i32, i32) {
    %c0_i32 = arith.constant 0 : i32
    %c0_i32_0 = arith.constant 0 : i32
    %c0_i32_1 = arith.constant 0 : i32
    return %c0_i32, %c0_i32_0 : i32, i32
  }
  func.func @transform_7(%arg0: i32, %arg1: i32, %arg2: i32) -> (i32, i32) {
    %c0_i32 = arith.constant 0 : i32
    %c0_i32_0 = arith.constant 0 : i32
    %c0_i32_1 = arith.constant 0 : i32
    return %c0_i32, %c0_i32_0 : i32, i32
  }
  func.func @transform_8(%arg0: i32, %arg1: i32, %arg2: i32) -> (i32, i32) {
    %c0_i32 = arith.constant 0 : i32
    %c0_i32_0 = arith.constant 0 : i32
    %c0_i32_1 = arith.constant 0 : i32
    return %c0_i32, %c0_i32_0 : i32, i32
  }
  func.func @transform_9(%arg0: i32, %arg1: i32, %arg2: i32) -> (i32, i32) {
    %c0_i32 = arith.constant 0 : i32
    %c0_i32_0 = arith.constant 0 : i32
    %c0_i32_1 = arith.constant 0 : i32
    return %c0_i32, %c0_i32_0 : i32, i32
  }
  func.func @transform_10(%arg0: i32, %arg1: i32, %arg2: i32) -> (i32, i32) {
    %c0_i32 = arith.constant 0 : i32
    %c0_i32_0 = arith.constant 0 : i32
    %c0_i32_1 = arith.constant 0 : i32
    return %c0_i32, %c0_i32_0 : i32, i32
  }
  func.func @transform_11(%arg0: i32, %arg1: i32, %arg2: i32) -> (i32, i32) {
    %c0_i32 = arith.constant 0 : i32
    %c0_i32_0 = arith.constant 0 : i32
    %c0_i32_1 = arith.constant 0 : i32
    return %c0_i32, %c0_i32_0 : i32, i32
  }
  func.func @transform_12(%arg0: i32, %arg1: i32, %arg2: i32) -> (i32, i32) {
    %c0_i32 = arith.constant 0 : i32
    %c0_i32_0 = arith.constant 0 : i32
    %c0_i32_1 = arith.constant 0 : i32
    return %c0_i32, %c0_i32_0 : i32, i32
  }
  func.func @transform_13(%arg0: i32, %arg1: i32, %arg2: i32) -> (i32, i32) {
    %c0_i32 = arith.constant 0 : i32
    %c0_i32_0 = arith.constant 0 : i32
    %c0_i32_1 = arith.constant 0 : i32
    return %c0_i32, %c0_i32_0 : i32, i32
  }
  func.func @transform_14(%arg0: i32, %arg1: i32, %arg2: i32) -> (i32, i32, i32) {
    %c0_i32 = arith.constant 0 : i32
    %c0_i32_0 = arith.constant 0 : i32
    %c0_i32_1 = arith.constant 0 : i32
    %c0_i32_2 = arith.constant 0 : i32
    return %c0_i32, %c0_i32_0, %c0_i32_1 : i32, i32, i32
  }
  func.func @transform_15(%arg0: i32, %arg1: i32, %arg2: i32) -> (i32, i32) {
    %c0_i32 = arith.constant 0 : i32
    %c0_i32_0 = arith.constant 0 : i32
    %c0_i32_1 = arith.constant 0 : i32
    return %c0_i32, %c0_i32_0 : i32, i32
  }
  func.func @transform_16(%arg0: i32, %arg1: i32, %arg2: i32) -> (i32, i32) {
    %c0_i32 = arith.constant 0 : i32
    %c0_i32_0 = arith.constant 0 : i32
    %c0_i32_1 = arith.constant 0 : i32
    return %c0_i32, %c0_i32_0 : i32, i32
  }
  func.func @transform_17(%arg0: i32, %arg1: i32, %arg2: i32) -> (i32, i32) {
    %c0_i32 = arith.constant 0 : i32
    %c0_i32_0 = arith.constant 0 : i32
    %c0_i32_1 = arith.constant 0 : i32
    return %c0_i32, %c0_i32_0 : i32, i32
  }
  func.func @transform_18(%arg0: i32, %arg1: i32, %arg2: i32) -> (i32, i32) {
    %c2_i32 = arith.constant 2 : i32
    %0 = arith.cmpi eq, %arg0, %c2_i32 : i32
    %c0_i32 = arith.constant 0 : i32
    %1 = arith.select %0, %arg1, %c0_i32 : i32
    %c0_i32_0 = arith.constant 0 : i32
    %c0_i32_1 = arith.constant 0 : i32
    return %1, %c0_i32_0 : i32, i32
  }
}

</mosaic_0001>

<llo_original>
// kernel: gin_forward.1
$region0: #{gin_forward.1}
  #allocation0 [shape = 'u32[]', space=smem, size = 0x4, offset = 0x4, fixed_abs, tag = 'smem constant byte address 0x4 - core index']
  #allocation1 [shape = 'u32[144,128]{1,0:T(1,128)}', space=vmem, size = 0x12000, scoped, tag = 'internal scratch']
  #allocation2 [shape = 'f32[128,128]{1,0:T(8,128)}', space=vmem, size = 0x10000, scoped, tag = 'scratch operand']
  #allocation3 [shape = 'bf16[128,128]{1,0:T(16,128)(2,1)}', space=vmem, size = 0x8000, scoped, tag = 'scratch operand']
  #allocation4 [shape = 'bf16[128,128]{1,0:T(16,128)(2,1)}', space=vmem, size = 0x8000, scoped, tag = 'scratch operand']
  %s0 = inlined_call_operand.vmem [shape: bf16[128,128], index: 0, kind: input, shape index: {}]
  %s1 = inlined_call_operand.vmem [shape: bf16[128,128], index: 1, kind: input, shape index: {}]
  %s2 = inlined_call_operand.vmem [shape: bf16[128,128], index: 2, kind: input, shape index: {}]
  %s3 = inlined_call_operand.vmem [shape: f32[1,128], index: 3, kind: input, shape index: {}]
  %s4 = inlined_call_operand.vmem [shape: bf16[128,128], index: 4, kind: input, shape index: {}]
  %s5 = inlined_call_operand.vmem [shape: f32[1,128], index: 5, kind: input, shape index: {}]
  %s6 = inlined_call_operand.vmem [shape: bf16[128,128], index: 6, kind: input, shape index: {}]
  %s7 = inlined_call_operand.vmem [shape: f32[1,128], index: 7, kind: input, shape index: {}]
  %s8 = inlined_call_operand.vmem [shape: bf16[128,128], index: 8, kind: input, shape index: {}]
  %s9 = inlined_call_operand.vmem [shape: f32[1,128], index: 9, kind: input, shape index: {}]
  %s10 = inlined_call_operand.vmem [shape: bf16[128,128], index: 10, kind: input, shape index: {}]
  %s11 = inlined_call_operand.vmem [shape: f32[1,128], index: 11, kind: input, shape index: {}]
  %s12 = inlined_call_operand.vmem [shape: bf16[128,128], index: 12, kind: input, shape index: {}]
  %s13 = inlined_call_operand.vmem [shape: f32[1,128], index: 13, kind: input, shape index: {}]
  %s14 = inlined_call_operand.vmem [shape: bf16[3,128,128], index: 14, kind: input, shape index: {}]
  %s15 = inlined_call_operand.vmem [shape: f32[1,128], index: 15, kind: input, shape index: {}]
  %s16 = inlined_call_operand.vmem [shape: bf16[128,128], index: 16, kind: input, shape index: {}]
  %s17 = inlined_call_operand.vmem [shape: f32[1,128], index: 17, kind: input, shape index: {}]
  %s18 = inlined_call_operand.vmem [shape: f32[128,128], index: 18, kind: output, shape index: {}]
  %s19 = sld [smem:[#allocation0]]
  $region137: #{gin_forward.1} parent=0
    _
  %s21 = ssub.s32 1, %s19
  %s22 = scalar_select 0, %s21, %s19
  loop: start=0, step=1, limit=5
  $region2: #{gin_forward.1} parent=0 // loop_pre_header
    _
  $region3: #{gin_forward.1} parent=0 // loop_header
    %s24 = sphi 0, %s28
    %p25 = scmp.ge.s32.totalorder %s24, 5
    %s31 = sphi 0, %s50
    %s32 = sphi 0, %s46
    %s33 = sphi 0, %s42
    %s34 = sphi 0, %s31
    %s35 = sphi 0, %s32
    %s36 = sphi 0, %s33
    %s37 = sphi 0, %s34
    %s38 = sphi 0, %s35
    %s39 = sphi 0, %s36
    %s55 = sphi 0, %s57
    %s58 = sphi 0, %s55
    %s59 = sphi 0, %s58
    %s75 = sphi 0, %s59
    %s85 = sphi 0, %s87
    %s88 = sphi 0, %s85
    %s89 = sphi 0, %s88
    %s105 = sphi 0, %s89
    %s109 = sphi 0, %s109
    %s111 = sphi 0, %s109
    %s112 = sphi 0, %s111
    %s126 = sphi 0, %s112
    %s130 = sphi 0, %s130
    %s132 = sphi 0, %s130
    %s133 = sphi 0, %s132
    %s147 = sphi 0, %s133
    %s151 = sphi 0, %s151
    %s153 = sphi 0, %s151
    %s154 = sphi 0, %s153
    %s168 = sphi 0, %s154
    %s172 = sphi 0, %s172
    %s174 = sphi 0, %s172
    %s175 = sphi 0, %s174
    %s189 = sphi 0, %s175
    %s193 = sphi 0, %s193
    %s195 = sphi 0, %s193
    %s196 = sphi 0, %s195
    %s210 = sphi 0, %s196
    %s214 = sphi 0, %s214
    %s216 = sphi 0, %s214
    %s217 = sphi 0, %s216
    %s231 = sphi 0, %s217
    %s235 = sphi 0, %s235
    %s237 = sphi 0, %s235
    %s238 = sphi 0, %s237
    %s252 = sphi 0, %s238
    %s256 = sphi 0, %s256
    %s258 = sphi 0, %s256
    %s259 = sphi 0, %s258
    %s273 = sphi 0, %s259
    %s277 = sphi 0, %s277
    %s279 = sphi 0, %s277
    %s280 = sphi 0, %s279
    %s294 = sphi 0, %s280
    %s298 = sphi 0, %s298
    %s300 = sphi 0, %s298
    %s301 = sphi 0, %s300
    %s315 = sphi 0, %s301
    %s319 = sphi 0, %s319
    %s321 = sphi 0, %s319
    %s322 = sphi 0, %s321
    %s336 = sphi 0, %s322
    %s340 = sphi 0, %s340
    %s342 = sphi 0, %s340
    %s343 = sphi 0, %s342
    %s357 = sphi 0, %s343
    %s361 = sphi 0, %s361
    %s363 = sphi 0, %s361
    %s364 = sphi 0, %s363
    %s378 = sphi 0, %s364
    %s382 = sphi 0, %s382
    %s384 = sphi 0, %s382
    %s385 = sphi 0, %s384
    %s399 = sphi 0, %s385
    %s403 = sphi 0, %s403
    %s405 = sphi 0, %s403
    %s406 = sphi 0, %s405
    %s420 = sphi 0, %s406
    %s424 = sphi 0, %s424
    %s426 = sphi 0, %s424
    %s427 = sphi 0, %s426
    %s441 = sphi 0, %s427
    %s451 = sphi 0, %s453
    %s454 = sphi 0, %s451
    %s455 = sphi 0, %s454
    %s471 = sphi 0, %s455
  $region4: #{gin_forward.1} parent=0 // loop_header_branch
    %27 = sbr.rel (%p25) target = $region8
  $region5: #{gin_forward.1} parent=0 // loop_body
    %s29 = ssub.s32 %s24, 1
    %s30 = ssub.s32 %s24, 2
    %s40 = sadd.s32 1, %s33
    %p41 = scmp.ge.s32.totalorder %s40, 1
    %s42 = scalar_select %p41, 0, %s40
    %s43 = sadd.s32 1, %s32
    %s44 = scalar_select %p41, %s43, %s32
    %p45 = scmp.ge.s32.totalorder %s44, 1
    %s46 = scalar_select %p45, 0, %s44
    %s47 = sadd.s32 1, %s31
    %s48 = scalar_select %p45, %s47, %s31
    %p49 = scmp.ge.s32.totalorder %s48, 3
    %s50 = scalar_select %p49, 0, %s48
    %s51 = ssub.s32 %s32, %s46
    %s52 = ssub.s32 %s33, %s42
    %s53 = sor.u32 %s51, %s52
    %p54 = scmp.eq.s32.totalorder %s53, 0
    %s56 = sadd.s32 %s55, 1
    %s57 = scalar_select %p54, %s55, %s56
    %p60 = pneg %p54
    %p61 = scmp.eq.s32.totalorder %s24, 2
    %p62 = por %p60, %p61
    %p63 = scmp.ne.s32.totalorder %s55, %s58
    %p64 = scmp.eq.s32.totalorder %s24, 0
    %p65 = por %p63, %p64
    %p66 = scmp.ne.s32.totalorder %s55, %s58
    %p67 = scmp.eq.s32.totalorder %s29, 2
    %p68 = por %p66, %p67
    %p69 = scmp.ne.s32.totalorder %s58, %s59
    %p70 = scmp.eq.s32.totalorder %s29, 0
    %p71 = por %p69, %p70
    %p72 = scmp.ne.s32.totalorder %s58, %s59
    %p73 = scmp.eq.s32.totalorder %s30, 2
    %p74 = por %p72, %p73
    %p76 = scmp.ne.s32.totalorder %s59, %s75
    %p77 = scmp.eq.s32.totalorder %s30, 0
    %p78 = por %p76, %p77
    %p79 = scmp.eq.s32.totalorder %s31, 0
    %s80 = scalar_select %p79, %s33, 0
    %p81 = scmp.eq.s32.totalorder %s50, 0
    %s82 = scalar_select %p81, %s42, 0
    %s83 = ssub.s32 %s80, %s82
    %p84 = scmp.eq.s32.totalorder %s83, 0
    %s86 = sadd.s32 %s85, 1
    %s87 = scalar_select %p84, %s85, %s86
    %p90 = pneg %p84
    %p91 = scmp.eq.s32.totalorder %s24, 2
    %p92 = por %p90, %p91
    %p93 = scmp.ne.s32.totalorder %s85, %s88
    %p94 = scmp.eq.s32.totalorder %s24, 0
    %p95 = por %p93, %p94
    %p96 = scmp.ne.s32.totalorder %s85, %s88
    %p97 = scmp.eq.s32.totalorder %s29, 2
    %p98 = por %p96, %p97
    %p99 = scmp.ne.s32.totalorder %s88, %s89
    %p100 = scmp.eq.s32.totalorder %s29, 0
    %p101 = por %p99, %p100
    %p102 = scmp.ne.s32.totalorder %s88, %s89
    %p103 = scmp.eq.s32.totalorder %s30, 2
    %p104 = por %p102, %p103
    %p106 = scmp.ne.s32.totalorder %s89, %s105
    %p107 = scmp.eq.s32.totalorder %s30, 0
    %p108 = por %p106, %p107
    %s110 = sadd.s32 %s109, 1
    %p113 = scmp.eq.s32.totalorder %s24, 2
    %p114 = scmp.ne.s32.totalorder %s109, %s111
    %p115 = scmp.eq.s32.totalorder %s24, 0
    %p116 = por %p114, %p115
    %p117 = scmp.ne.s32.totalorder %s109, %s111
    %p118 = scmp.eq.s32.totalorder %s29, 2
    %p119 = por %p117, %p118
    %p120 = scmp.ne.s32.totalorder %s111, %s112
    %p121 = scmp.eq.s32.totalorder %s29, 0
    %p122 = por %p120, %p121
    %p123 = scmp.ne.s32.totalorder %s111, %s112
    %p124 = scmp.eq.s32.totalorder %s30, 2
    %p125 = por %p123, %p124
    %p127 = scmp.ne.s32.totalorder %s112, %s126
    %p128 = scmp.eq.s32.totalorder %s30, 0
    %p129 = por %p127, %p128
    %s131 = sadd.s32 %s130, 1
    %p134 = scmp.eq.s32.totalorder %s24, 2
    %p135 = scmp.ne.s32.totalorder %s130, %s132
    %p136 = scmp.eq.s32.totalorder %s24, 0
    %p137 = por %p135, %p136
    %p138 = scmp.ne.s32.totalorder %s130, %s132
    %p139 = scmp.eq.s32.totalorder %s29, 2
    %p140 = por %p138, %p139
    %p141 = scmp.ne.s32.totalorder %s132, %s133
    %p142 = scmp.eq.s32.totalorder %s29, 0
    %p143 = por %p141, %p142
    %p144 = scmp.ne.s32.totalorder %s132, %s133
    %p145 = scmp.eq.s32.totalorder %s30, 2
    %p146 = por %p144, %p145
    %p148 = scmp.ne.s32.totalorder %s133, %s147
    %p149 = scmp.eq.s32.totalorder %s30, 0
    %p150 = por %p148, %p149
    %s152 = sadd.s32 %s151, 1
    %p155 = scmp.eq.s32.totalorder %s24, 2
    %p156 = scmp.ne.s32.totalorder %s151, %s153
    %p157 = scmp.eq.s32.totalorder %s24, 0
    %p158 = por %p156, %p157
    %p159 = scmp.ne.s32.totalorder %s151, %s153
    %p160 = scmp.eq.s32.totalorder %s29, 2
    %p161 = por %p159, %p160
    %p162 = scmp.ne.s32.totalorder %s153, %s154
    %p163 = scmp.eq.s32.totalorder %s29, 0
    %p164 = por %p162, %p163
    %p165 = scmp.ne.s32.totalorder %s153, %s154
    %p166 = scmp.eq.s32.totalorder %s30, 2
    %p167 = por %p165, %p166
    %p169 = scmp.ne.s32.totalorder %s154, %s168
    %p170 = scmp.eq.s32.totalorder %s30, 0
    %p171 = por %p169, %p170
    %s173 = sadd.s32 %s172, 1
    %p176 = scmp.eq.s32.totalorder %s24, 2
    %p177 = scmp.ne.s32.totalorder %s172, %s174
    %p178 = scmp.eq.s32.totalorder %s24, 0
    %p179 = por %p177, %p178
    %p180 = scmp.ne.s32.totalorder %s172, %s174
    %p181 = scmp.eq.s32.totalorder %s29, 2
    %p182 = por %p180, %p181
    %p183 = scmp.ne.s32.totalorder %s174, %s175
    %p184 = scmp.eq.s32.totalorder %s29, 0
    %p185 = por %p183, %p184
    %p186 = scmp.ne.s32.totalorder %s174, %s175
    %p187 = scmp.eq.s32.totalorder %s30, 2
    %p188 = por %p186, %p187
    %p190 = scmp.ne.s32.totalorder %s175, %s189
    %p191 = scmp.eq.s32.totalorder %s30, 0
    %p192 = por %p190, %p191
    %s194 = sadd.s32 %s193, 1
    %p197 = scmp.eq.s32.totalorder %s24, 2
    %p198 = scmp.ne.s32.totalorder %s193, %s195
    %p199 = scmp.eq.s32.totalorder %s24, 0
    %p200 = por %p198, %p199
    %p201 = scmp.ne.s32.totalorder %s193, %s195
    %p202 = scmp.eq.s32.totalorder %s29, 2
    %p203 = por %p201, %p202
    %p204 = scmp.ne.s32.totalorder %s195, %s196
    %p205 = scmp.eq.s32.totalorder %s29, 0
    %p206 = por %p204, %p205
    %p207 = scmp.ne.s32.totalorder %s195, %s196
    %p208 = scmp.eq.s32.totalorder %s30, 2
    %p209 = por %p207, %p208
    %p211 = scmp.ne.s32.totalorder %s196, %s210
    %p212 = scmp.eq.s32.totalorder %s30, 0
    %p213 = por %p211, %p212
    %s215 = sadd.s32 %s214, 1
    %p218 = scmp.eq.s32.totalorder %s24, 2
    %p219 = scmp.ne.s32.totalorder %s214, %s216
    %p220 = scmp.eq.s32.totalorder %s24, 0
    %p221 = por %p219, %p220
    %p222 = scmp.ne.s32.totalorder %s214, %s216
    %p223 = scmp.eq.s32.totalorder %s29, 2
    %p224 = por %p222, %p223
    %p225 = scmp.ne.s32.totalorder %s216, %s217
    %p226 = scmp.eq.s32.totalorder %s29, 0
    %p227 = por %p225, %p226
    %p228 = scmp.ne.s32.totalorder %s216, %s217
    %p229 = scmp.eq.s32.totalorder %s30, 2
    %p230 = por %p228, %p229
    %p232 = scmp.ne.s32.totalorder %s217, %s231
    %p233 = scmp.eq.s32.totalorder %s30, 0
    %p234 = por %p232, %p233
    %s236 = sadd.s32 %s235, 1
    %p239 = scmp.eq.s32.totalorder %s24, 2
    %p240 = scmp.ne.s32.totalorder %s235, %s237
    %p241 = scmp.eq.s32.totalorder %s24, 0
    %p242 = por %p240, %p241
    %p243 = scmp.ne.s32.totalorder %s235, %s237
    %p244 = scmp.eq.s32.totalorder %s29, 2
    %p245 = por %p243, %p244
    %p246 = scmp.ne.s32.totalorder %s237, %s238
    %p247 = scmp.eq.s32.totalorder %s29, 0
    %p248 = por %p246, %p247
    %p249 = scmp.ne.s32.totalorder %s237, %s238
    %p250 = scmp.eq.s32.totalorder %s30, 2
    %p251 = por %p249, %p250
    %p253 = scmp.ne.s32.totalorder %s238, %s252
    %p254 = scmp.eq.s32.totalorder %s30, 0
    %p255 = por %p253, %p254
    %s257 = sadd.s32 %s256, 1
    %p260 = scmp.eq.s32.totalorder %s24, 2
    %p261 = scmp.ne.s32.totalorder %s256, %s258
    %p262 = scmp.eq.s32.totalorder %s24, 0
    %p263 = por %p261, %p262
    %p264 = scmp.ne.s32.totalorder %s256, %s258
    %p265 = scmp.eq.s32.totalorder %s29, 2
    %p266 = por %p264, %p265
    %p267 = scmp.ne.s32.totalorder %s258, %s259
    %p268 = scmp.eq.s32.totalorder %s29, 0
    %p269 = por %p267, %p268
    %p270 = scmp.ne.s32.totalorder %s258, %s259
    %p271 = scmp.eq.s32.totalorder %s30, 2
    %p272 = por %p270, %p271
    %p274 = scmp.ne.s32.totalorder %s259, %s273
    %p275 = scmp.eq.s32.totalorder %s30, 0
    %p276 = por %p274, %p275
    %s278 = sadd.s32 %s277, 1
    %p281 = scmp.eq.s32.totalorder %s24, 2
    %p282 = scmp.ne.s32.totalorder %s277, %s279
    %p283 = scmp.eq.s32.totalorder %s24, 0
    %p284 = por %p282, %p283
    %p285 = scmp.ne.s32.totalorder %s277, %s279
    %p286 = scmp.eq.s32.totalorder %s29, 2
    %p287 = por %p285, %p286
    %p288 = scmp.ne.s32.totalorder %s279, %s280
    %p289 = scmp.eq.s32.totalorder %s29, 0
    %p290 = por %p288, %p289
    %p291 = scmp.ne.s32.totalorder %s279, %s280
    %p292 = scmp.eq.s32.totalorder %s30, 2
    %p293 = por %p291, %p292
    %p295 = scmp.ne.s32.totalorder %s280, %s294
    %p296 = scmp.eq.s32.totalorder %s30, 0
    %p297 = por %p295, %p296
    %s299 = sadd.s32 %s298, 1
    %p302 = scmp.eq.s32.totalorder %s24, 2
    %p303 = scmp.ne.s32.totalorder %s298, %s300
    %p304 = scmp.eq.s32.totalorder %s24, 0
    %p305 = por %p303, %p304
    %p306 = scmp.ne.s32.totalorder %s298, %s300
    %p307 = scmp.eq.s32.totalorder %s29, 2
    %p308 = por %p306, %p307
    %p309 = scmp.ne.s32.totalorder %s300, %s301
    %p310 = scmp.eq.s32.totalorder %s29, 0
    %p311 = por %p309, %p310
    %p312 = scmp.ne.s32.totalorder %s300, %s301
    %p313 = scmp.eq.s32.totalorder %s30, 2
    %p314 = por %p312, %p313
    %p316 = scmp.ne.s32.totalorder %s301, %s315
    %p317 = scmp.eq.s32.totalorder %s30, 0
    %p318 = por %p316, %p317
    %s320 = sadd.s32 %s319, 1
    %p323 = scmp.eq.s32.totalorder %s24, 2
    %p324 = scmp.ne.s32.totalorder %s319, %s321
    %p325 = scmp.eq.s32.totalorder %s24, 0
    %p326 = por %p324, %p325
    %p327 = scmp.ne.s32.totalorder %s319, %s321
    %p328 = scmp.eq.s32.totalorder %s29, 2
    %p329 = por %p327, %p328
    %p330 = scmp.ne.s32.totalorder %s321, %s322
    %p331 = scmp.eq.s32.totalorder %s29, 0
    %p332 = por %p330, %p331
    %p333 = scmp.ne.s32.totalorder %s321, %s322
    %p334 = scmp.eq.s32.totalorder %s30, 2
    %p335 = por %p333, %p334
    %p337 = scmp.ne.s32.totalorder %s322, %s336
    %p338 = scmp.eq.s32.totalorder %s30, 0
    %p339 = por %p337, %p338
    %s341 = sadd.s32 %s340, 1
    %p344 = scmp.eq.s32.totalorder %s24, 2
    %p345 = scmp.ne.s32.totalorder %s340, %s342
    %p346 = scmp.eq.s32.totalorder %s24, 0
    %p347 = por %p345, %p346
    %p348 = scmp.ne.s32.totalorder %s340, %s342
    %p349 = scmp.eq.s32.totalorder %s29, 2
    %p350 = por %p348, %p349
    %p351 = scmp.ne.s32.totalorder %s342, %s343
    %p352 = scmp.eq.s32.totalorder %s29, 0
    %p353 = por %p351, %p352
    %p354 = scmp.ne.s32.totalorder %s342, %s343
    %p355 = scmp.eq.s32.totalorder %s30, 2
    %p356 = por %p354, %p355
    %p358 = scmp.ne.s32.totalorder %s343, %s357
    %p359 = scmp.eq.s32.totalorder %s30, 0
    %p360 = por %p358, %p359
    %s362 = sadd.s32 %s361, 1
    %p365 = scmp.eq.s32.totalorder %s24, 2
    %p366 = scmp.ne.s32.totalorder %s361, %s363
    %p367 = scmp.eq.s32.totalorder %s24, 0
    %p368 = por %p366, %p367
    %p369 = scmp.ne.s32.totalorder %s361, %s363
    %p370 = scmp.eq.s32.totalorder %s29, 2
    %p371 = por %p369, %p370
    %p372 = scmp.ne.s32.totalorder %s363, %s364
    %p373 = scmp.eq.s32.totalorder %s29, 0
    %p374 = por %p372, %p373
    %p375 = scmp.ne.s32.totalorder %s363, %s364
    %p376 = scmp.eq.s32.totalorder %s30, 2
    %p377 = por %p375, %p376
    %p379 = scmp.ne.s32.totalorder %s364, %s378
    %p380 = scmp.eq.s32.totalorder %s30, 0
    %p381 = por %p379, %p380
    %s383 = sadd.s32 %s382, 1
    %p386 = scmp.eq.s32.totalorder %s24, 2
    %p387 = scmp.ne.s32.totalorder %s382, %s384
    %p388 = scmp.eq.s32.totalorder %s24, 0
    %p389 = por %p387, %p388
    %p390 = scmp.ne.s32.totalorder %s382, %s384
    %p391 = scmp.eq.s32.totalorder %s29, 2
    %p392 = por %p390, %p391
    %p393 = scmp.ne.s32.totalorder %s384, %s385
    %p394 = scmp.eq.s32.totalorder %s29, 0
    %p395 = por %p393, %p394
    %p396 = scmp.ne.s32.totalorder %s384, %s385
    %p397 = scmp.eq.s32.totalorder %s30, 2
    %p398 = por %p396, %p397
    %p400 = scmp.ne.s32.totalorder %s385, %s399
    %p401 = scmp.eq.s32.totalorder %s30, 0
    %p402 = por %p400, %p401
    %s404 = sadd.s32 %s403, 1
    %p407 = scmp.eq.s32.totalorder %s24, 2
    %p408 = scmp.ne.s32.totalorder %s403, %s405
    %p409 = scmp.eq.s32.totalorder %s24, 0
    %p410 = por %p408, %p409
    %p411 = scmp.ne.s32.totalorder %s403, %s405
    %p412 = scmp.eq.s32.totalorder %s29, 2
    %p413 = por %p411, %p412
    %p414 = scmp.ne.s32.totalorder %s405, %s406
    %p415 = scmp.eq.s32.totalorder %s29, 0
    %p416 = por %p414, %p415
    %p417 = scmp.ne.s32.totalorder %s405, %s406
    %p418 = scmp.eq.s32.totalorder %s30, 2
    %p419 = por %p417, %p418
    %p421 = scmp.ne.s32.totalorder %s406, %s420
    %p422 = scmp.eq.s32.totalorder %s30, 0
    %p423 = por %p421, %p422
    %s425 = sadd.s32 %s424, 1
    %p428 = scmp.eq.s32.totalorder %s24, 2
    %p429 = scmp.ne.s32.totalorder %s424, %s426
    %p430 = scmp.eq.s32.totalorder %s24, 0
    %p431 = por %p429, %p430
    %p432 = scmp.ne.s32.totalorder %s424, %s426
    %p433 = scmp.eq.s32.totalorder %s29, 2
    %p434 = por %p432, %p433
    %p435 = scmp.ne.s32.totalorder %s426, %s427
    %p436 = scmp.eq.s32.totalorder %s29, 0
    %p437 = por %p435, %p436
    %p438 = scmp.ne.s32.totalorder %s426, %s427
    %p439 = scmp.eq.s32.totalorder %s30, 2
    %p440 = por %p438, %p439
    %p442 = scmp.ne.s32.totalorder %s427, %s441
    %p443 = scmp.eq.s32.totalorder %s30, 0
    %p444 = por %p442, %p443
    %p445 = scmp.eq.s32.totalorder %s31, 2
    %s446 = scalar_select %p445, %s32, 0
    %p447 = scmp.eq.s32.totalorder %s50, 2
    %s448 = scalar_select %p447, %s46, 0
    %s449 = ssub.s32 %s446, %s448
    %p450 = scmp.eq.s32.totalorder %s449, 0
    %s452 = sadd.s32 %s451, 1
    %s453 = scalar_select %p450, %s451, %s452
    %p456 = pneg %p450
    %p457 = scmp.eq.s32.totalorder %s24, 2
    %p458 = por %p456, %p457
    %p459 = scmp.ne.s32.totalorder %s451, %s454
    %p460 = scmp.eq.s32.totalorder %s24, 0
    %p461 = por %p459, %p460
    %p462 = scmp.ne.s32.totalorder %s451, %s454
    %p463 = scmp.eq.s32.totalorder %s29, 2
    %p464 = por %p462, %p463
    %p465 = scmp.ne.s32.totalorder %s454, %s455
    %p466 = scmp.eq.s32.totalorder %s29, 0
    %p467 = por %p465, %p466
    %p468 = scmp.ne.s32.totalorder %s454, %s455
    %p469 = scmp.eq.s32.totalorder %s30, 2
    %p470 = por %p468, %p469
    %p472 = scmp.ne.s32.totalorder %s455, %s471
    %p473 = scmp.eq.s32.totalorder %s30, 0
    %p474 = por %p472, %p473
    %p475 = scmp.le.s32.totalorder 1, %s24
    %p476 = scmp.lt.s32.totalorder %s24, 4
    %p477 = pnand %p475, %p476
    %p478 = pneg %p477
    // Predicated region
    $region9: #{gin_forward.1} parent=5 // pred_check
      _
    $region10: #{gin_forward.1} parent=5 // pred_check_branch
      %480 = sbr.rel (%p477) target = $region12
    $region11: #{gin_forward.1} parent=5 // pred_region
      %s481 = ssub.s32 %s24, 1
      // Predicated region
      $region13: #{gin_forward.1} parent=11 // pred_check
        %p482 = pneg %p71
      $region14: #{gin_forward.1} parent=11 // pred_check_branch
        %484 = sbr.rel (%p482) target = $region16
      $region15: #{gin_forward.1} parent=11 // pred_region
        %s485 = smul.u32 16, %s35
        %p486 = scmp.lt.s32.totalorder %s485, 15
        %s487 = scalar_select %p486, %s485, 15
        %p488 = scmp.lt.s32.totalorder %s36, 0
        %s489 = scalar_select %p488, %s36, 0
        %s490 = sadd.s32 %s489, %s487
        %s491 = smul.addr %s490, 4
        %s492 = scalar_lea.vmem %s0, %s491
        %s493 = smul.u32 16, %s35
      $region16: #{gin_forward.1} parent=11 // pred_fallthru
        _
      // Predicated region
      $region17: #{gin_forward.1} parent=11 // pred_check
        %p494 = pneg %p122
      $region18: #{gin_forward.1} parent=11 // pred_check_branch
        %496 = sbr.rel (%p494) target = $region20
      $region19: #{gin_forward.1} parent=11 // pred_region
        _
      $region20: #{gin_forward.1} parent=11 // pred_fallthru
        _
      // Predicated region
      $region21: #{gin_forward.1} parent=11 // pred_check
        %p497 = pneg %p143
      $region22: #{gin_forward.1} parent=11 // pred_check_branch
        %499 = sbr.rel (%p497) target = $region24
      $region23: #{gin_forward.1} parent=11 // pred_region
        _
      $region24: #{gin_forward.1} parent=11 // pred_fallthru
        _
      // Predicated region
      $region25: #{gin_forward.1} parent=11 // pred_check
        %p500 = pneg %p164
      $region26: #{gin_forward.1} parent=11 // pred_check_branch
        %502 = sbr.rel (%p500) target = $region28
      $region27: #{gin_forward.1} parent=11 // pred_region
        _
      $region28: #{gin_forward.1} parent=11 // pred_fallthru
        _
      // Predicated region
      $region29: #{gin_forward.1} parent=11 // pred_check
        %p503 = pneg %p185
      $region30: #{gin_forward.1} parent=11 // pred_check_branch
        %505 = sbr.rel (%p503) target = $region32
      $region31: #{gin_forward.1} parent=11 // pred_region
        _
      $region32: #{gin_forward.1} parent=11 // pred_fallthru
        _
      // Predicated region
      $region33: #{gin_forward.1} parent=11 // pred_check
        %p506 = pneg %p206
      $region34: #{gin_forward.1} parent=11 // pred_check_branch
        %508 = sbr.rel (%p506) target = $region36
      $region35: #{gin_forward.1} parent=11 // pred_region
        _
      $region36: #{gin_forward.1} parent=11 // pred_fallthru
        _
      // Predicated region
      $region37: #{gin_forward.1} parent=11 // pred_check
        %p509 = pneg %p227
      $region38: #{gin_forward.1} parent=11 // pred_check_branch
        %511 = sbr.rel (%p509) target = $region40
      $region39: #{gin_forward.1} parent=11 // pred_region
        _
      $region40: #{gin_forward.1} parent=11 // pred_fallthru
        _
      // Predicated region
      $region41: #{gin_forward.1} parent=11 // pred_check
        %p512 = pneg %p248
      $region42: #{gin_forward.1} parent=11 // pred_check_branch
        %514 = sbr.rel (%p512) target = $region44
      $region43: #{gin_forward.1} parent=11 // pred_region
        _
      $region44: #{gin_forward.1} parent=11 // pred_fallthru
        _
      // Predicated region
      $region45: #{gin_forward.1} parent=11 // pred_check
        %p515 = pneg %p269
      $region46: #{gin_forward.1} parent=11 // pred_check_branch
        %517 = sbr.rel (%p515) target = $region48
      $region47: #{gin_forward.1} parent=11 // pred_region
        _
      $region48: #{gin_forward.1} parent=11 // pred_fallthru
        _
      // Predicated region
      $region49: #{gin_forward.1} parent=11 // pred_check
        %p518 = pneg %p290
      $region50: #{gin_forward.1} parent=11 // pred_check_branch
        %520 = sbr.rel (%p518) target = $region52
      $region51: #{gin_forward.1} parent=11 // pred_region
        _
      $region52: #{gin_forward.1} parent=11 // pred_fallthru
        _
      // Predicated region
      $region53: #{gin_forward.1} parent=11 // pred_check
        %p521 = pneg %p311
      $region54: #{gin_forward.1} parent=11 // pred_check_branch
        %523 = sbr.rel (%p521) target = $region56
      $region55: #{gin_forward.1} parent=11 // pred_region
        _
      $region56: #{gin_forward.1} parent=11 // pred_fallthru
        _
      // Predicated region
      $region57: #{gin_forward.1} parent=11 // pred_check
        %p524 = pneg %p332
      $region58: #{gin_forward.1} parent=11 // pred_check_branch
        %526 = sbr.rel (%p524) target = $region60
      $region59: #{gin_forward.1} parent=11 // pred_region
        _
      $region60: #{gin_forward.1} parent=11 // pred_fallthru
        _
      // Predicated region
      $region61: #{gin_forward.1} parent=11 // pred_check
        %p527 = pneg %p353
      $region62: #{gin_forward.1} parent=11 // pred_check_branch
        %529 = sbr.rel (%p527) target = $region64
      $region63: #{gin_forward.1} parent=11 // pred_region
        _
      $region64: #{gin_forward.1} parent=11 // pred_fallthru
        _
      // Predicated region
      $region65: #{gin_forward.1} parent=11 // pred_check
        %p530 = pneg %p374
      $region66: #{gin_forward.1} parent=11 // pred_check_branch
        %532 = sbr.rel (%p530) target = $region68
      $region67: #{gin_forward.1} parent=11 // pred_region
        _
      $region68: #{gin_forward.1} parent=11 // pred_fallthru
        _
      // Predicated region
      $region69: #{gin_forward.1} parent=11 // pred_check
        %p533 = pneg %p395
      $region70: #{gin_forward.1} parent=11 // pred_check_branch
        %535 = sbr.rel (%p533) target = $region72
      $region71: #{gin_forward.1} parent=11 // pred_region
        _
      $region72: #{gin_forward.1} parent=11 // pred_fallthru
        _
      // Predicated region
      $region73: #{gin_forward.1} parent=11 // pred_check
        %p536 = pneg %p416
      $region74: #{gin_forward.1} parent=11 // pred_check_branch
        %538 = sbr.rel (%p536) target = $region76
      $region75: #{gin_forward.1} parent=11 // pred_region
        _
      $region76: #{gin_forward.1} parent=11 // pred_fallthru
        _
      // Predicated region
      $region77: #{gin_forward.1} parent=11 // pred_check
        %p539 = pneg %p437
      $region78: #{gin_forward.1} parent=11 // pred_check_branch
        %541 = sbr.rel (%p539) target = $region80
      $region79: #{gin_forward.1} parent=11 // pred_region
        _
      $region80: #{gin_forward.1} parent=11 // pred_fallthru
        _
    $region12: #{gin_forward.1} parent=5 // pred_fallthru
      _
    %p542 = scmp.lt.s32.totalorder %s24, 3
    // Predicated region
    $region81: #{gin_forward.1} parent=5 // pred_check
      %p543 = pneg %p542
    $region82: #{gin_forward.1} parent=5 // pred_check_branch
      %545 = sbr.rel (%p543) target = $region84
    $region83: #{gin_forward.1} parent=5 // pred_region
      // Predicated region
      $region85: #{gin_forward.1} parent=83 // pred_check
        %p546 = pneg %p95
      $region86: #{gin_forward.1} parent=83 // pred_check_branch
        %548 = sbr.rel (%p546) target = $region88
      $region87: #{gin_forward.1} parent=83 // pred_region
        %p549 = scmp.eq.s32.totalorder %s31, 0
        %s550 = scalar_select %p549, %s33, 0
        %s551 = smul.u32 16, %s550
        %p552 = scmp.lt.s32.totalorder %s551, 15
        %s553 = scalar_select %p552, %s551, 15
        %s554 = smul.addr %s553, 4
        %s555 = scalar_lea.vmem %s1, %s554
        %p556 = scmp.eq.s32.totalorder %s31, 0
        %s557 = scalar_select %p556, %s33, 0
        %s558 = smul.u32 16, %s557
      $region88: #{gin_forward.1} parent=83 // pred_fallthru
        _
    $region84: #{gin_forward.1} parent=5 // pred_fallthru
      _
    %p559 = scmp.le.s32.totalorder 1, %s24
    %p560 = scmp.lt.s32.totalorder %s24, 4
    %p561 = pnand %p559, %p560
    %p562 = pneg %p561
    // Predicated region
    $region89: #{gin_forward.1} parent=5 // pred_check
      _
    $region90: #{gin_forward.1} parent=5 // pred_check_branch
      %564 = sbr.rel (%p561) target = $region92
    $region91: #{gin_forward.1} parent=5 // pred_region
      %s565 = ssub.s32 %s24, 1
      %s566 = smul.u32 16, %s35
      %p567 = scmp.lt.s32.totalorder %s566, 15
      %s568 = scalar_select %p567, %s566, 15
      %p569 = scmp.lt.s32.totalorder %s36, 0
      %s570 = scalar_select %p569, %s36, 0
      %s571 = sadd.s32 %s570, %s568
      %s572 = smul.addr %s571, 4
      %s573 = scalar_lea.vmem %s0, %s572
      %p574 = pneg %p71
      %p575 = pneg %p68
      %p576 = scmp.eq.s32.totalorder %s34, 0
      %s577 = scalar_select %p576, %s36, 0
      %s578 = smul.u32 16, %s577
      %p579 = scmp.lt.s32.totalorder %s578, 15
      %s580 = scalar_select %p579, %s578, 15
      %s581 = smul.addr %s580, 4
      %s582 = scalar_lea.vmem %s1, %s581
      %p583 = pneg %p101
      %p584 = pneg %p98
      %p585 = pneg %p122
      %p586 = pneg %p119
      %p587 = pneg %p143
      %p588 = pneg %p140
      %p589 = pneg %p164
      %p590 = pneg %p161
      %p591 = pneg %p185
      %p592 = pneg %p182
      %p593 = pneg %p206
      %p594 = pneg %p203
      %p595 = pneg %p227
      %p596 = pneg %p224
      %p597 = pneg %p248
      %p598 = pneg %p245
      %p599 = pneg %p269
      %p600 = pneg %p266
      %p601 = pneg %p290
      %p602 = pneg %p287
      %p603 = pneg %p311
      %p604 = pneg %p308
      %p605 = pneg %p332
      %p606 = pneg %p329
      %p607 = pneg %p353
      %p608 = pneg %p350
      %p609 = pneg %p374
      %p610 = pneg %p371
      %p611 = pneg %p395
      %p612 = pneg %p392
      %p613 = pneg %p416
      %p614 = pneg %p413
      %p615 = pneg %p437
      %p616 = pneg %p434
      %p617 = pneg %p467
      %p618 = pneg %p464
      %p619 = scmp.eq.s32.totalorder %s34, 2
      %s620 = scalar_select %p619, %s35, 0
      %s621 = smul.u32 16, %s620
      %p622 = scmp.lt.s32.totalorder %s621, 15
      %s623 = scalar_select %p622, %s621, 15
      %s624 = smul.addr %s623, 8
      %s625 = scalar_lea.vmem %s18, %s624
      %s626 = smul.u32 16, %s35
      %p627 = scmp.lt.s32.totalorder %s626, 15
      %s628 = scalar_select %p627, %s626, 15
      %p629 = scmp.lt.s32.totalorder %s36, 0
      %s630 = scalar_select %p629, %s36, 0
      %s631 = sadd.s32 %s630, %s628
      %s632 = smul.addr %s631, 4
      %s633 = scalar_lea.vmem %s0, %s632
      %s634 = smul.u32 16, %s35
      %p635 = scmp.eq.s32.totalorder %s34, 0
      %s636 = scalar_select %p635, %s36, 0
      %s637 = smul.u32 16, %s636
      %p638 = scmp.lt.s32.totalorder %s637, 15
      %s639 = scalar_select %p638, %s637, 15
      %s640 = smul.addr %s639, 4
      %s641 = scalar_lea.vmem %s1, %s640
      %p642 = scmp.eq.s32.totalorder %s34, 0
      %s643 = scalar_select %p642, %s36, 0
      %s644 = smul.u32 16, %s643
      %p645 = scmp.eq.s32.totalorder %s34, 2
      %s646 = scalar_select %p645, %s35, 0
      %s647 = smul.u32 16, %s646
      %p648 = scmp.lt.s32.totalorder %s647, 15
      %s649 = scalar_select %p648, %s647, 15
      %s650 = smul.addr %s649, 8
      %s651 = scalar_lea.vmem %s18, %s650
      %p652 = scmp.eq.s32.totalorder %s34, 2
      %s653 = scalar_select %p652, %s35, 0
      %s654 = smul.u32 16, %s653
      %p656 = scmp.eq.s32.totalorder %s36, 0
      // Predicated region
      $region93: #{gin_forward.1} parent=91 // pred_check
        %p657 = pneg %p656
      $region94: #{gin_forward.1} parent=91 // pred_check_branch
        %659 = sbr.rel (%p657) target = $region96
      $region95: #{gin_forward.1} parent=91 // pred_region
        %660 = vst [vmem:[#allocation2] sm:$0xff] 0.0
        %661 = vst [vmem:[#allocation2 + $0x8] sm:$0xff] 0.0
        %662 = vst [vmem:[#allocation2 + $0x10] sm:$0xff] 0.0
        %663 = vst [vmem:[#allocation2 + $0x18] sm:$0xff] 0.0
        %664 = vst [vmem:[#allocation2 + $0x20] sm:$0xff] 0.0
        %665 = vst [vmem:[#allocation2 + $0x28] sm:$0xff] 0.0
        %666 = vst [vmem:[#allocation2 + $0x30] sm:$0xff] 0.0
        %667 = vst [vmem:[#allocation2 + $0x38] sm:$0xff] 0.0
        %668 = vst [vmem:[#allocation2 + $0x40] sm:$0xff] 0.0
        %669 = vst [vmem:[#allocation2 + $0x48] sm:$0xff] 0.0
        %670 = vst [vmem:[#allocation2 + $0x50] sm:$0xff] 0.0
        %671 = vst [vmem:[#allocation2 + $0x58] sm:$0xff] 0.0
        %672 = vst [vmem:[#allocation2 + $0x60] sm:$0xff] 0.0
        %673 = vst [vmem:[#allocation2 + $0x68] sm:$0xff] 0.0
        %674 = vst [vmem:[#allocation2 + $0x70] sm:$0xff] 0.0
        %675 = vst [vmem:[#allocation2 + $0x78] sm:$0xff] 0.0
      $region96: #{gin_forward.1} parent=91 // pred_fallthru
        _
      %v676 = vld [vmem:[%s633] sm:$0xf]
      %v677 = vld [vmem:[%s633 + $0x4] sm:$0xf]
      %v678 = vld [vmem:[%s633 + $0x8] sm:$0xf]
      %v679 = vld [vmem:[%s633 + $0xc] sm:$0xf]
      %v680 = vld [vmem:[%s633 + $0x10] sm:$0xf]
      %v681 = vld [vmem:[%s633 + $0x14] sm:$0xf]
      %v682 = vld [vmem:[%s633 + $0x18] sm:$0xf]
      %v683 = vld [vmem:[%s633 + $0x1c] sm:$0xf]
      %v684 = vld [vmem:[%s633 + $0x20] sm:$0xf]
      %v685 = vld [vmem:[%s633 + $0x24] sm:$0xf]
      %v686 = vld [vmem:[%s633 + $0x28] sm:$0xf]
      %v687 = vld [vmem:[%s633 + $0x2c] sm:$0xf]
      %v688 = vld [vmem:[%s633 + $0x30] sm:$0xf]
      %v689 = vld [vmem:[%s633 + $0x34] sm:$0xf]
      %v690 = vld [vmem:[%s633 + $0x38] sm:$0xf]
      %v691 = vld [vmem:[%s633 + $0x3c] sm:$0xf]
      %s692 = smul.u32 %s36, 128
      %p693 = scmp.eq.s32.totalorder %s34, 0
      // Predicated region
      $region97: #{gin_forward.1} parent=91 // pred_check
        %p694 = pneg %p693
      $region98: #{gin_forward.1} parent=91 // pred_check_branch
        %696 = sbr.rel (%p694) target = $region100
      $region99: #{gin_forward.1} parent=91 // pred_region
        %v697 = vld [vmem:[#allocation2] sm:$0xff]
        %v698 = vld [vmem:[#allocation2 + $0x8] sm:$0xff]
        %v699 = vld [vmem:[#allocation2 + $0x10] sm:$0xff]
        %v700 = vld [vmem:[#allocation2 + $0x18] sm:$0xff]
        %v701 = vld [vmem:[#allocation2 + $0x20] sm:$0xff]
        %v702 = vld [vmem:[#allocation2 + $0x28] sm:$0xff]
        %v703 = vld [vmem:[#allocation2 + $0x30] sm:$0xff]
        %v704 = vld [vmem:[#allocation2 + $0x38] sm:$0xff]
        %v705 = vld [vmem:[#allocation2 + $0x40] sm:$0xff]
        %v706 = vld [vmem:[#allocation2 + $0x48] sm:$0xff]
        %v707 = vld [vmem:[#allocation2 + $0x50] sm:$0xff]
        %v708 = vld [vmem:[#allocation2 + $0x58] sm:$0xff]
        %v709 = vld [vmem:[#allocation2 + $0x60] sm:$0xff]
        %v710 = vld [vmem:[#allocation2 + $0x68] sm:$0xff]
        %v711 = vld [vmem:[#allocation2 + $0x70] sm:$0xff]
        %v712 = vld [vmem:[#allocation2 + $0x78] sm:$0xff]
        %v713 = vld [vmem:[%s641] sm:$0xf]
        %v714 = vld [vmem:[%s641 + $0x4] sm:$0xf]
        %v715 = vld [vmem:[%s641 + $0x8] sm:$0xf]
        %v716 = vld [vmem:[%s641 + $0xc] sm:$0xf]
        %v717 = vld [vmem:[%s641 + $0x10] sm:$0xf]
        %v718 = vld [vmem:[%s641 + $0x14] sm:$0xf]
        %v719 = vld [vmem:[%s641 + $0x18] sm:$0xf]
        %v720 = vld [vmem:[%s641 + $0x1c] sm:$0xf]
        %v721 = vld [vmem:[%s641 + $0x20] sm:$0xf]
        %v722 = vld [vmem:[%s641 + $0x24] sm:$0xf]
        %v723 = vld [vmem:[%s641 + $0x28] sm:$0xf]
        %v724 = vld [vmem:[%s641 + $0x2c] sm:$0xf]
        %v725 = vld [vmem:[%s641 + $0x30] sm:$0xf]
        %v726 = vld [vmem:[%s641 + $0x34] sm:$0xf]
        %v727 = vld [vmem:[%s641 + $0x38] sm:$0xf]
        %v728 = vld [vmem:[%s641 + $0x3c] sm:$0xf]
        %v745 = vunpack.c.l.b16 %v676
        %v746 = vunpack.c.l.b16 %v677
        %v747 = vunpack.c.l.b16 %v678
        %v748 = vunpack.c.l.b16 %v679
        %v749 = vunpack.c.l.b16 %v680
        %v750 = vunpack.c.l.b16 %v681
        %v751 = vunpack.c.l.b16 %v682
        %v752 = vunpack.c.l.b16 %v683
        %v753 = vunpack.c.l.b16 %v684
        %v754 = vunpack.c.l.b16 %v685
        %v755 = vunpack.c.l.b16 %v686
        %v756 = vunpack.c.l.b16 %v687
        %v757 = vunpack.c.l.b16 %v688
        %v758 = vunpack.c.l.b16 %v689
        %v759 = vunpack.c.l.b16 %v690
        %v760 = vunpack.c.l.b16 %v691
        %v761 = vpack.c.b16 %v746, %v745
        %v762 = vpack.c.b16 %v748, %v747
        %v763 = vpack.c.b16 %v750, %v749
        %v764 = vpack.c.b16 %v752, %v751
        %v765 = vpack.c.b16 %v754, %v753
        %v766 = vpack.c.b16 %v756, %v755
        %v767 = vpack.c.b16 %v758, %v757
        %v768 = vpack.c.b16 %v760, %v759
        %v793 = vunpack.c.l.b16 %v713
        %v794 = vunpack.c.l.b16 %v714
        %v795 = vunpack.c.l.b16 %v715
        %v796 = vunpack.c.l.b16 %v716
        %v797 = vunpack.c.l.b16 %v717
        %v798 = vunpack.c.l.b16 %v718
        %v799 = vunpack.c.l.b16 %v719
        %v800 = vunpack.c.l.b16 %v720
        %v801 = vunpack.c.l.b16 %v721
        %v802 = vunpack.c.l.b16 %v722
        %v803 = vunpack.c.l.b16 %v723
        %v804 = vunpack.c.l.b16 %v724
        %v805 = vunpack.c.l.b16 %v725
        %v806 = vunpack.c.l.b16 %v726
        %v807 = vunpack.c.l.b16 %v727
        %v808 = vunpack.c.l.b16 %v728
        %v809 = vpack.c.b16 %v794, %v793
        %v810 = vpack.c.b16 %v796, %v795
        %v811 = vpack.c.b16 %v798, %v797
        %v812 = vpack.c.b16 %v800, %v799
        %v813 = vpack.c.b16 %v802, %v801
        %v814 = vpack.c.b16 %v804, %v803
        %v815 = vpack.c.b16 %v806, %v805
        %v816 = vpack.c.b16 %v808, %v807
        %825 = vmatprep.subr.bf16.mxu0 0
        %826 = vmatpush1.bf16.msra.mxu0 %v809
        %827 = vmatprep.subr.bf16.mxu0 0
        %828 = vmatpush1.bf16.msra.mxu0 %v810
        %829 = vmatprep.subr.bf16.mxu0 0
        %830 = vmatpush1.bf16.msra.mxu0 %v811
        %831 = vmatprep.subr.bf16.mxu0 0
        %832 = vmatpush1.bf16.msra.mxu0 %v812
        %833 = vmatprep.subr.bf16.mxu0 0
        %834 = vmatpush1.bf16.msra.mxu0 %v813
        %835 = vmatprep.subr.bf16.mxu0 0
        %836 = vmatpush1.bf16.msra.mxu0 %v814
        %837 = vmatprep.subr.bf16.mxu0 0
        %838 = vmatpush1.bf16.msra.mxu0 %v815
        %839 = vmatprep.subr.bf16.mxu0 0
        %840 = vmatpush1.bf16.msra.mxu0 %v816
        %841 = vmatprep.subr.bf16.mxu0 0
        %842 = vmatpush1.bf16.msra.mxu0 0
        %843 = vmatprep.subr.bf16.mxu0 0
        %844 = vmatpush1.bf16.msra.mxu0 0
        %845 = vmatprep.subr.bf16.mxu0 0
        %846 = vmatpush1.bf16.msra.mxu0 0
        %847 = vmatprep.subr.bf16.mxu0 0
        %848 = vmatpush1.bf16.msra.mxu0 0
        %849 = vmatprep.subr.bf16.mxu0 0
        %850 = vmatpush1.bf16.msra.mxu0 0
        %851 = vmatprep.subr.bf16.mxu0 0
        %852 = vmatpush1.bf16.msra.mxu0 0
        %853 = vmatprep.subr.bf16.mxu0 0
        %854 = vmatpush1.bf16.msra.mxu0 0
        %855 = vmatprep.subr.bf16.mxu0 0
        %856 = vmatpush1.bf16.msra.mxu0 0
        %857 = vmatprep.mubr.bf16.mxu0 0
        %858 = vmatmul.mubr.bf16.gmra.mrb[0].mxu0 %v761
        %v859 = vpop.f32.mrb[0].mxu0
        %v860 = vadd.f32 0.0, %v859
        %v861 = vpop.f32.mrb[0].mxu0
        %v862 = vpop.f32.mrb[0].mxu0
        %v863 = vadd.f32 0.0, %v862
        %v864 = vpop.f32.mrb[0].mxu0
        %865 = vmatprep.mubr.bf16.mxu0 0
        %866 = vmatmul.mubr.bf16.gmra.mrb[0].mxu0 %v762
        %v867 = vpop.f32.mrb[0].mxu0
        %v868 = vadd.f32 0.0, %v867
        %v869 = vpop.f32.mrb[0].mxu0
        %v870 = vpop.f32.mrb[0].mxu0
        %v871 = vadd.f32 0.0, %v870
        %v872 = vpop.f32.mrb[0].mxu0
        %873 = vmatprep.mubr.bf16.mxu0 0
        %874 = vmatmul.mubr.bf16.gmra.mrb[0].mxu0 %v763
        %v875 = vpop.f32.mrb[0].mxu0
        %v876 = vadd.f32 0.0, %v875
        %v877 = vpop.f32.mrb[0].mxu0
        %v878 = vpop.f32.mrb[0].mxu0
        %v879 = vadd.f32 0.0, %v878
        %v880 = vpop.f32.mrb[0].mxu0
        %881 = vmatprep.mubr.bf16.mxu0 0
        %882 = vmatmul.mubr.bf16.gmra.mrb[0].mxu0 %v764
        %v883 = vpop.f32.mrb[0].mxu0
        %v884 = vadd.f32 0.0, %v883
        %v885 = vpop.f32.mrb[0].mxu0
        %v886 = vpop.f32.mrb[0].mxu0
        %v887 = vadd.f32 0.0, %v886
        %v888 = vpop.f32.mrb[0].mxu0
        %889 = vmatprep.mubr.bf16.mxu0 0
        %890 = vmatmul.mubr.bf16.gmra.mrb[0].mxu0 %v765
        %v891 = vpop.f32.mrb[0].mxu0
        %v892 = vadd.f32 0.0, %v891
        %v893 = vpop.f32.mrb[0].mxu0
        %v894 = vpop.f32.mrb[0].mxu0
        %v895 = vadd.f32 0.0, %v894
        %v896 = vpop.f32.mrb[0].mxu0
        %897 = vmatprep.mubr.bf16.mxu0 0
        %898 = vmatmul.mubr.bf16.gmra.mrb[0].mxu0 %v766
        %v899 = vpop.f32.mrb[0].mxu0
        %v900 = vadd.f32 0.0, %v899
        %v901 = vpop.f32.mrb[0].mxu0
        %v902 = vpop.f32.mrb[0].mxu0
        %v903 = vadd.f32 0.0, %v902
        %v904 = vpop.f32.mrb[0].mxu0
        %905 = vmatprep.mubr.bf16.mxu0 0
        %906 = vmatmul.mubr.bf16.gmra.mrb[0].mxu0 %v767
        %v907 = vpop.f32.mrb[0].mxu0
        %v908 = vadd.f32 0.0, %v907
        %v909 = vpop.f32.mrb[0].mxu0
        %v910 = vpop.f32.mrb[0].mxu0
        %v911 = vadd.f32 0.0, %v910
        %v912 = vpop.f32.mrb[0].mxu0
        %913 = vmatprep.mubr.bf16.mxu0 0
        %914 = vmatmul.mubr.bf16.gmra.mrb[0].mxu0 %v768
        %v915 = vpop.f32.mrb[0].mxu0
        %v916 = vadd.f32 0.0, %v915
        %v917 = vpop.f32.mrb[0].mxu0
        %v918 = vpop.f32.mrb[0].mxu0
        %v919 = vadd.f32 0.0, %v918
        %v920 = vpop.f32.mrb[0].mxu0
        %921 = vdwg.mxu0
        %v922 = vadd.f32 %v697, %v860
        %v923 = vadd.f32 %v698, %v863
        %v924 = vadd.f32 %v699, %v868
        %v925 = vadd.f32 %v700, %v871
        %v926 = vadd.f32 %v701, %v876
        %v927 = vadd.f32 %v702, %v879
        %v928 = vadd.f32 %v703, %v884
        %v929 = vadd.f32 %v704, %v887
        %v930 = vadd.f32 %v705, %v892
        %v931 = vadd.f32 %v706, %v895
        %v932 = vadd.f32 %v707, %v900
        %v933 = vadd.f32 %v708, %v903
        %v934 = vadd.f32 %v709, %v908
        %v935 = vadd.f32 %v710, %v911
        %v936 = vadd.f32 %v711, %v916
        %v937 = vadd.f32 %v712, %v919
        %938 = vst [vmem:[#allocation2] sm:$0xff] %v922
        %939 = vst [vmem:[#allocation2 + $0x8] sm:$0xff] %v923
        %940 = vst [vmem:[#allocation2 + $0x10] sm:$0xff] %v924
        %941 = vst [vmem:[#allocation2 + $0x18] sm:$0xff] %v925
        %942 = vst [vmem:[#allocation2 + $0x20] sm:$0xff] %v926
        %943 = vst [vmem:[#allocation2 + $0x28] sm:$0xff] %v927
        %944 = vst [vmem:[#allocation2 + $0x30] sm:$0xff] %v928
        %945 = vst [vmem:[#allocation2 + $0x38] sm:$0xff] %v929
        %946 = vst [vmem:[#allocation2 + $0x40] sm:$0xff] %v930
        %947 = vst [vmem:[#allocation2 + $0x48] sm:$0xff] %v931
        %948 = vst [vmem:[#allocation2 + $0x50] sm:$0xff] %v932
        %949 = vst [vmem:[#allocation2 + $0x58] sm:$0xff] %v933
        %950 = vst [vmem:[#allocation2 + $0x60] sm:$0xff] %v934
        %951 = vst [vmem:[#allocation2 + $0x68] sm:$0xff] %v935
        %952 = vst [vmem:[#allocation2 + $0x70] sm:$0xff] %v936
        %953 = vst [vmem:[#allocation2 + $0x78] sm:$0xff] %v937
      $region100: #{gin_forward.1} parent=91 // pred_fallthru
        _
      %p954 = scmp.eq.s32.totalorder %s34, 1
      // Predicated region
      $region101: #{gin_forward.1} parent=91 // pred_check
        %p955 = pneg %p954
      $region102: #{gin_forward.1} parent=91 // pred_check_branch
        %957 = sbr.rel (%p955) target = $region104
      $region103: #{gin_forward.1} parent=91 // pred_region
        %v958 = vld [vmem:[#allocation2] sm:$0xff]
        %v959 = vld [vmem:[#allocation2 + $0x8] sm:$0xff]
        %v960 = vld [vmem:[#allocation2 + $0x10] sm:$0xff]
        %v961 = vld [vmem:[#allocation2 + $0x18] sm:$0xff]
        %v962 = vld [vmem:[#allocation2 + $0x20] sm:$0xff]
        %v963 = vld [vmem:[#allocation2 + $0x28] sm:$0xff]
        %v964 = vld [vmem:[#allocation2 + $0x30] sm:$0xff]
        %v965 = vld [vmem:[#allocation2 + $0x38] sm:$0xff]
        %v966 = vld [vmem:[#allocation2 + $0x40] sm:$0xff]
        %v967 = vld [vmem:[#allocation2 + $0x48] sm:$0xff]
        %v968 = vld [vmem:[#allocation2 + $0x50] sm:$0xff]
        %v969 = vld [vmem:[#allocation2 + $0x58] sm:$0xff]
        %v970 = vld [vmem:[#allocation2 + $0x60] sm:$0xff]
        %v971 = vld [vmem:[#allocation2 + $0x68] sm:$0xff]
        %v972 = vld [vmem:[#allocation2 + $0x70] sm:$0xff]
        %v973 = vld [vmem:[#allocation2 + $0x78] sm:$0xff]
        %s974 = sshra.s32 %s692, 4
        %s975 = sand.u32 %s692, 15
        %s976 = smul.addr %s974, 8
        %s977 = scalar_lea.vmem [#allocation3], %s976
        %v978 = vld [vmem:[%s977] sm:$0xff]
        %v979 = vld [vmem:[%s977 + $0x8] sm:$0xff]
        %v980 = vld [vmem:[%s977 + $0x10] sm:$0xff]
        %v981 = vld [vmem:[%s977 + $0x18] sm:$0xff]
        %v982 = vld [vmem:[%s977 + $0x20] sm:$0xff]
        %v983 = vld [vmem:[%s977 + $0x28] sm:$0xff]
        %v984 = vld [vmem:[%s977 + $0x30] sm:$0xff]
        %v985 = vld [vmem:[%s977 + $0x38] sm:$0xff]
        %v1002 = vunpack.c.l.b16 %v676
        %v1003 = vunpack.c.l.b16 %v677
        %v1004 = vunpack.c.l.b16 %v678
        %v1005 = vunpack.c.l.b16 %v679
        %v1006 = vunpack.c.l.b16 %v680
        %v1007 = vunpack.c.l.b16 %v681
        %v1008 = vunpack.c.l.b16 %v682
        %v1009 = vunpack.c.l.b16 %v683
        %v1010 = vunpack.c.l.b16 %v684
        %v1011 = vunpack.c.l.b16 %v685
        %v1012 = vunpack.c.l.b16 %v686
        %v1013 = vunpack.c.l.b16 %v687
        %v1014 = vunpack.c.l.b16 %v688
        %v1015 = vunpack.c.l.b16 %v689
        %v1016 = vunpack.c.l.b16 %v690
        %v1017 = vunpack.c.l.b16 %v691
        %v1018 = vpack.c.b16 %v1003, %v1002
        %v1019 = vpack.c.b16 %v1005, %v1004
        %v1020 = vpack.c.b16 %v1007, %v1006
        %v1021 = vpack.c.b16 %v1009, %v1008
        %v1022 = vpack.c.b16 %v1011, %v1010
        %v1023 = vpack.c.b16 %v1013, %v1012
        %v1024 = vpack.c.b16 %v1015, %v1014
        %v1025 = vpack.c.b16 %v1017, %v1016
        %1034 = vmatprep.subr.bf16.mxu0 0
        %1035 = vmatpush1.bf16.msra.mxu0 %v978
        %1036 = vmatprep.subr.bf16.mxu0 0
        %1037 = vmatpush1.bf16.msra.mxu0 %v979
        %1038 = vmatprep.subr.bf16.mxu0 0
        %1039 = vmatpush1.bf16.msra.mxu0 %v980
        %1040 = vmatprep.subr.bf16.mxu0 0
        %1041 = vmatpush1.bf16.msra.mxu0 %v981
        %1042 = vmatprep.subr.bf16.mxu0 0
        %1043 = vmatpush1.bf16.msra.mxu0 %v982
        %1044 = vmatprep.subr.bf16.mxu0 0
        %1045 = vmatpush1.bf16.msra.mxu0 %v983
        %1046 = vmatprep.subr.bf16.mxu0 0
        %1047 = vmatpush1.bf16.msra.mxu0 %v984
        %1048 = vmatprep.subr.bf16.mxu0 0
        %1049 = vmatpush1.bf16.msra.mxu0 %v985
        %1050 = vmatprep.subr.bf16.mxu0 0
        %1051 = vmatpush1.bf16.msra.mxu0 0
        %1052 = vmatprep.subr.bf16.mxu0 0
        %1053 = vmatpush1.bf16.msra.mxu0 0
        %1054 = vmatprep.subr.bf16.mxu0 0
        %1055 = vmatpush1.bf16.msra.mxu0 0
        %1056 = vmatprep.subr.bf16.mxu0 0
        %1057 = vmatpush1.bf16.msra.mxu0 0
        %1058 = vmatprep.subr.bf16.mxu0 0
        %1059 = vmatpush1.bf16.msra.mxu0 0
        %1060 = vmatprep.subr.bf16.mxu0 0
        %1061 = vmatpush1.bf16.msra.mxu0 0
        %1062 = vmatprep.subr.bf16.mxu0 0
        %1063 = vmatpush1.bf16.msra.mxu0 0
        %1064 = vmatprep.subr.bf16.mxu0 0
        %1065 = vmatpush1.bf16.msra.mxu0 0
        %1066 = vmatprep.mubr.bf16.mxu0 0
        %1067 = vmatmul.mubr.bf16.gmra.mrb[0].mxu0 %v1018
        %v1068 = vpop.f32.mrb[0].mxu0
        %v1069 = vadd.f32 0.0, %v1068
        %v1070 = vpop.f32.mrb[0].mxu0
        %v1071 = vpop.f32.mrb[0].mxu0
        %v1072 = vadd.f32 0.0, %v1071
        %v1073 = vpop.f32.mrb[0].mxu0
        %1074 = vmatprep.mubr.bf16.mxu0 0
        %1075 = vmatmul.mubr.bf16.gmra.mrb[0].mxu0 %v1019
        %v1076 = vpop.f32.mrb[0].mxu0
        %v1077 = vadd.f32 0.0, %v1076
        %v1078 = vpop.f32.mrb[0].mxu0
        %v1079 = vpop.f32.mrb[0].mxu0
        %v1080 = vadd.f32 0.0, %v1079
        %v1081 = vpop.f32.mrb[0].mxu0
        %1082 = vmatprep.mubr.bf16.mxu0 0
        %1083 = vmatmul.mubr.bf16.gmra.mrb[0].mxu0 %v1020
        %v1084 = vpop.f32.mrb[0].mxu0
        %v1085 = vadd.f32 0.0, %v1084
        %v1086 = vpop.f32.mrb[0].mxu0
        %v1087 = vpop.f32.mrb[0].mxu0
        %v1088 = vadd.f32 0.0, %v1087
        %v1089 = vpop.f32.mrb[0].mxu0
        %1090 = vmatprep.mubr.bf16.mxu0 0
        %1091 = vmatmul.mubr.bf16.gmra.mrb[0].mxu0 %v1021
        %v1092 = vpop.f32.mrb[0].mxu0
        %v1093 = vadd.f32 0.0, %v1092
        %v1094 = vpop.f32.mrb[0].mxu0
        %v1095 = vpop.f32.mrb[0].mxu0
        %v1096 = vadd.f32 0.0, %v1095
        %v1097 = vpop.f32.mrb[0].mxu0
        %1098 = vmatprep.mubr.bf16.mxu0 0
        %1099 = vmatmul.mubr.bf16.gmra.mrb[0].mxu0 %v1022
        %v1100 = vpop.f32.mrb[0].mxu0
        %v1101 = vadd.f32 0.0, %v1100
        %v1102 = vpop.f32.mrb[0].mxu0
        %v1103 = vpop.f32.mrb[0].mxu0
        %v1104 = vadd.f32 0.0, %v1103
        %v1105 = vpop.f32.mrb[0].mxu0
        %1106 = vmatprep.mubr.bf16.mxu0 0
        %1107 = vmatmul.mubr.bf16.gmra.mrb[0].mxu0 %v1023
        %v1108 = vpop.f32.mrb[0].mxu0
        %v1109 = vadd.f32 0.0, %v1108
        %v1110 = vpop.f32.mrb[0].mxu0
        %v1111 = vpop.f32.mrb[0].mxu0
        %v1112 = vadd.f32 0.0, %v1111
        %v1113 = vpop.f32.mrb[0].mxu0
        %1114 = vmatprep.mubr.bf16.mxu0 0
        %1115 = vmatmul.mubr.bf16.gmra.mrb[0].mxu0 %v1024
        %v1116 = vpop.f32.mrb[0].mxu0
        %v1117 = vadd.f32 0.0, %v1116
        %v1118 = vpop.f32.mrb[0].mxu0
        %v1119 = vpop.f32.mrb[0].mxu0
        %v1120 = vadd.f32 0.0, %v1119
        %v1121 = vpop.f32.mrb[0].mxu0
        %1122 = vmatprep.mubr.bf16.mxu0 0
        %1123 = vmatmul.mubr.bf16.gmra.mrb[0].mxu0 %v1025
        %v1124 = vpop.f32.mrb[0].mxu0
        %v1125 = vadd.f32 0.0, %v1124
        %v1126 = vpop.f32.mrb[0].mxu0
        %v1127 = vpop.f32.mrb[0].mxu0
        %v1128 = vadd.f32 0.0, %v1127
        %v1129 = vpop.f32.mrb[0].mxu0
        %1130 = vdwg.mxu0
        %v1131 = vadd.f32 %v958, %v1069
        %v1132 = vadd.f32 %v959, %v1072
        %v1133 = vadd.f32 %v960, %v1077
        %v1134 = vadd.f32 %v961, %v1080
        %v1135 = vadd.f32 %v962, %v1085
        %v1136 = vadd.f32 %v963, %v1088
        %v1137 = vadd.f32 %v964, %v1093
        %v1138 = vadd.f32 %v965, %v1096
        %v1139 = vadd.f32 %v966, %v1101
        %v1140 = vadd.f32 %v967, %v1104
        %v1141 = vadd.f32 %v968, %v1109
        %v1142 = vadd.f32 %v969, %v1112
        %v1143 = vadd.f32 %v970, %v1117
        %v1144 = vadd.f32 %v971, %v1120
        %v1145 = vadd.f32 %v972, %v1125
        %v1146 = vadd.f32 %v973, %v1128
        %1147 = vst [vmem:[#allocation2] sm:$0xff] %v1131
        %1148 = vst [vmem:[#allocation2 + $0x8] sm:$0xff] %v1132
        %1149 = vst [vmem:[#allocation2 + $0x10] sm:$0xff] %v1133
        %1150 = vst [vmem:[#allocation2 + $0x18] sm:$0xff] %v1134
        %1151 = vst [vmem:[#allocation2 + $0x20] sm:$0xff] %v1135
        %1152 = vst [vmem:[#allocation2 + $0x28] sm:$0xff] %v1136
        %1153 = vst [vmem:[#allocation2 + $0x30] sm:$0xff] %v1137
        %1154 = vst [vmem:[#allocation2 + $0x38] sm:$0xff] %v1138
        %1155 = vst [vmem:[#allocation2 + $0x40] sm:$0xff] %v1139
        %1156 = vst [vmem:[#allocation2 + $0x48] sm:$0xff] %v1140
        %1157 = vst [vmem:[#allocation2 + $0x50] sm:$0xff] %v1141
        %1158 = vst [vmem:[#allocation2 + $0x58] sm:$0xff] %v1142
        %1159 = vst [vmem:[#allocation2 + $0x60] sm:$0xff] %v1143
        %1160 = vst [vmem:[#allocation2 + $0x68] sm:$0xff] %v1144
        %1161 = vst [vmem:[#allocation2 + $0x70] sm:$0xff] %v1145
        %1162 = vst [vmem:[#allocation2 + $0x78] sm:$0xff] %v1146
      $region104: #{gin_forward.1} parent=91 // pred_fallthru
        _
      %p1163 = scmp.eq.s32.totalorder %s34, 2
      // Predicated region
      $region105: #{gin_forward.1} parent=91 // pred_check
        %p1164 = pneg %p1163
      $region106: #{gin_forward.1} parent=91 // pred_check_branch
        %1166 = sbr.rel (%p1164) target = $region108
      $region107: #{gin_forward.1} parent=91 // pred_region
        %v1167 = vld [vmem:[#allocation2] sm:$0xff]
        %v1168 = vld [vmem:[#allocation2 + $0x8] sm:$0xff]
        %v1169 = vld [vmem:[#allocation2 + $0x10] sm:$0xff]
        %v1170 = vld [vmem:[#allocation2 + $0x18] sm:$0xff]
        %v1171 = vld [vmem:[#allocation2 + $0x20] sm:$0xff]
        %v1172 = vld [vmem:[#allocation2 + $0x28] sm:$0xff]
        %v1173 = vld [vmem:[#allocation2 + $0x30] sm:$0xff]
        %v1174 = vld [vmem:[#allocation2 + $0x38] sm:$0xff]
        %v1175 = vld [vmem:[#allocation2 + $0x40] sm:$0xff]
        %v1176 = vld [vmem:[#allocation2 + $0x48] sm:$0xff]
        %v1177 = vld [vmem:[#allocation2 + $0x50] sm:$0xff]
        %v1178 = vld [vmem:[#allocation2 + $0x58] sm:$0xff]
        %v1179 = vld [vmem:[#allocation2 + $0x60] sm:$0xff]
        %v1180 = vld [vmem:[#allocation2 + $0x68] sm:$0xff]
        %v1181 = vld [vmem:[#allocation2 + $0x70] sm:$0xff]
        %v1182 = vld [vmem:[#allocation2 + $0x78] sm:$0xff]
        %s1183 = sshra.s32 %s692, 4
        %s1184 = sand.u32 %s692, 15
        %s1185 = smul.addr %s1183, 8
        %s1186 = scalar_lea.vmem [#allocation4], %s1185
        %v1187 = vld [vmem:[%s1186] sm:$0xff]
        %v1188 = vld [vmem:[%s1186 + $0x8] sm:$0xff]
        %v1189 = vld [vmem:[%s1186 + $0x10] sm:$0xff]
        %v1190 = vld [vmem:[%s1186 + $0x18] sm:$0xff]
        %v1191 = vld [vmem:[%s1186 + $0x20] sm:$0xff]
        %v1192 = vld [vmem:[%s1186 + $0x28] sm:$0xff]
        %v1193 = vld [vmem:[%s1186 + $0x30] sm:$0xff]
        %v1194 = vld [vmem:[%s1186 + $0x38] sm:$0xff]
        %v1211 = vunpack.c.l.b16 %v676
        %v1212 = vunpack.c.l.b16 %v677
        %v1213 = vunpack.c.l.b16 %v678
        %v1214 = vunpack.c.l.b16 %v679
        %v1215 = vunpack.c.l.b16 %v680
        %v1216 = vunpack.c.l.b16 %v681
        %v1217 = vunpack.c.l.b16 %v682
        %v1218 = vunpack.c.l.b16 %v683
        %v1219 = vunpack.c.l.b16 %v684
        %v1220 = vunpack.c.l.b16 %v685
        %v1221 = vunpack.c.l.b16 %v686
        %v1222 = vunpack.c.l.b16 %v687
        %v1223 = vunpack.c.l.b16 %v688
        %v1224 = vunpack.c.l.b16 %v689
        %v1225 = vunpack.c.l.b16 %v690
        %v1226 = vunpack.c.l.b16 %v691
        %v1227 = vpack.c.b16 %v1212, %v1211
        %v1228 = vpack.c.b16 %v1214, %v1213
        %v1229 = vpack.c.b16 %v1216, %v1215
        %v1230 = vpack.c.b16 %v1218, %v1217
        %v1231 = vpack.c.b16 %v1220, %v1219
        %v1232 = vpack.c.b16 %v1222, %v1221
        %v1233 = vpack.c.b16 %v1224, %v1223
        %v1234 = vpack.c.b16 %v1226, %v1225
        %1243 = vmatprep.subr.bf16.mxu0 0
        %1244 = vmatpush1.bf16.msra.mxu0 %v1187
        %1245 = vmatprep.subr.bf16.mxu0 0
        %1246 = vmatpush1.bf16.msra.mxu0 %v1188
        %1247 = vmatprep.subr.bf16.mxu0 0
        %1248 = vmatpush1.bf16.msra.mxu0 %v1189
        %1249 = vmatprep.subr.bf16.mxu0 0
        %1250 = vmatpush1.bf16.msra.mxu0 %v1190
        %1251 = vmatprep.subr.bf16.mxu0 0
        %1252 = vmatpush1.bf16.msra.mxu0 %v1191
        %1253 = vmatprep.subr.bf16.mxu0 0
        %1254 = vmatpush1.bf16.msra.mxu0 %v1192
        %1255 = vmatprep.subr.bf16.mxu0 0
        %1256 = vmatpush1.bf16.msra.mxu0 %v1193
        %1257 = vmatprep.subr.bf16.mxu0 0
        %1258 = vmatpush1.bf16.msra.mxu0 %v1194
        %1259 = vmatprep.subr.bf16.mxu0 0
        %1260 = vmatpush1.bf16.msra.mxu0 0
        %1261 = vmatprep.subr.bf16.mxu0 0
        %1262 = vmatpush1.bf16.msra.mxu0 0
        %1263 = vmatprep.subr.bf16.mxu0 0
        %1264 = vmatpush1.bf16.msra.mxu0 0
        %1265 = vmatprep.subr.bf16.mxu0 0
        %1266 = vmatpush1.bf16.msra.mxu0 0
        %1267 = vmatprep.subr.bf16.mxu0 0
        %1268 = vmatpush1.bf16.msra.mxu0 0
        %1269 = vmatprep.subr.bf16.mxu0 0
        %1270 = vmatpush1.bf16.msra.mxu0 0
        %1271 = vmatprep.subr.bf16.mxu0 0
        %1272 = vmatpush1.bf16.msra.mxu0 0
        %1273 = vmatprep.subr.bf16.mxu0 0
        %1274 = vmatpush1.bf16.msra.mxu0 0
        %1275 = vmatprep.mubr.bf16.mxu0 0
        %1276 = vmatmul.mubr.bf16.gmra.mrb[0].mxu0 %v1227
        %v1277 = vpop.f32.mrb[0].mxu0
        %v1278 = vadd.f32 0.0, %v1277
        %v1279 = vpop.f32.mrb[0].mxu0
        %v1280 = vpop.f32.mrb[0].mxu0
        %v1281 = vadd.f32 0.0, %v1280
        %v1282 = vpop.f32.mrb[0].mxu0
        %1283 = vmatprep.mubr.bf16.mxu0 0
        %1284 = vmatmul.mubr.bf16.gmra.mrb[0].mxu0 %v1228
        %v1285 = vpop.f32.mrb[0].mxu0
        %v1286 = vadd.f32 0.0, %v1285
        %v1287 = vpop.f32.mrb[0].mxu0
        %v1288 = vpop.f32.mrb[0].mxu0
        %v1289 = vadd.f32 0.0, %v1288
        %v1290 = vpop.f32.mrb[0].mxu0
        %1291 = vmatprep.mubr.bf16.mxu0 0
        %1292 = vmatmul.mubr.bf16.gmra.mrb[0].mxu0 %v1229
        %v1293 = vpop.f32.mrb[0].mxu0
        %v1294 = vadd.f32 0.0, %v1293
        %v1295 = vpop.f32.mrb[0].mxu0
        %v1296 = vpop.f32.mrb[0].mxu0
        %v1297 = vadd.f32 0.0, %v1296
        %v1298 = vpop.f32.mrb[0].mxu0
        %1299 = vmatprep.mubr.bf16.mxu0 0
        %1300 = vmatmul.mubr.bf16.gmra.mrb[0].mxu0 %v1230
        %v1301 = vpop.f32.mrb[0].mxu0
        %v1302 = vadd.f32 0.0, %v1301
        %v1303 = vpop.f32.mrb[0].mxu0
        %v1304 = vpop.f32.mrb[0].mxu0
        %v1305 = vadd.f32 0.0, %v1304
        %v1306 = vpop.f32.mrb[0].mxu0
        %1307 = vmatprep.mubr.bf16.mxu0 0
        %1308 = vmatmul.mubr.bf16.gmra.mrb[0].mxu0 %v1231
        %v1309 = vpop.f32.mrb[0].mxu0
        %v1310 = vadd.f32 0.0, %v1309
        %v1311 = vpop.f32.mrb[0].mxu0
        %v1312 = vpop.f32.mrb[0].mxu0
        %v1313 = vadd.f32 0.0, %v1312
        %v1314 = vpop.f32.mrb[0].mxu0
        %1315 = vmatprep.mubr.bf16.mxu0 0
        %1316 = vmatmul.mubr.bf16.gmra.mrb[0].mxu0 %v1232
        %v1317 = vpop.f32.mrb[0].mxu0
        %v1318 = vadd.f32 0.0, %v1317
        %v1319 = vpop.f32.mrb[0].mxu0
        %v1320 = vpop.f32.mrb[0].mxu0
        %v1321 = vadd.f32 0.0, %v1320
        %v1322 = vpop.f32.mrb[0].mxu0
        %1323 = vmatprep.mubr.bf16.mxu0 0
        %1324 = vmatmul.mubr.bf16.gmra.mrb[0].mxu0 %v1233
        %v1325 = vpop.f32.mrb[0].mxu0
        %v1326 = vadd.f32 0.0, %v1325
        %v1327 = vpop.f32.mrb[0].mxu0
        %v1328 = vpop.f32.mrb[0].mxu0
        %v1329 = vadd.f32 0.0, %v1328
        %v1330 = vpop.f32.mrb[0].mxu0
        %1331 = vmatprep.mubr.bf16.mxu0 0
        %1332 = vmatmul.mubr.bf16.gmra.mrb[0].mxu0 %v1234
        %v1333 = vpop.f32.mrb[0].mxu0
        %v1334 = vadd.f32 0.0, %v1333
        %v1335 = vpop.f32.mrb[0].mxu0
        %v1336 = vpop.f32.mrb[0].mxu0
        %v1337 = vadd.f32 0.0, %v1336
        %v1338 = vpop.f32.mrb[0].mxu0
        %1339 = vdwg.mxu0
        %v1340 = vadd.f32 %v1167, %v1278
        %v1341 = vadd.f32 %v1168, %v1281
        %v1342 = vadd.f32 %v1169, %v1286
        %v1343 = vadd.f32 %v1170, %v1289
        %v1344 = vadd.f32 %v1171, %v1294
        %v1345 = vadd.f32 %v1172, %v1297
        %v1346 = vadd.f32 %v1173, %v1302
        %v1347 = vadd.f32 %v1174, %v1305
        %v1348 = vadd.f32 %v1175, %v1310
        %v1349 = vadd.f32 %v1176, %v1313
        %v1350 = vadd.f32 %v1177, %v1318
        %v1351 = vadd.f32 %v1178, %v1321
        %v1352 = vadd.f32 %v1179, %v1326
        %v1353 = vadd.f32 %v1180, %v1329
        %v1354 = vadd.f32 %v1181, %v1334
        %v1355 = vadd.f32 %v1182, %v1337
        %1356 = vst [vmem:[#allocation2] sm:$0xff] %v1340
        %1357 = vst [vmem:[#allocation2 + $0x8] sm:$0xff] %v1341
        %1358 = vst [vmem:[#allocation2 + $0x10] sm:$0xff] %v1342
        %1359 = vst [vmem:[#allocation2 + $0x18] sm:$0xff] %v1343
        %1360 = vst [vmem:[#allocation2 + $0x20] sm:$0xff] %v1344
        %1361 = vst [vmem:[#allocation2 + $0x28] sm:$0xff] %v1345
        %1362 = vst [vmem:[#allocation2 + $0x30] sm:$0xff] %v1346
        %1363 = vst [vmem:[#allocation2 + $0x38] sm:$0xff] %v1347
        %1364 = vst [vmem:[#allocation2 + $0x40] sm:$0xff] %v1348
        %1365 = vst [vmem:[#allocation2 + $0x48] sm:$0xff] %v1349
        %1366 = vst [vmem:[#allocation2 + $0x50] sm:$0xff] %v1350
        %1367 = vst [vmem:[#allocation2 + $0x58] sm:$0xff] %v1351
        %1368 = vst [vmem:[#allocation2 + $0x60] sm:$0xff] %v1352
        %1369 = vst [vmem:[#allocation2 + $0x68] sm:$0xff] %v1353
        %1370 = vst [vmem:[#allocation2 + $0x70] sm:$0xff] %v1354
        %1371 = vst [vmem:[#allocation2 + $0x78] sm:$0xff] %v1355
      $region108: #{gin_forward.1} parent=91 // pred_fallthru
        _
      // Predicated region
      $region109: #{gin_forward.1} parent=91 // pred_check
        %p1372 = pneg %p656
      $region110: #{gin_forward.1} parent=91 // pred_check_branch
        %1374 = sbr.rel (%p1372) target = $region112
      $region111: #{gin_forward.1} parent=91 // pred_region
        %s1375 = smul.u32 %s35, 128
        // Predicated region
        $region113: #{gin_forward.1} parent=111 // pred_check
          %p1376 = pneg %p693
        $region114: #{gin_forward.1} parent=111 // pred_check_branch
          %1378 = sbr.rel (%p1376) target = $region116
        $region115: #{gin_forward.1} parent=111 // pred_region
          %v1379 = vld [vmem:[#allocation2] sm:$0xff]
          %v1380 = vld [vmem:[#allocation2 + $0x8] sm:$0xff]
          %v1381 = vld [vmem:[#allocation2 + $0x10] sm:$0xff]
          %v1382 = vld [vmem:[#allocation2 + $0x18] sm:$0xff]
          %v1383 = vld [vmem:[#allocation2 + $0x20] sm:$0xff]
          %v1384 = vld [vmem:[#allocation2 + $0x28] sm:$0xff]
          %v1385 = vld [vmem:[#allocation2 + $0x30] sm:$0xff]
          %v1386 = vld [vmem:[#allocation2 + $0x38] sm:$0xff]
          %v1387 = vld [vmem:[#allocation2 + $0x40] sm:$0xff]
          %v1388 = vld [vmem:[#allocation2 + $0x48] sm:$0xff]
          %v1389 = vld [vmem:[#allocation2 + $0x50] sm:$0xff]
          %v1390 = vld [vmem:[#allocation2 + $0x58] sm:$0xff]
          %v1391 = vld [vmem:[#allocation2 + $0x60] sm:$0xff]
          %v1392 = vld [vmem:[#allocation2 + $0x68] sm:$0xff]
          %v1393 = vld [vmem:[#allocation2 + $0x70] sm:$0xff]
          %v1394 = vld [vmem:[#allocation2 + $0x78] sm:$0xff]
          %v1395 = vpack.c.bf16 %v1380, %v1379
          %v1396 = vpack.c.bf16 %v1382, %v1381
          %v1397 = vpack.c.bf16 %v1384, %v1383
          %v1398 = vpack.c.bf16 %v1386, %v1385
          %v1399 = vpack.c.bf16 %v1388, %v1387
          %v1400 = vpack.c.bf16 %v1390, %v1389
          %v1401 = vpack.c.bf16 %v1392, %v1391
          %v1402 = vpack.c.bf16 %v1394, %v1393
          %v1403 = vld [vmem:[%s2] sm:$0xf]
          %v1404 = vld [vmem:[%s2 + $0x4] sm:$0xf]
          %v1405 = vld [vmem:[%s2 + $0x8] sm:$0xf]
          %v1406 = vld [vmem:[%s2 + $0xc] sm:$0xf]
          %v1407 = vld [vmem:[%s2 + $0x10] sm:$0xf]
          %v1408 = vld [vmem:[%s2 + $0x14] sm:$0xf]
          %v1409 = vld [vmem:[%s2 + $0x18] sm:$0xf]
          %v1410 = vld [vmem:[%s2 + $0x1c] sm:$0xf]
          %v1411 = vld [vmem:[%s2 + $0x20] sm:$0xf]
          %v1412 = vld [vmem:[%s2 + $0x24] sm:$0xf]
          %v1413 = vld [vmem:[%s2 + $0x28] sm:$0xf]
          %v1414 = vld [vmem:[%s2 + $0x2c] sm:$0xf]
          %v1415 = vld [vmem:[%s2 + $0x30] sm:$0xf]
          %v1416 = vld [vmem:[%s2 + $0x34] sm:$0xf]
          %v1417 = vld [vmem:[%s2 + $0x38] sm:$0xf]
          %v1418 = vld [vmem:[%s2 + $0x3c] sm:$0xf]
          %v1419 = vld [vmem:[%s3] sm:$0x1]
          %v1421 = vlaneseq
          %v1422 = vshrl.u32 %v1421, 7
          %v1423 = vsub.s32 0, %v1422
          %v1424 = vrot.slane %v1419, %v1423
          %v1442 = vunpack.c.l.b16 %v1403
          %v1443 = vunpack.c.l.b16 %v1404
          %v1444 = vunpack.c.l.b16 %v1405
          %v1445 = vunpack.c.l.b16 %v1406
          %v1446 = vunpack.c.l.b16 %v1407
          %v1447 = vunpack.c.l.b16 %v1408
          %v1448 = vunpack.c.l.b16 %v1409
          %v1449 = vunpack.c.l.b16 %v1410
          %v1450 = vunpack.c.l.b16 %v1411
          %v1451 = vunpack.c.l.b16 %v1412
          %v1452 = vunpack.c.l.b16 %v1413
          %v1453 = vunpack.c.l.b16 %v1414
          %v1454 = vunpack.c.l.b16 %v1415
          %v1455 = vunpack.c.l.b16 %v1416
          %v1456 = vunpack.c.l.b16 %v1417
          %v1457 = vunpack.c.l.b16 %v1418
          %v1458 = vpack.c.b16 %v1443, %v1442
          %v1459 = vpack.c.b16 %v1445, %v1444
          %v1460 = vpack.c.b16 %v1447, %v1446
          %v1461 = vpack.c.b16 %v1449, %v1448
          %v1462 = vpack.c.b16 %v1451, %v1450
          %v1463 = vpack.c.b16 %v1453, %v1452
          %v1464 = vpack.c.b16 %v1455, %v1454
          %v1465 = vpack.c.b16 %v1457, %v1456
          %1474 = vmatprep.subr.bf16.mxu0 0
          %1475 = vmatpush1.bf16.msra.mxu0 %v1458
          %1476 = vmatprep.subr.bf16.mxu0 0
          %1477 = vmatpush1.bf16.msra.mxu0 %v1459
          %1478 = vmatprep.subr.bf16.mxu0 0
          %1479 = vmatpush1.bf16.msra.mxu0 %v1460
          %1480 = vmatprep.subr.bf16.mxu0 0
          %1481 = vmatpush1.bf16.msra.mxu0 %v1461
          %1482 = vmatprep.subr.bf16.mxu0 0
          %1483 = vmatpush1.bf16.msra.mxu0 %v1462
          %1484 = vmatprep.subr.bf16.mxu0 0
          %1485 = vmatpush1.bf16.msra.mxu0 %v1463
          %1486 = vmatprep.subr.bf16.mxu0 0
          %1487 = vmatpush1.bf16.msra.mxu0 %v1464
          %1488 = vmatprep.subr.bf16.mxu0 0
          %1489 = vmatpush1.bf16.msra.mxu0 %v1465
          %1490 = vmatprep.subr.bf16.mxu0 0
          %1491 = vmatpush1.bf16.msra.mxu0 0
          %1492 = vmatprep.subr.bf16.mxu0 0
          %1493 = vmatpush1.bf16.msra.mxu0 0
          %1494 = vmatprep.subr.bf16.mxu0 0
          %1495 = vmatpush1.bf16.msra.mxu0 0
          %1496 = vmatprep.subr.bf16.mxu0 0
          %1497 = vmatpush1.bf16.msra.mxu0 0
          %1498 = vmatprep.subr.bf16.mxu0 0
          %1499 = vmatpush1.bf16.msra.mxu0 0
          %1500 = vmatprep.subr.bf16.mxu0 0
          %1501 = vmatpush1.bf16.msra.mxu0 0
          %1502 = vmatprep.subr.bf16.mxu0 0
          %1503 = vmatpush1.bf16.msra.mxu0 0
          %1504 = vmatprep.subr.bf16.mxu0 0
          %1505 = vmatpush1.bf16.msra.mxu0 0
          %1506 = vmatprep.mubr.bf16.mxu0 0
          %1507 = vmatmul.mubr.bf16.gmra.mrb[0].mxu0 %v1395
          %v1508 = vpop.f32.mrb[0].mxu0
          %v1509 = vadd.f32 %v1424, %v1508
          %v1510 = vpop.f32.mrb[0].mxu0
          %v1511 = vpop.f32.mrb[0].mxu0
          %v1512 = vadd.f32 %v1424, %v1511
          %v1513 = vpop.f32.mrb[0].mxu0
          %1514 = vmatprep.mubr.bf16.mxu0 0
          %1515 = vmatmul.mubr.bf16.gmra.mrb[0].mxu0 %v1396
          %v1516 = vpop.f32.mrb[0].mxu0
          %v1517 = vadd.f32 %v1424, %v1516
          %v1518 = vpop.f32.mrb[0].mxu0
          %v1519 = vpop.f32.mrb[0].mxu0
          %v1520 = vadd.f32 %v1424, %v1519
          %v1521 = vpop.f32.mrb[0].mxu0
          %1522 = vmatprep.mubr.bf16.mxu0 0
          %1523 = vmatmul.mubr.bf16.gmra.mrb[0].mxu0 %v1397
          %v1524 = vpop.f32.mrb[0].mxu0
          %v1525 = vadd.f32 %v1424, %v1524
          %v1526 = vpop.f32.mrb[0].mxu0
          %v1527 = vpop.f32.mrb[0].mxu0
          %v1528 = vadd.f32 %v1424, %v1527
          %v1529 = vpop.f32.mrb[0].mxu0
          %1530 = vmatprep.mubr.bf16.mxu0 0
          %1531 = vmatmul.mubr.bf16.gmra.mrb[0].mxu0 %v1398
          %v1532 = vpop.f32.mrb[0].mxu0
          %v1533 = vadd.f32 %v1424, %v1532
          %v1534 = vpop.f32.mrb[0].mxu0
          %v1535 = vpop.f32.mrb[0].mxu0
          %v1536 = vadd.f32 %v1424, %v1535
          %v1537 = vpop.f32.mrb[0].mxu0
          %1538 = vmatprep.mubr.bf16.mxu0 0
          %1539 = vmatmul.mubr.bf16.gmra.mrb[0].mxu0 %v1399
          %v1540 = vpop.f32.mrb[0].mxu0
          %v1541 = vadd.f32 %v1424, %v1540
          %v1542 = vpop.f32.mrb[0].mxu0
          %v1543 = vpop.f32.mrb[0].mxu0
          %v1544 = vadd.f32 %v1424, %v1543
          %v1545 = vpop.f32.mrb[0].mxu0
          %1546 = vmatprep.mubr.bf16.mxu0 0
          %1547 = vmatmul.mubr.bf16.gmra.mrb[0].mxu0 %v1400
          %v1548 = vpop.f32.mrb[0].mxu0
          %v1549 = vadd.f32 %v1424, %v1548
          %v1550 = vpop.f32.mrb[0].mxu0
          %v1551 = vpop.f32.mrb[0].mxu0
          %v1552 = vadd.f32 %v1424, %v1551
          %v1553 = vpop.f32.mrb[0].mxu0
          %1554 = vmatprep.mubr.bf16.mxu0 0
          %1555 = vmatmul.mubr.bf16.gmra.mrb[0].mxu0 %v1401
          %v1556 = vpop.f32.mrb[0].mxu0
          %v1557 = vadd.f32 %v1424, %v1556
          %v1558 = vpop.f32.mrb[0].mxu0
          %v1559 = vpop.f32.mrb[0].mxu0
          %v1560 = vadd.f32 %v1424, %v1559
          %v1561 = vpop.f32.mrb[0].mxu0
          %1562 = vmatprep.mubr.bf16.mxu0 0
          %1563 = vmatmul.mubr.bf16.gmra.mrb[0].mxu0 %v1402
          %v1564 = vpop.f32.mrb[0].mxu0
          %v1565 = vadd.f32 %v1424, %v1564
          %v1566 = vpop.f32.mrb[0].mxu0
          %v1567 = vpop.f32.mrb[0].mxu0
          %v1568 = vadd.f32 %v1424, %v1567
          %v1569 = vpop.f32.mrb[0].mxu0
          %1570 = vdwg.mxu0
          %v1571 = vmax.f32 %v1509, 0.0
          %v1572 = vmax.f32 %v1512, 0.0
          %v1573 = vmax.f32 %v1517, 0.0
          %v1574 = vmax.f32 %v1520, 0.0
          %v1575 = vmax.f32 %v1525, 0.0
          %v1576 = vmax.f32 %v1528, 0.0
          %v1577 = vmax.f32 %v1533, 0.0
          %v1578 = vmax.f32 %v1536, 0.0
          %v1579 = vmax.f32 %v1541, 0.0
          %v1580 = vmax.f32 %v1544, 0.0
          %v1581 = vmax.f32 %v1549, 0.0
          %v1582 = vmax.f32 %v1552, 0.0
          %v1583 = vmax.f32 %v1557, 0.0
          %v1584 = vmax.f32 %v1560, 0.0
          %v1585 = vmax.f32 %v1565, 0.0
          %v1586 = vmax.f32 %v1568, 0.0
          %v1587 = vpack.c.bf16 %v1572, %v1571
          %v1588 = vpack.c.bf16 %v1574, %v1573
          %v1589 = vpack.c.bf16 %v1576, %v1575
          %v1590 = vpack.c.bf16 %v1578, %v1577
          %v1591 = vpack.c.bf16 %v1580, %v1579
          %v1592 = vpack.c.bf16 %v1582, %v1581
          %v1593 = vpack.c.bf16 %v1584, %v1583
          %v1594 = vpack.c.bf16 %v1586, %v1585
          %v1595 = vld [vmem:[%s4] sm:$0xf]
          %v1596 = vld [vmem:[%s4 + $0x4] sm:$0xf]
          %v1597 = vld [vmem:[%s4 + $0x8] sm:$0xf]
          %v1598 = vld [vmem:[%s4 + $0xc] sm:$0xf]
          %v1599 = vld [vmem:[%s4 + $0x10] sm:$0xf]
          %v1600 = vld [vmem:[%s4 + $0x14] sm:$0xf]
          %v1601 = vld [vmem:[%s4 + $0x18] sm:$0xf]
          %v1602 = vld [vmem:[%s4 + $0x1c] sm:$0xf]
          %v1603 = vld [vmem:[%s4 + $0x20] sm:$0xf]
          %v1604 = vld [vmem:[%s4 + $0x24] sm:$0xf]
          %v1605 = vld [vmem:[%s4 + $0x28] sm:$0xf]
          %v1606 = vld [vmem:[%s4 + $0x2c] sm:$0xf]
          %v1607 = vld [vmem:[%s4 + $0x30] sm:$0xf]
          %v1608 = vld [vmem:[%s4 + $0x34] sm:$0xf]
          %v1609 = vld [vmem:[%s4 + $0x38] sm:$0xf]
          %v1610 = vld [vmem:[%s4 + $0x3c] sm:$0xf]
          %v1611 = vld [vmem:[%s5] sm:$0x1]
          %v1613 = vlaneseq
          %v1614 = vshrl.u32 %v1613, 7
          %v1615 = vsub.s32 0, %v1614
          %v1616 = vrot.slane %v1611, %v1615
          %v1634 = vunpack.c.l.b16 %v1595
          %v1635 = vunpack.c.l.b16 %v1596
          %v1636 = vunpack.c.l.b16 %v1597
          %v1637 = vunpack.c.l.b16 %v1598
          %v1638 = vunpack.c.l.b16 %v1599
          %v1639 = vunpack.c.l.b16 %v1600
          %v1640 = vunpack.c.l.b16 %v1601
          %v1641 = vunpack.c.l.b16 %v1602
          %v1642 = vunpack.c.l.b16 %v1603
          %v1643 = vunpack.c.l.b16 %v1604
          %v1644 = vunpack.c.l.b16 %v1605
          %v1645 = vunpack.c.l.b16 %v1606
          %v1646 = vunpack.c.l.b16 %v1607
          %v1647 = vunpack.c.l.b16 %v1608
          %v1648 = vunpack.c.l.b16 %v1609
          %v1649 = vunpack.c.l.b16 %v1610
          %v1650 = vpack.c.b16 %v1635, %v1634
          %v1651 = vpack.c.b16 %v1637, %v1636
          %v1652 = vpack.c.b16 %v1639, %v1638
          %v1653 = vpack.c.b16 %v1641, %v1640
          %v1654 = vpack.c.b16 %v1643, %v1642
          %v1655 = vpack.c.b16 %v1645, %v1644
          %v1656 = vpack.c.b16 %v1647, %v1646
          %v1657 = vpack.c.b16 %v1649, %v1648
          %1666 = vmatprep.subr.bf16.mxu0 0
          %1667 = vmatpush1.bf16.msra.mxu0 %v1650
          %1668 = vmatprep.subr.bf16.mxu0 0
          %1669 = vmatpush1.bf16.msra.mxu0 %v1651
          %1670 = vmatprep.subr.bf16.mxu0 0
          %1671 = vmatpush1.bf16.msra.mxu0 %v1652
          %1672 = vmatprep.subr.bf16.mxu0 0
          %1673 = vmatpush1.bf16.msra.mxu0 %v1653
          %1674 = vmatprep.subr.bf16.mxu0 0
          %1675 = vmatpush1.bf16.msra.mxu0 %v1654
          %1676 = vmatprep.subr.bf16.mxu0 0
          %1677 = vmatpush1.bf16.msra.mxu0 %v1655
          %1678 = vmatprep.subr.bf16.mxu0 0
          %1679 = vmatpush1.bf16.msra.mxu0 %v1656
          %1680 = vmatprep.subr.bf16.mxu0 0
          %1681 = vmatpush1.bf16.msra.mxu0 %v1657
          %1682 = vmatprep.subr.bf16.mxu0 0
          %1683 = vmatpush1.bf16.msra.mxu0 0
          %1684 = vmatprep.subr.bf16.mxu0 0
          %1685 = vmatpush1.bf16.msra.mxu0 0
          %1686 = vmatprep.subr.bf16.mxu0 0
          %1687 = vmatpush1.bf16.msra.mxu0 0
          %1688 = vmatprep.subr.bf16.mxu0 0
          %1689 = vmatpush1.bf16.msra.mxu0 0
          %1690 = vmatprep.subr.bf16.mxu0 0
          %1691 = vmatpush1.bf16.msra.mxu0 0
          %1692 = vmatprep.subr.bf16.mxu0 0
          %1693 = vmatpush1.bf16.msra.mxu0 0
          %1694 = vmatprep.subr.bf16.mxu0 0
          %1695 = vmatpush1.bf16.msra.mxu0 0
          %1696 = vmatprep.subr.bf16.mxu0 0
          %1697 = vmatpush1.bf16.msra.mxu0 0
          %1698 = vmatprep.mubr.bf16.mxu0 0
          %1699 = vmatmul.mubr.bf16.gmra.mrb[0].mxu0 %v1587
          %v1700 = vpop.f32.mrb[0].mxu0
          %v1701 = vadd.f32 %v1616, %v1700
          %v1702 = vpop.f32.mrb[0].mxu0
          %v1703 = vpop.f32.mrb[0].mxu0
          %v1704 = vadd.f32 %v1616, %v1703
          %v1705 = vpop.f32.mrb[0].mxu0
          %1706 = vmatprep.mubr.bf16.mxu0 0
          %1707 = vmatmul.mubr.bf16.gmra.mrb[0].mxu0 %v1588
          %v1708 = vpop.f32.mrb[0].mxu0
          %v1709 = vadd.f32 %v1616, %v1708
          %v1710 = vpop.f32.mrb[0].mxu0
          %v1711 = vpop.f32.mrb[0].mxu0
          %v1712 = vadd.f32 %v1616, %v1711
          %v1713 = vpop.f32.mrb[0].mxu0
          %1714 = vmatprep.mubr.bf16.mxu0 0
          %1715 = vmatmul.mubr.bf16.gmra.mrb[0].mxu0 %v1589
          %v1716 = vpop.f32.mrb[0].mxu0
          %v1717 = vadd.f32 %v1616, %v1716
          %v1718 = vpop.f32.mrb[0].mxu0
          %v1719 = vpop.f32.mrb[0].mxu0
          %v1720 = vadd.f32 %v1616, %v1719
          %v1721 = vpop.f32.mrb[0].mxu0
          %1722 = vmatprep.mubr.bf16.mxu0 0
          %1723 = vmatmul.mubr.bf16.gmra.mrb[0].mxu0 %v1590
          %v1724 = vpop.f32.mrb[0].mxu0
          %v1725 = vadd.f32 %v1616, %v1724
          %v1726 = vpop.f32.mrb[0].mxu0
          %v1727 = vpop.f32.mrb[0].mxu0
          %v1728 = vadd.f32 %v1616, %v1727
          %v1729 = vpop.f32.mrb[0].mxu0
          %1730 = vmatprep.mubr.bf16.mxu0 0
          %1731 = vmatmul.mubr.bf16.gmra.mrb[0].mxu0 %v1591
          %v1732 = vpop.f32.mrb[0].mxu0
          %v1733 = vadd.f32 %v1616, %v1732
          %v1734 = vpop.f32.mrb[0].mxu0
          %v1735 = vpop.f32.mrb[0].mxu0
          %v1736 = vadd.f32 %v1616, %v1735
          %v1737 = vpop.f32.mrb[0].mxu0
          %1738 = vmatprep.mubr.bf16.mxu0 0
          %1739 = vmatmul.mubr.bf16.gmra.mrb[0].mxu0 %v1592
          %v1740 = vpop.f32.mrb[0].mxu0
          %v1741 = vadd.f32 %v1616, %v1740
          %v1742 = vpop.f32.mrb[0].mxu0
          %v1743 = vpop.f32.mrb[0].mxu0
          %v1744 = vadd.f32 %v1616, %v1743
          %v1745 = vpop.f32.mrb[0].mxu0
          %1746 = vmatprep.mubr.bf16.mxu0 0
          %1747 = vmatmul.mubr.bf16.gmra.mrb[0].mxu0 %v1593
          %v1748 = vpop.f32.mrb[0].mxu0
          %v1749 = vadd.f32 %v1616, %v1748
          %v1750 = vpop.f32.mrb[0].mxu0
          %v1751 = vpop.f32.mrb[0].mxu0
          %v1752 = vadd.f32 %v1616, %v1751
          %v1753 = vpop.f32.mrb[0].mxu0
          %1754 = vmatprep.mubr.bf16.mxu0 0
          %1755 = vmatmul.mubr.bf16.gmra.mrb[0].mxu0 %v1594
          %v1756 = vpop.f32.mrb[0].mxu0
          %v1757 = vadd.f32 %v1616, %v1756
          %v1758 = vpop.f32.mrb[0].mxu0
          %v1759 = vpop.f32.mrb[0].mxu0
          %v1760 = vadd.f32 %v1616, %v1759
          %v1761 = vpop.f32.mrb[0].mxu0
          %1762 = vdwg.mxu0
          %v1763 = vmax.f32 %v1701, 0.0
          %v1764 = vmax.f32 %v1704, 0.0
          %v1765 = vmax.f32 %v1709, 0.0
          %v1766 = vmax.f32 %v1712, 0.0
          %v1767 = vmax.f32 %v1717, 0.0
          %v1768 = vmax.f32 %v1720, 0.0
          %v1769 = vmax.f32 %v1725, 0.0
          %v1770 = vmax.f32 %v1728, 0.0
          %v1771 = vmax.f32 %v1733, 0.0
          %v1772 = vmax.f32 %v1736, 0.0
          %v1773 = vmax.f32 %v1741, 0.0
          %v1774 = vmax.f32 %v1744, 0.0
          %v1775 = vmax.f32 %v1749, 0.0
          %v1776 = vmax.f32 %v1752, 0.0
          %v1777 = vmax.f32 %v1757, 0.0
          %v1778 = vmax.f32 %v1760, 0.0
          %v1779 = vpack.c.bf16 %v1764, %v1763
          %v1780 = vpack.c.bf16 %v1766, %v1765
          %v1781 = vpack.c.bf16 %v1768, %v1767
          %v1782 = vpack.c.bf16 %v1770, %v1769
          %v1783 = vpack.c.bf16 %v1772, %v1771
          %v1784 = vpack.c.bf16 %v1774, %v1773
          %v1785 = vpack.c.bf16 %v1776, %v1775
          %v1786 = vpack.c.bf16 %v1778, %v1777
          %s1787 = sshra.s32 %s1375, 4
          %s1788 = sand.u32 %s1375, 15
          %s1789 = smul.addr %s1787, 8
          %s1790 = scalar_lea.vmem [#allocation3], %s1789
          %1791 = vst [vmem:[%s1790] sm:$0xff] %v1779
          %1792 = vst [vmem:[%s1790 + $0x8] sm:$0xff] %v1780
          %1793 = vst [vmem:[%s1790 + $0x10] sm:$0xff] %v1781
          %1794 = vst [vmem:[%s1790 + $0x18] sm:$0xff] %v1782
          %1795 = vst [vmem:[%s1790 + $0x20] sm:$0xff] %v1783
          %1796 = vst [vmem:[%s1790 + $0x28] sm:$0xff] %v1784
          %1797 = vst [vmem:[%s1790 + $0x30] sm:$0xff] %v1785
          %1798 = vst [vmem:[%s1790 + $0x38] sm:$0xff] %v1786
        $region116: #{gin_forward.1} parent=111 // pred_fallthru
          _
        // Predicated region
        $region117: #{gin_forward.1} parent=111 // pred_check
          %p1799 = pneg %p954
        $region118: #{gin_forward.1} parent=111 // pred_check_branch
          %1801 = sbr.rel (%p1799) target = $region120
        $region119: #{gin_forward.1} parent=111 // pred_region
          %v1802 = vld [vmem:[#allocation2] sm:$0xff]
          %v1803 = vld [vmem:[#allocation2 + $0x8] sm:$0xff]
          %v1804 = vld [vmem:[#allocation2 + $0x10] sm:$0xff]
          %v1805 = vld [vmem:[#allocation2 + $0x18] sm:$0xff]
          %v1806 = vld [vmem:[#allocation2 + $0x20] sm:$0xff]
          %v1807 = vld [vmem:[#allocation2 + $0x28] sm:$0xff]
          %v1808 = vld [vmem:[#allocation2 + $0x30] sm:$0xff]
          %v1809 = vld [vmem:[#allocation2 + $0x38] sm:$0xff]
          %v1810 = vld [vmem:[#allocation2 + $0x40] sm:$0xff]
          %v1811 = vld [vmem:[#allocation2 + $0x48] sm:$0xff]
          %v1812 = vld [vmem:[#allocation2 + $0x50] sm:$0xff]
          %v1813 = vld [vmem:[#allocation2 + $0x58] sm:$0xff]
          %v1814 = vld [vmem:[#allocation2 + $0x60] sm:$0xff]
          %v1815 = vld [vmem:[#allocation2 + $0x68] sm:$0xff]
          %v1816 = vld [vmem:[#allocation2 + $0x70] sm:$0xff]
          %v1817 = vld [vmem:[#allocation2 + $0x78] sm:$0xff]
          %v1818 = vpack.c.bf16 %v1803, %v1802
          %v1819 = vpack.c.bf16 %v1805, %v1804
          %v1820 = vpack.c.bf16 %v1807, %v1806
          %v1821 = vpack.c.bf16 %v1809, %v1808
          %v1822 = vpack.c.bf16 %v1811, %v1810
          %v1823 = vpack.c.bf16 %v1813, %v1812
          %v1824 = vpack.c.bf16 %v1815, %v1814
          %v1825 = vpack.c.bf16 %v1817, %v1816
          %v1826 = vld [vmem:[%s6] sm:$0xf]
          %v1827 = vld [vmem:[%s6 + $0x4] sm:$0xf]
          %v1828 = vld [vmem:[%s6 + $0x8] sm:$0xf]
          %v1829 = vld [vmem:[%s6 + $0xc] sm:$0xf]
          %v1830 = vld [vmem:[%s6 + $0x10] sm:$0xf]
          %v1831 = vld [vmem:[%s6 + $0x14] sm:$0xf]
          %v1832 = vld [vmem:[%s6 + $0x18] sm:$0xf]
          %v1833 = vld [vmem:[%s6 + $0x1c] sm:$0xf]
          %v1834 = vld [vmem:[%s6 + $0x20] sm:$0xf]
          %v1835 = vld [vmem:[%s6 + $0x24] sm:$0xf]
          %v1836 = vld [vmem:[%s6 + $0x28] sm:$0xf]
          %v1837 = vld [vmem:[%s6 + $0x2c] sm:$0xf]
          %v1838 = vld [vmem:[%s6 + $0x30] sm:$0xf]
          %v1839 = vld [vmem:[%s6 + $0x34] sm:$0xf]
          %v1840 = vld [vmem:[%s6 + $0x38] sm:$0xf]
          %v1841 = vld [vmem:[%s6 + $0x3c] sm:$0xf]
          %v1842 = vld [vmem:[%s7] sm:$0x1]
          %v1844 = vlaneseq
          %v1845 = vshrl.u32 %v1844, 7
          %v1846 = vsub.s32 0, %v1845
          %v1847 = vrot.slane %v1842, %v1846
          %v1865 = vunpack.c.l.b16 %v1826
          %v1866 = vunpack.c.l.b16 %v1827
          %v1867 = vunpack.c.l.b16 %v1828
          %v1868 = vunpack.c.l.b16 %v1829
          %v1869 = vunpack.c.l.b16 %v1830
          %v1870 = vunpack.c.l.b16 %v1831
          %v1871 = vunpack.c.l.b16 %v1832
          %v1872 = vunpack.c.l.b16 %v1833
          %v1873 = vunpack.c.l.b16 %v1834
          %v1874 = vunpack.c.l.b16 %v1835
          %v1875 = vunpack.c.l.b16 %v1836
          %v1876 = vunpack.c.l.b16 %v1837
          %v1877 = vunpack.c.l.b16 %v1838
          %v1878 = vunpack.c.l.b16 %v1839
          %v1879 = vunpack.c.l.b16 %v1840
          %v1880 = vunpack.c.l.b16 %v1841
          %v1881 = vpack.c.b16 %v1866, %v1865
          %v1882 = vpack.c.b16 %v1868, %v1867
          %v1883 = vpack.c.b16 %v1870, %v1869
          %v1884 = vpack.c.b16 %v1872, %v1871
          %v1885 = vpack.c.b16 %v1874, %v1873
          %v1886 = vpack.c.b16 %v1876, %v1875
          %v1887 = vpack.c.b16 %v1878, %v1877
          %v1888 = vpack.c.b16 %v1880, %v1879
          %1897 = vmatprep.subr.bf16.mxu0 0
          %1898 = vmatpush1.bf16.msra.mxu0 %v1881
          %1899 = vmatprep.subr.bf16.mxu0 0
          %1900 = vmatpush1.bf16.msra.mxu0 %v1882
          %1901 = vmatprep.subr.bf16.mxu0 0
          %1902 = vmatpush1.bf16.msra.mxu0 %v1883
          %1903 = vmatprep.subr.bf16.mxu0 0
          %1904 = vmatpush1.bf16.msra.mxu0 %v1884
          %1905 = vmatprep.subr.bf16.mxu0 0
          %1906 = vmatpush1.bf16.msra.mxu0 %v1885
          %1907 = vmatprep.subr.bf16.mxu0 0
          %1908 = vmatpush1.bf16.msra.mxu0 %v1886
          %1909 = vmatprep.subr.bf16.mxu0 0
          %1910 = vmatpush1.bf16.msra.mxu0 %v1887
          %1911 = vmatprep.subr.bf16.mxu0 0
          %1912 = vmatpush1.bf16.msra.mxu0 %v1888
          %1913 = vmatprep.subr.bf16.mxu0 0
          %1914 = vmatpush1.bf16.msra.mxu0 0
          %1915 = vmatprep.subr.bf16.mxu0 0
          %1916 = vmatpush1.bf16.msra.mxu0 0
          %1917 = vmatprep.subr.bf16.mxu0 0
          %1918 = vmatpush1.bf16.msra.mxu0 0
          %1919 = vmatprep.subr.bf16.mxu0 0
          %1920 = vmatpush1.bf16.msra.mxu0 0
          %1921 = vmatprep.subr.bf16.mxu0 0
          %1922 = vmatpush1.bf16.msra.mxu0 0
          %1923 = vmatprep.subr.bf16.mxu0 0
          %1924 = vmatpush1.bf16.msra.mxu0 0
          %1925 = vmatprep.subr.bf16.mxu0 0
          %1926 = vmatpush1.bf16.msra.mxu0 0
          %1927 = vmatprep.subr.bf16.mxu0 0
          %1928 = vmatpush1.bf16.msra.mxu0 0
          %1929 = vmatprep.mubr.bf16.mxu0 0
          %1930 = vmatmul.mubr.bf16.gmra.mrb[0].mxu0 %v1818
          %v1931 = vpop.f32.mrb[0].mxu0
          %v1932 = vadd.f32 %v1847, %v1931
          %v1933 = vpop.f32.mrb[0].mxu0
          %v1934 = vpop.f32.mrb[0].mxu0
          %v1935 = vadd.f32 %v1847, %v1934
          %v1936 = vpop.f32.mrb[0].mxu0
          %1937 = vmatprep.mubr.bf16.mxu0 0
          %1938 = vmatmul.mubr.bf16.gmra.mrb[0].mxu0 %v1819
          %v1939 = vpop.f32.mrb[0].mxu0
          %v1940 = vadd.f32 %v1847, %v1939
          %v1941 = vpop.f32.mrb[0].mxu0
          %v1942 = vpop.f32.mrb[0].mxu0
          %v1943 = vadd.f32 %v1847, %v1942
          %v1944 = vpop.f32.mrb[0].mxu0
          %1945 = vmatprep.mubr.bf16.mxu0 0
          %1946 = vmatmul.mubr.bf16.gmra.mrb[0].mxu0 %v1820
          %v1947 = vpop.f32.mrb[0].mxu0
          %v1948 = vadd.f32 %v1847, %v1947
          %v1949 = vpop.f32.mrb[0].mxu0
          %v1950 = vpop.f32.mrb[0].mxu0
          %v1951 = vadd.f32 %v1847, %v1950
          %v1952 = vpop.f32.mrb[0].mxu0
          %1953 = vmatprep.mubr.bf16.mxu0 0
          %1954 = vmatmul.mubr.bf16.gmra.mrb[0].mxu0 %v1821
          %v1955 = vpop.f32.mrb[0].mxu0
          %v1956 = vadd.f32 %v1847, %v1955
          %v1957 = vpop.f32.mrb[0].mxu0
          %v1958 = vpop.f32.mrb[0].mxu0
          %v1959 = vadd.f32 %v1847, %v1958
          %v1960 = vpop.f32.mrb[0].mxu0
          %1961 = vmatprep.mubr.bf16.mxu0 0
          %1962 = vmatmul.mubr.bf16.gmra.mrb[0].mxu0 %v1822
          %v1963 = vpop.f32.mrb[0].mxu0
          %v1964 = vadd.f32 %v1847, %v1963
          %v1965 = vpop.f32.mrb[0].mxu0
          %v1966 = vpop.f32.mrb[0].mxu0
          %v1967 = vadd.f32 %v1847, %v1966
          %v1968 = vpop.f32.mrb[0].mxu0
          %1969 = vmatprep.mubr.bf16.mxu0 0
          %1970 = vmatmul.mubr.bf16.gmra.mrb[0].mxu0 %v1823
          %v1971 = vpop.f32.mrb[0].mxu0
          %v1972 = vadd.f32 %v1847, %v1971
          %v1973 = vpop.f32.mrb[0].mxu0
          %v1974 = vpop.f32.mrb[0].mxu0
          %v1975 = vadd.f32 %v1847, %v1974
          %v1976 = vpop.f32.mrb[0].mxu0
          %1977 = vmatprep.mubr.bf16.mxu0 0
          %1978 = vmatmul.mubr.bf16.gmra.mrb[0].mxu0 %v1824
          %v1979 = vpop.f32.mrb[0].mxu0
          %v1980 = vadd.f32 %v1847, %v1979
          %v1981 = vpop.f32.mrb[0].mxu0
          %v1982 = vpop.f32.mrb[0].mxu0
          %v1983 = vadd.f32 %v1847, %v1982
          %v1984 = vpop.f32.mrb[0].mxu0
          %1985 = vmatprep.mubr.bf16.mxu0 0
          %1986 = vmatmul.mubr.bf16.gmra.mrb[0].mxu0 %v1825
          %v1987 = vpop.f32.mrb[0].mxu0
          %v1988 = vadd.f32 %v1847, %v1987
          %v1989 = vpop.f32.mrb[0].mxu0
          %v1990 = vpop.f32.mrb[0].mxu0
          %v1991 = vadd.f32 %v1847, %v1990
          %v1992 = vpop.f32.mrb[0].mxu0
          %1993 = vdwg.mxu0
          %v1994 = vmax.f32 %v1932, 0.0
          %v1995 = vmax.f32 %v1935, 0.0
          %v1996 = vmax.f32 %v1940, 0.0
          %v1997 = vmax.f32 %v1943, 0.0
          %v1998 = vmax.f32 %v1948, 0.0
          %v1999 = vmax.f32 %v1951, 0.0
          %v2000 = vmax.f32 %v1956, 0.0
          %v2001 = vmax.f32 %v1959, 0.0
          %v2002 = vmax.f32 %v1964, 0.0
          %v2003 = vmax.f32 %v1967, 0.0
          %v2004 = vmax.f32 %v1972, 0.0
          %v2005 = vmax.f32 %v1975, 0.0
          %v2006 = vmax.f32 %v1980, 0.0
          %v2007 = vmax.f32 %v1983, 0.0
          %v2008 = vmax.f32 %v1988, 0.0
          %v2009 = vmax.f32 %v1991, 0.0
          %v2010 = vpack.c.bf16 %v1995, %v1994
          %v2011 = vpack.c.bf16 %v1997, %v1996
          %v2012 = vpack.c.bf16 %v1999, %v1998
          %v2013 = vpack.c.bf16 %v2001, %v2000
          %v2014 = vpack.c.bf16 %v2003, %v2002
          %v2015 = vpack.c.bf16 %v2005, %v2004
          %v2016 = vpack.c.bf16 %v2007, %v2006
          %v2017 = vpack.c.bf16 %v2009, %v2008
          %v2018 = vld [vmem:[%s8] sm:$0xf]
          %v2019 = vld [vmem:[%s8 + $0x4] sm:$0xf]
          %v2020 = vld [vmem:[%s8 + $0x8] sm:$0xf]
          %v2021 = vld [vmem:[%s8 + $0xc] sm:$0xf]
          %v2022 = vld [vmem:[%s8 + $0x10] sm:$0xf]
          %v2023 = vld [vmem:[%s8 + $0x14] sm:$0xf]
          %v2024 = vld [vmem:[%s8 + $0x18] sm:$0xf]
          %v2025 = vld [vmem:[%s8 + $0x1c] sm:$0xf]
          %v2026 = vld [vmem:[%s8 + $0x20] sm:$0xf]
          %v2027 = vld [vmem:[%s8 + $0x24] sm:$0xf]
          %v2028 = vld [vmem:[%s8 + $0x28] sm:$0xf]
          %v2029 = vld [vmem:[%s8 + $0x2c] sm:$0xf]
          %v2030 = vld [vmem:[%s8 + $0x30] sm:$0xf]
          %v2031 = vld [vmem:[%s8 + $0x34] sm:$0xf]
          %v2032 = vld [vmem:[%s8 + $0x38] sm:$0xf]
          %v2033 = vld [vmem:[%s8 + $0x3c] sm:$0xf]
          %v2034 = vld [vmem:[%s9] sm:$0x1]
          %v2036 = vlaneseq
          %v2037 = vshrl.u32 %v2036, 7
          %v2038 = vsub.s32 0, %v2037
          %v2039 = vrot.slane %v2034, %v2038
          %v2057 = vunpack.c.l.b16 %v2018
          %v2058 = vunpack.c.l.b16 %v2019
          %v2059 = vunpack.c.l.b16 %v2020
          %v2060 = vunpack.c.l.b16 %v2021
          %v2061 = vunpack.c.l.b16 %v2022
          %v2062 = vunpack.c.l.b16 %v2023
          %v2063 = vunpack.c.l.b16 %v2024
          %v2064 = vunpack.c.l.b16 %v2025
          %v2065 = vunpack.c.l.b16 %v2026
          %v2066 = vunpack.c.l.b16 %v2027
          %v2067 = vunpack.c.l.b16 %v2028
          %v2068 = vunpack.c.l.b16 %v2029
          %v2069 = vunpack.c.l.b16 %v2030
          %v2070 = vunpack.c.l.b16 %v2031
          %v2071 = vunpack.c.l.b16 %v2032
          %v2072 = vunpack.c.l.b16 %v2033
          %v2073 = vpack.c.b16 %v2058, %v2057
          %v2074 = vpack.c.b16 %v2060, %v2059
          %v2075 = vpack.c.b16 %v2062, %v2061
          %v2076 = vpack.c.b16 %v2064, %v2063
          %v2077 = vpack.c.b16 %v2066, %v2065
          %v2078 = vpack.c.b16 %v2068, %v2067
          %v2079 = vpack.c.b16 %v2070, %v2069
          %v2080 = vpack.c.b16 %v2072, %v2071
          %2089 = vmatprep.subr.bf16.mxu0 0
          %2090 = vmatpush1.bf16.msra.mxu0 %v2073
          %2091 = vmatprep.subr.bf16.mxu0 0
          %2092 = vmatpush1.bf16.msra.mxu0 %v2074
          %2093 = vmatprep.subr.bf16.mxu0 0
          %2094 = vmatpush1.bf16.msra.mxu0 %v2075
          %2095 = vmatprep.subr.bf16.mxu0 0
          %2096 = vmatpush1.bf16.msra.mxu0 %v2076
          %2097 = vmatprep.subr.bf16.mxu0 0
          %2098 = vmatpush1.bf16.msra.mxu0 %v2077
          %2099 = vmatprep.subr.bf16.mxu0 0
          %2100 = vmatpush1.bf16.msra.mxu0 %v2078
          %2101 = vmatprep.subr.bf16.mxu0 0
          %2102 = vmatpush1.bf16.msra.mxu0 %v2079
          %2103 = vmatprep.subr.bf16.mxu0 0
          %2104 = vmatpush1.bf16.msra.mxu0 %v2080
          %2105 = vmatprep.subr.bf16.mxu0 0
          %2106 = vmatpush1.bf16.msra.mxu0 0
          %2107 = vmatprep.subr.bf16.mxu0 0
          %2108 = vmatpush1.bf16.msra.mxu0 0
          %2109 = vmatprep.subr.bf16.mxu0 0
          %2110 = vmatpush1.bf16.msra.mxu0 0
          %2111 = vmatprep.subr.bf16.mxu0 0
          %2112 = vmatpush1.bf16.msra.mxu0 0
          %2113 = vmatprep.subr.bf16.mxu0 0
          %2114 = vmatpush1.bf16.msra.mxu0 0
          %2115 = vmatprep.subr.bf16.mxu0 0
          %2116 = vmatpush1.bf16.msra.mxu0 0
          %2117 = vmatprep.subr.bf16.mxu0 0
          %2118 = vmatpush1.bf16.msra.mxu0 0
          %2119 = vmatprep.subr.bf16.mxu0 0
          %2120 = vmatpush1.bf16.msra.mxu0 0
          %2121 = vmatprep.mubr.bf16.mxu0 0
          %2122 = vmatmul.mubr.bf16.gmra.mrb[0].mxu0 %v2010
          %v2123 = vpop.f32.mrb[0].mxu0
          %v2124 = vadd.f32 %v2039, %v2123
          %v2125 = vpop.f32.mrb[0].mxu0
          %v2126 = vpop.f32.mrb[0].mxu0
          %v2127 = vadd.f32 %v2039, %v2126
          %v2128 = vpop.f32.mrb[0].mxu0
          %2129 = vmatprep.mubr.bf16.mxu0 0
          %2130 = vmatmul.mubr.bf16.gmra.mrb[0].mxu0 %v2011
          %v2131 = vpop.f32.mrb[0].mxu0
          %v2132 = vadd.f32 %v2039, %v2131
          %v2133 = vpop.f32.mrb[0].mxu0
          %v2134 = vpop.f32.mrb[0].mxu0
          %v2135 = vadd.f32 %v2039, %v2134
          %v2136 = vpop.f32.mrb[0].mxu0
          %2137 = vmatprep.mubr.bf16.mxu0 0
          %2138 = vmatmul.mubr.bf16.gmra.mrb[0].mxu0 %v2012
          %v2139 = vpop.f32.mrb[0].mxu0
          %v2140 = vadd.f32 %v2039, %v2139
          %v2141 = vpop.f32.mrb[0].mxu0
          %v2142 = vpop.f32.mrb[0].mxu0
          %v2143 = vadd.f32 %v2039, %v2142
          %v2144 = vpop.f32.mrb[0].mxu0
          %2145 = vmatprep.mubr.bf16.mxu0 0
          %2146 = vmatmul.mubr.bf16.gmra.mrb[0].mxu0 %v2013
          %v2147 = vpop.f32.mrb[0].mxu0
          %v2148 = vadd.f32 %v2039, %v2147
          %v2149 = vpop.f32.mrb[0].mxu0
          %v2150 = vpop.f32.mrb[0].mxu0
          %v2151 = vadd.f32 %v2039, %v2150
          %v2152 = vpop.f32.mrb[0].mxu0
          %2153 = vmatprep.mubr.bf16.mxu0 0
          %2154 = vmatmul.mubr.bf16.gmra.mrb[0].mxu0 %v2014
          %v2155 = vpop.f32.mrb[0].mxu0
          %v2156 = vadd.f32 %v2039, %v2155
          %v2157 = vpop.f32.mrb[0].mxu0
          %v2158 = vpop.f32.mrb[0].mxu0
          %v2159 = vadd.f32 %v2039, %v2158
          %v2160 = vpop.f32.mrb[0].mxu0
          %2161 = vmatprep.mubr.bf16.mxu0 0
          %2162 = vmatmul.mubr.bf16.gmra.mrb[0].mxu0 %v2015
          %v2163 = vpop.f32.mrb[0].mxu0
          %v2164 = vadd.f32 %v2039, %v2163
          %v2165 = vpop.f32.mrb[0].mxu0
          %v2166 = vpop.f32.mrb[0].mxu0
          %v2167 = vadd.f32 %v2039, %v2166
          %v2168 = vpop.f32.mrb[0].mxu0
          %2169 = vmatprep.mubr.bf16.mxu0 0
          %2170 = vmatmul.mubr.bf16.gmra.mrb[0].mxu0 %v2016
          %v2171 = vpop.f32.mrb[0].mxu0
          %v2172 = vadd.f32 %v2039, %v2171
          %v2173 = vpop.f32.mrb[0].mxu0
          %v2174 = vpop.f32.mrb[0].mxu0
          %v2175 = vadd.f32 %v2039, %v2174
          %v2176 = vpop.f32.mrb[0].mxu0
          %2177 = vmatprep.mubr.bf16.mxu0 0
          %2178 = vmatmul.mubr.bf16.gmra.mrb[0].mxu0 %v2017
          %v2179 = vpop.f32.mrb[0].mxu0
          %v2180 = vadd.f32 %v2039, %v2179
          %v2181 = vpop.f32.mrb[0].mxu0
          %v2182 = vpop.f32.mrb[0].mxu0
          %v2183 = vadd.f32 %v2039, %v2182
          %v2184 = vpop.f32.mrb[0].mxu0
          %2185 = vdwg.mxu0
          %v2186 = vmax.f32 %v2124, 0.0
          %v2187 = vmax.f32 %v2127, 0.0
          %v2188 = vmax.f32 %v2132, 0.0
          %v2189 = vmax.f32 %v2135, 0.0
          %v2190 = vmax.f32 %v2140, 0.0
          %v2191 = vmax.f32 %v2143, 0.0
          %v2192 = vmax.f32 %v2148, 0.0
          %v2193 = vmax.f32 %v2151, 0.0
          %v2194 = vmax.f32 %v2156, 0.0
          %v2195 = vmax.f32 %v2159, 0.0
          %v2196 = vmax.f32 %v2164, 0.0
          %v2197 = vmax.f32 %v2167, 0.0
          %v2198 = vmax.f32 %v2172, 0.0
          %v2199 = vmax.f32 %v2175, 0.0
          %v2200 = vmax.f32 %v2180, 0.0
          %v2201 = vmax.f32 %v2183, 0.0
          %v2202 = vpack.c.bf16 %v2187, %v2186
          %v2203 = vpack.c.bf16 %v2189, %v2188
          %v2204 = vpack.c.bf16 %v2191, %v2190
          %v2205 = vpack.c.bf16 %v2193, %v2192
          %v2206 = vpack.c.bf16 %v2195, %v2194
          %v2207 = vpack.c.bf16 %v2197, %v2196
          %v2208 = vpack.c.bf16 %v2199, %v2198
          %v2209 = vpack.c.bf16 %v2201, %v2200
          %s2210 = sshra.s32 %s1375, 4
          %s2211 = sand.u32 %s1375, 15
          %s2212 = smul.addr %s2210, 8
          %s2213 = scalar_lea.vmem [#allocation4], %s2212
          %2214 = vst [vmem:[%s2213] sm:$0xff] %v2202
          %2215 = vst [vmem:[%s2213 + $0x8] sm:$0xff] %v2203
          %2216 = vst [vmem:[%s2213 + $0x10] sm:$0xff] %v2204
          %2217 = vst [vmem:[%s2213 + $0x18] sm:$0xff] %v2205
          %2218 = vst [vmem:[%s2213 + $0x20] sm:$0xff] %v2206
          %2219 = vst [vmem:[%s2213 + $0x28] sm:$0xff] %v2207
          %2220 = vst [vmem:[%s2213 + $0x30] sm:$0xff] %v2208
          %2221 = vst [vmem:[%s2213 + $0x38] sm:$0xff] %v2209
        $region120: #{gin_forward.1} parent=111 // pred_fallthru
          _
        // Predicated region
        $region121: #{gin_forward.1} parent=111 // pred_check
          %p2222 = pneg %p1163
        $region122: #{gin_forward.1} parent=111 // pred_check_branch
          %2224 = sbr.rel (%p2222) target = $region124
        $region123: #{gin_forward.1} parent=111 // pred_region
          %v2225 = vld [vmem:[#allocation2] sm:$0xff]
          %v2226 = vld [vmem:[#allocation2 + $0x8] sm:$0xff]
          %v2227 = vld [vmem:[#allocation2 + $0x10] sm:$0xff]
          %v2228 = vld [vmem:[#allocation2 + $0x18] sm:$0xff]
          %v2229 = vld [vmem:[#allocation2 + $0x20] sm:$0xff]
          %v2230 = vld [vmem:[#allocation2 + $0x28] sm:$0xff]
          %v2231 = vld [vmem:[#allocation2 + $0x30] sm:$0xff]
          %v2232 = vld [vmem:[#allocation2 + $0x38] sm:$0xff]
          %v2233 = vld [vmem:[#allocation2 + $0x40] sm:$0xff]
          %v2234 = vld [vmem:[#allocation2 + $0x48] sm:$0xff]
          %v2235 = vld [vmem:[#allocation2 + $0x50] sm:$0xff]
          %v2236 = vld [vmem:[#allocation2 + $0x58] sm:$0xff]
          %v2237 = vld [vmem:[#allocation2 + $0x60] sm:$0xff]
          %v2238 = vld [vmem:[#allocation2 + $0x68] sm:$0xff]
          %v2239 = vld [vmem:[#allocation2 + $0x70] sm:$0xff]
          %v2240 = vld [vmem:[#allocation2 + $0x78] sm:$0xff]
          %v2241 = vpack.c.bf16 %v2226, %v2225
          %v2242 = vpack.c.bf16 %v2228, %v2227
          %v2243 = vpack.c.bf16 %v2230, %v2229
          %v2244 = vpack.c.bf16 %v2232, %v2231
          %v2245 = vpack.c.bf16 %v2234, %v2233
          %v2246 = vpack.c.bf16 %v2236, %v2235
          %v2247 = vpack.c.bf16 %v2238, %v2237
          %v2248 = vpack.c.bf16 %v2240, %v2239
          %v2249 = vld [vmem:[%s10] sm:$0xf]
          %v2250 = vld [vmem:[%s10 + $0x4] sm:$0xf]
          %v2251 = vld [vmem:[%s10 + $0x8] sm:$0xf]
          %v2252 = vld [vmem:[%s10 + $0xc] sm:$0xf]
          %v2253 = vld [vmem:[%s10 + $0x10] sm:$0xf]
          %v2254 = vld [vmem:[%s10 + $0x14] sm:$0xf]
          %v2255 = vld [vmem:[%s10 + $0x18] sm:$0xf]
          %v2256 = vld [vmem:[%s10 + $0x1c] sm:$0xf]
          %v2257 = vld [vmem:[%s10 + $0x20] sm:$0xf]
          %v2258 = vld [vmem:[%s10 + $0x24] sm:$0xf]
          %v2259 = vld [vmem:[%s10 + $0x28] sm:$0xf]
          %v2260 = vld [vmem:[%s10 + $0x2c] sm:$0xf]
          %v2261 = vld [vmem:[%s10 + $0x30] sm:$0xf]
          %v2262 = vld [vmem:[%s10 + $0x34] sm:$0xf]
          %v2263 = vld [vmem:[%s10 + $0x38] sm:$0xf]
          %v2264 = vld [vmem:[%s10 + $0x3c] sm:$0xf]
          %v2265 = vld [vmem:[%s11] sm:$0x1]
          %v2267 = vlaneseq
          %v2268 = vshrl.u32 %v2267, 7
          %v2269 = vsub.s32 0, %v2268
          %v2270 = vrot.slane %v2265, %v2269
          %v2288 = vunpack.c.l.b16 %v2249
          %v2289 = vunpack.c.l.b16 %v2250
          %v2290 = vunpack.c.l.b16 %v2251
          %v2291 = vunpack.c.l.b16 %v2252
          %v2292 = vunpack.c.l.b16 %v2253
          %v2293 = vunpack.c.l.b16 %v2254
          %v2294 = vunpack.c.l.b16 %v2255
          %v2295 = vunpack.c.l.b16 %v2256
          %v2296 = vunpack.c.l.b16 %v2257
          %v2297 = vunpack.c.l.b16 %v2258
          %v2298 = vunpack.c.l.b16 %v2259
          %v2299 = vunpack.c.l.b16 %v2260
          %v2300 = vunpack.c.l.b16 %v2261
          %v2301 = vunpack.c.l.b16 %v2262
          %v2302 = vunpack.c.l.b16 %v2263
          %v2303 = vunpack.c.l.b16 %v2264
          %v2304 = vpack.c.b16 %v2289, %v2288
          %v2305 = vpack.c.b16 %v2291, %v2290
          %v2306 = vpack.c.b16 %v2293, %v2292
          %v2307 = vpack.c.b16 %v2295, %v2294
          %v2308 = vpack.c.b16 %v2297, %v2296
          %v2309 = vpack.c.b16 %v2299, %v2298
          %v2310 = vpack.c.b16 %v2301, %v2300
          %v2311 = vpack.c.b16 %v2303, %v2302
          %2320 = vmatprep.subr.bf16.mxu0 0
          %2321 = vmatpush1.bf16.msra.mxu0 %v2304
          %2322 = vmatprep.subr.bf16.mxu0 0
          %2323 = vmatpush1.bf16.msra.mxu0 %v2305
          %2324 = vmatprep.subr.bf16.mxu0 0
          %2325 = vmatpush1.bf16.msra.mxu0 %v2306
          %2326 = vmatprep.subr.bf16.mxu0 0
          %2327 = vmatpush1.bf16.msra.mxu0 %v2307
          %2328 = vmatprep.subr.bf16.mxu0 0
          %2329 = vmatpush1.bf16.msra.mxu0 %v2308
          %2330 = vmatprep.subr.bf16.mxu0 0
          %2331 = vmatpush1.bf16.msra.mxu0 %v2309
          %2332 = vmatprep.subr.bf16.mxu0 0
          %2333 = vmatpush1.bf16.msra.mxu0 %v2310
          %2334 = vmatprep.subr.bf16.mxu0 0
          %2335 = vmatpush1.bf16.msra.mxu0 %v2311
          %2336 = vmatprep.subr.bf16.mxu0 0
          %2337 = vmatpush1.bf16.msra.mxu0 0
          %2338 = vmatprep.subr.bf16.mxu0 0
          %2339 = vmatpush1.bf16.msra.mxu0 0
          %2340 = vmatprep.subr.bf16.mxu0 0
          %2341 = vmatpush1.bf16.msra.mxu0 0
          %2342 = vmatprep.subr.bf16.mxu0 0
          %2343 = vmatpush1.bf16.msra.mxu0 0
          %2344 = vmatprep.subr.bf16.mxu0 0
          %2345 = vmatpush1.bf16.msra.mxu0 0
          %2346 = vmatprep.subr.bf16.mxu0 0
          %2347 = vmatpush1.bf16.msra.mxu0 0
          %2348 = vmatprep.subr.bf16.mxu0 0
          %2349 = vmatpush1.bf16.msra.mxu0 0
          %2350 = vmatprep.subr.bf16.mxu0 0
          %2351 = vmatpush1.bf16.msra.mxu0 0
          %2352 = vmatprep.mubr.bf16.mxu0 0
          %2353 = vmatmul.mubr.bf16.gmra.mrb[0].mxu0 %v2241
          %v2354 = vpop.f32.mrb[0].mxu0
          %v2355 = vadd.f32 %v2270, %v2354
          %v2356 = vpop.f32.mrb[0].mxu0
          %v2357 = vpop.f32.mrb[0].mxu0
          %v2358 = vadd.f32 %v2270, %v2357
          %v2359 = vpop.f32.mrb[0].mxu0
          %2360 = vmatprep.mubr.bf16.mxu0 0
          %2361 = vmatmul.mubr.bf16.gmra.mrb[0].mxu0 %v2242
          %v2362 = vpop.f32.mrb[0].mxu0
          %v2363 = vadd.f32 %v2270, %v2362
          %v2364 = vpop.f32.mrb[0].mxu0
          %v2365 = vpop.f32.mrb[0].mxu0
          %v2366 = vadd.f32 %v2270, %v2365
          %v2367 = vpop.f32.mrb[0].mxu0
          %2368 = vmatprep.mubr.bf16.mxu0 0
          %2369 = vmatmul.mubr.bf16.gmra.mrb[0].mxu0 %v2243
          %v2370 = vpop.f32.mrb[0].mxu0
          %v2371 = vadd.f32 %v2270, %v2370
          %v2372 = vpop.f32.mrb[0].mxu0
          %v2373 = vpop.f32.mrb[0].mxu0
          %v2374 = vadd.f32 %v2270, %v2373
          %v2375 = vpop.f32.mrb[0].mxu0
          %2376 = vmatprep.mubr.bf16.mxu0 0
          %2377 = vmatmul.mubr.bf16.gmra.mrb[0].mxu0 %v2244
          %v2378 = vpop.f32.mrb[0].mxu0
          %v2379 = vadd.f32 %v2270, %v2378
          %v2380 = vpop.f32.mrb[0].mxu0
          %v2381 = vpop.f32.mrb[0].mxu0
          %v2382 = vadd.f32 %v2270, %v2381
          %v2383 = vpop.f32.mrb[0].mxu0
          %2384 = vmatprep.mubr.bf16.mxu0 0
          %2385 = vmatmul.mubr.bf16.gmra.mrb[0].mxu0 %v2245
          %v2386 = vpop.f32.mrb[0].mxu0
          %v2387 = vadd.f32 %v2270, %v2386
          %v2388 = vpop.f32.mrb[0].mxu0
          %v2389 = vpop.f32.mrb[0].mxu0
          %v2390 = vadd.f32 %v2270, %v2389
          %v2391 = vpop.f32.mrb[0].mxu0
          %2392 = vmatprep.mubr.bf16.mxu0 0
          %2393 = vmatmul.mubr.bf16.gmra.mrb[0].mxu0 %v2246
          %v2394 = vpop.f32.mrb[0].mxu0
          %v2395 = vadd.f32 %v2270, %v2394
          %v2396 = vpop.f32.mrb[0].mxu0
          %v2397 = vpop.f32.mrb[0].mxu0
          %v2398 = vadd.f32 %v2270, %v2397
          %v2399 = vpop.f32.mrb[0].mxu0
          %2400 = vmatprep.mubr.bf16.mxu0 0
          %2401 = vmatmul.mubr.bf16.gmra.mrb[0].mxu0 %v2247
          %v2402 = vpop.f32.mrb[0].mxu0
          %v2403 = vadd.f32 %v2270, %v2402
          %v2404 = vpop.f32.mrb[0].mxu0
          %v2405 = vpop.f32.mrb[0].mxu0
          %v2406 = vadd.f32 %v2270, %v2405
          %v2407 = vpop.f32.mrb[0].mxu0
          %2408 = vmatprep.mubr.bf16.mxu0 0
          %2409 = vmatmul.mubr.bf16.gmra.mrb[0].mxu0 %v2248
          %v2410 = vpop.f32.mrb[0].mxu0
          %v2411 = vadd.f32 %v2270, %v2410
          %v2412 = vpop.f32.mrb[0].mxu0
          %v2413 = vpop.f32.mrb[0].mxu0
          %v2414 = vadd.f32 %v2270, %v2413
          %v2415 = vpop.f32.mrb[0].mxu0
          %2416 = vdwg.mxu0
          %v2417 = vmax.f32 %v2355, 0.0
          %v2418 = vmax.f32 %v2358, 0.0
          %v2419 = vmax.f32 %v2363, 0.0
          %v2420 = vmax.f32 %v2366, 0.0
          %v2421 = vmax.f32 %v2371, 0.0
          %v2422 = vmax.f32 %v2374, 0.0
          %v2423 = vmax.f32 %v2379, 0.0
          %v2424 = vmax.f32 %v2382, 0.0
          %v2425 = vmax.f32 %v2387, 0.0
          %v2426 = vmax.f32 %v2390, 0.0
          %v2427 = vmax.f32 %v2395, 0.0
          %v2428 = vmax.f32 %v2398, 0.0
          %v2429 = vmax.f32 %v2403, 0.0
          %v2430 = vmax.f32 %v2406, 0.0
          %v2431 = vmax.f32 %v2411, 0.0
          %v2432 = vmax.f32 %v2414, 0.0
          %v2433 = vpack.c.bf16 %v2418, %v2417
          %v2434 = vpack.c.bf16 %v2420, %v2419
          %v2435 = vpack.c.bf16 %v2422, %v2421
          %v2436 = vpack.c.bf16 %v2424, %v2423
          %v2437 = vpack.c.bf16 %v2426, %v2425
          %v2438 = vpack.c.bf16 %v2428, %v2427
          %v2439 = vpack.c.bf16 %v2430, %v2429
          %v2440 = vpack.c.bf16 %v2432, %v2431
          %v2441 = vld [vmem:[%s12] sm:$0xf]
          %v2442 = vld [vmem:[%s12 + $0x4] sm:$0xf]
          %v2443 = vld [vmem:[%s12 + $0x8] sm:$0xf]
          %v2444 = vld [vmem:[%s12 + $0xc] sm:$0xf]
          %v2445 = vld [vmem:[%s12 + $0x10] sm:$0xf]
          %v2446 = vld [vmem:[%s12 + $0x14] sm:$0xf]
          %v2447 = vld [vmem:[%s12 + $0x18] sm:$0xf]
          %v2448 = vld [vmem:[%s12 + $0x1c] sm:$0xf]
          %v2449 = vld [vmem:[%s12 + $0x20] sm:$0xf]
          %v2450 = vld [vmem:[%s12 + $0x24] sm:$0xf]
          %v2451 = vld [vmem:[%s12 + $0x28] sm:$0xf]
          %v2452 = vld [vmem:[%s12 + $0x2c] sm:$0xf]
          %v2453 = vld [vmem:[%s12 + $0x30] sm:$0xf]
          %v2454 = vld [vmem:[%s12 + $0x34] sm:$0xf]
          %v2455 = vld [vmem:[%s12 + $0x38] sm:$0xf]
          %v2456 = vld [vmem:[%s12 + $0x3c] sm:$0xf]
          %v2457 = vld [vmem:[%s13] sm:$0x1]
          %v2459 = vlaneseq
          %v2460 = vshrl.u32 %v2459, 7
          %v2461 = vsub.s32 0, %v2460
          %v2462 = vrot.slane %v2457, %v2461
          %v2480 = vunpack.c.l.b16 %v2441
          %v2481 = vunpack.c.l.b16 %v2442
          %v2482 = vunpack.c.l.b16 %v2443
          %v2483 = vunpack.c.l.b16 %v2444
          %v2484 = vunpack.c.l.b16 %v2445
          %v2485 = vunpack.c.l.b16 %v2446
          %v2486 = vunpack.c.l.b16 %v2447
          %v2487 = vunpack.c.l.b16 %v2448
          %v2488 = vunpack.c.l.b16 %v2449
          %v2489 = vunpack.c.l.b16 %v2450
          %v2490 = vunpack.c.l.b16 %v2451
          %v2491 = vunpack.c.l.b16 %v2452
          %v2492 = vunpack.c.l.b16 %v2453
          %v2493 = vunpack.c.l.b16 %v2454
          %v2494 = vunpack.c.l.b16 %v2455
          %v2495 = vunpack.c.l.b16 %v2456
          %v2496 = vpack.c.b16 %v2481, %v2480
          %v2497 = vpack.c.b16 %v2483, %v2482
          %v2498 = vpack.c.b16 %v2485, %v2484
          %v2499 = vpack.c.b16 %v2487, %v2486
          %v2500 = vpack.c.b16 %v2489, %v2488
          %v2501 = vpack.c.b16 %v2491, %v2490
          %v2502 = vpack.c.b16 %v2493, %v2492
          %v2503 = vpack.c.b16 %v2495, %v2494
          %2512 = vmatprep.subr.bf16.mxu0 0
          %2513 = vmatpush1.bf16.msra.mxu0 %v2496
          %2514 = vmatprep.subr.bf16.mxu0 0
          %2515 = vmatpush1.bf16.msra.mxu0 %v2497
          %2516 = vmatprep.subr.bf16.mxu0 0
          %2517 = vmatpush1.bf16.msra.mxu0 %v2498
          %2518 = vmatprep.subr.bf16.mxu0 0
          %2519 = vmatpush1.bf16.msra.mxu0 %v2499
          %2520 = vmatprep.subr.bf16.mxu0 0
          %2521 = vmatpush1.bf16.msra.mxu0 %v2500
          %2522 = vmatprep.subr.bf16.mxu0 0
          %2523 = vmatpush1.bf16.msra.mxu0 %v2501
          %2524 = vmatprep.subr.bf16.mxu0 0
          %2525 = vmatpush1.bf16.msra.mxu0 %v2502
          %2526 = vmatprep.subr.bf16.mxu0 0
          %2527 = vmatpush1.bf16.msra.mxu0 %v2503
          %2528 = vmatprep.subr.bf16.mxu0 0
          %2529 = vmatpush1.bf16.msra.mxu0 0
          %2530 = vmatprep.subr.bf16.mxu0 0
          %2531 = vmatpush1.bf16.msra.mxu0 0
          %2532 = vmatprep.subr.bf16.mxu0 0
          %2533 = vmatpush1.bf16.msra.mxu0 0
          %2534 = vmatprep.subr.bf16.mxu0 0
          %2535 = vmatpush1.bf16.msra.mxu0 0
          %2536 = vmatprep.subr.bf16.mxu0 0
          %2537 = vmatpush1.bf16.msra.mxu0 0
          %2538 = vmatprep.subr.bf16.mxu0 0
          %2539 = vmatpush1.bf16.msra.mxu0 0
          %2540 = vmatprep.subr.bf16.mxu0 0
          %2541 = vmatpush1.bf16.msra.mxu0 0
          %2542 = vmatprep.subr.bf16.mxu0 0
          %2543 = vmatpush1.bf16.msra.mxu0 0
          %2544 = vmatprep.mubr.bf16.mxu0 0
          %2545 = vmatmul.mubr.bf16.gmra.mrb[0].mxu0 %v2433
          %v2546 = vpop.f32.mrb[0].mxu0
          %v2547 = vadd.f32 %v2462, %v2546
          %v2548 = vpop.f32.mrb[0].mxu0
          %v2549 = vpop.f32.mrb[0].mxu0
          %v2550 = vadd.f32 %v2462, %v2549
          %v2551 = vpop.f32.mrb[0].mxu0
          %2552 = vmatprep.mubr.bf16.mxu0 0
          %2553 = vmatmul.mubr.bf16.gmra.mrb[0].mxu0 %v2434
          %v2554 = vpop.f32.mrb[0].mxu0
          %v2555 = vadd.f32 %v2462, %v2554
          %v2556 = vpop.f32.mrb[0].mxu0
          %v2557 = vpop.f32.mrb[0].mxu0
          %v2558 = vadd.f32 %v2462, %v2557
          %v2559 = vpop.f32.mrb[0].mxu0
          %2560 = vmatprep.mubr.bf16.mxu0 0
          %2561 = vmatmul.mubr.bf16.gmra.mrb[0].mxu0 %v2435
          %v2562 = vpop.f32.mrb[0].mxu0
          %v2563 = vadd.f32 %v2462, %v2562
          %v2564 = vpop.f32.mrb[0].mxu0
          %v2565 = vpop.f32.mrb[0].mxu0
          %v2566 = vadd.f32 %v2462, %v2565
          %v2567 = vpop.f32.mrb[0].mxu0
          %2568 = vmatprep.mubr.bf16.mxu0 0
          %2569 = vmatmul.mubr.bf16.gmra.mrb[0].mxu0 %v2436
          %v2570 = vpop.f32.mrb[0].mxu0
          %v2571 = vadd.f32 %v2462, %v2570
          %v2572 = vpop.f32.mrb[0].mxu0
          %v2573 = vpop.f32.mrb[0].mxu0
          %v2574 = vadd.f32 %v2462, %v2573
          %v2575 = vpop.f32.mrb[0].mxu0
          %2576 = vmatprep.mubr.bf16.mxu0 0
          %2577 = vmatmul.mubr.bf16.gmra.mrb[0].mxu0 %v2437
          %v2578 = vpop.f32.mrb[0].mxu0
          %v2579 = vadd.f32 %v2462, %v2578
          %v2580 = vpop.f32.mrb[0].mxu0
          %v2581 = vpop.f32.mrb[0].mxu0
          %v2582 = vadd.f32 %v2462, %v2581
          %v2583 = vpop.f32.mrb[0].mxu0
          %2584 = vmatprep.mubr.bf16.mxu0 0
          %2585 = vmatmul.mubr.bf16.gmra.mrb[0].mxu0 %v2438
          %v2586 = vpop.f32.mrb[0].mxu0
          %v2587 = vadd.f32 %v2462, %v2586
          %v2588 = vpop.f32.mrb[0].mxu0
          %v2589 = vpop.f32.mrb[0].mxu0
          %v2590 = vadd.f32 %v2462, %v2589
          %v2591 = vpop.f32.mrb[0].mxu0
          %2592 = vmatprep.mubr.bf16.mxu0 0
          %2593 = vmatmul.mubr.bf16.gmra.mrb[0].mxu0 %v2439
          %v2594 = vpop.f32.mrb[0].mxu0
          %v2595 = vadd.f32 %v2462, %v2594
          %v2596 = vpop.f32.mrb[0].mxu0
          %v2597 = vpop.f32.mrb[0].mxu0
          %v2598 = vadd.f32 %v2462, %v2597
          %v2599 = vpop.f32.mrb[0].mxu0
          %2600 = vmatprep.mubr.bf16.mxu0 0
          %2601 = vmatmul.mubr.bf16.gmra.mrb[0].mxu0 %v2440
          %v2602 = vpop.f32.mrb[0].mxu0
          %v2603 = vadd.f32 %v2462, %v2602
          %v2604 = vpop.f32.mrb[0].mxu0
          %v2605 = vpop.f32.mrb[0].mxu0
          %v2606 = vadd.f32 %v2462, %v2605
          %v2607 = vpop.f32.mrb[0].mxu0
          %2608 = vdwg.mxu0
          %v2609 = vmax.f32 %v2547, 0.0
          %v2610 = vmax.f32 %v2550, 0.0
          %v2611 = vmax.f32 %v2555, 0.0
          %v2612 = vmax.f32 %v2558, 0.0
          %v2613 = vmax.f32 %v2563, 0.0
          %v2614 = vmax.f32 %v2566, 0.0
          %v2615 = vmax.f32 %v2571, 0.0
          %v2616 = vmax.f32 %v2574, 0.0
          %v2617 = vmax.f32 %v2579, 0.0
          %v2618 = vmax.f32 %v2582, 0.0
          %v2619 = vmax.f32 %v2587, 0.0
          %v2620 = vmax.f32 %v2590, 0.0
          %v2621 = vmax.f32 %v2595, 0.0
          %v2622 = vmax.f32 %v2598, 0.0
          %v2623 = vmax.f32 %v2603, 0.0
          %v2624 = vmax.f32 %v2606, 0.0
          %v2625 = vpack.c.bf16 %v2610, %v2609
          %v2626 = vpack.c.bf16 %v2612, %v2611
          %v2627 = vpack.c.bf16 %v2614, %v2613
          %v2628 = vpack.c.bf16 %v2616, %v2615
          %v2629 = vpack.c.bf16 %v2618, %v2617
          %v2630 = vpack.c.bf16 %v2620, %v2619
          %v2631 = vpack.c.bf16 %v2622, %v2621
          %v2632 = vpack.c.bf16 %v2624, %v2623
          %s2633 = sshra.s32 %s1375, 4
          %s2634 = sand.u32 %s1375, 15
          %s2635 = smul.addr %s2633, 8
          %s2636 = scalar_lea.vmem [#allocation3], %s2635
          %v2637 = vld [vmem:[%s2636] sm:$0xff]
          %v2638 = vld [vmem:[%s2636 + $0x8] sm:$0xff]
          %v2639 = vld [vmem:[%s2636 + $0x10] sm:$0xff]
          %v2640 = vld [vmem:[%s2636 + $0x18] sm:$0xff]
          %v2641 = vld [vmem:[%s2636 + $0x20] sm:$0xff]
          %v2642 = vld [vmem:[%s2636 + $0x28] sm:$0xff]
          %v2643 = vld [vmem:[%s2636 + $0x30] sm:$0xff]
          %v2644 = vld [vmem:[%s2636 + $0x38] sm:$0xff]
          %s2645 = smul.addr %s2633, 8
          %s2646 = scalar_lea.vmem [#allocation4], %s2645
          %v2647 = vld [vmem:[%s2646] sm:$0xff]
          %v2648 = vld [vmem:[%s2646 + $0x8] sm:$0xff]
          %v2649 = vld [vmem:[%s2646 + $0x10] sm:$0xff]
          %v2650 = vld [vmem:[%s2646 + $0x18] sm:$0xff]
          %v2651 = vld [vmem:[%s2646 + $0x20] sm:$0xff]
          %v2652 = vld [vmem:[%s2646 + $0x28] sm:$0xff]
          %v2653 = vld [vmem:[%s2646 + $0x30] sm:$0xff]
          %v2654 = vld [vmem:[%s2646 + $0x38] sm:$0xff]
          %v2655 = vld [vmem:[%s14] sm:$0xf]
          %v2656 = vld [vmem:[%s14 + $0x4] sm:$0xf]
          %v2657 = vld [vmem:[%s14 + $0x8] sm:$0xf]
          %v2658 = vld [vmem:[%s14 + $0xc] sm:$0xf]
          %v2659 = vld [vmem:[%s14 + $0x10] sm:$0xf]
          %v2660 = vld [vmem:[%s14 + $0x14] sm:$0xf]
          %v2661 = vld [vmem:[%s14 + $0x18] sm:$0xf]
          %v2662 = vld [vmem:[%s14 + $0x1c] sm:$0xf]
          %v2663 = vld [vmem:[%s14 + $0x20] sm:$0xf]
          %v2664 = vld [vmem:[%s14 + $0x24] sm:$0xf]
          %v2665 = vld [vmem:[%s14 + $0x28] sm:$0xf]
          %v2666 = vld [vmem:[%s14 + $0x2c] sm:$0xf]
          %v2667 = vld [vmem:[%s14 + $0x30] sm:$0xf]
          %v2668 = vld [vmem:[%s14 + $0x34] sm:$0xf]
          %v2669 = vld [vmem:[%s14 + $0x38] sm:$0xf]
          %v2670 = vld [vmem:[%s14 + $0x3c] sm:$0xf]
          %s2671 = scalar_lea.vmem %s14, 64
          %v2672 = vld [vmem:[%s2671] sm:$0xf]
          %v2673 = vld [vmem:[%s2671 + $0x4] sm:$0xf]
          %v2674 = vld [vmem:[%s2671 + $0x8] sm:$0xf]
          %v2675 = vld [vmem:[%s2671 + $0xc] sm:$0xf]
          %v2676 = vld [vmem:[%s2671 + $0x10] sm:$0xf]
          %v2677 = vld [vmem:[%s2671 + $0x14] sm:$0xf]
          %v2678 = vld [vmem:[%s2671 + $0x18] sm:$0xf]
          %v2679 = vld [vmem:[%s2671 + $0x1c] sm:$0xf]
          %v2680 = vld [vmem:[%s2671 + $0x20] sm:$0xf]
          %v2681 = vld [vmem:[%s2671 + $0x24] sm:$0xf]
          %v2682 = vld [vmem:[%s2671 + $0x28] sm:$0xf]
          %v2683 = vld [vmem:[%s2671 + $0x2c] sm:$0xf]
          %v2684 = vld [vmem:[%s2671 + $0x30] sm:$0xf]
          %v2685 = vld [vmem:[%s2671 + $0x34] sm:$0xf]
          %v2686 = vld [vmem:[%s2671 + $0x38] sm:$0xf]
          %v2687 = vld [vmem:[%s2671 + $0x3c] sm:$0xf]
          %v2704 = vunpack.c.l.b16 %v2672
          %v2705 = vunpack.c.l.b16 %v2673
          %v2706 = vunpack.c.l.b16 %v2674
          %v2707 = vunpack.c.l.b16 %v2675
          %v2708 = vunpack.c.l.b16 %v2676
          %v2709 = vunpack.c.l.b16 %v2677
          %v2710 = vunpack.c.l.b16 %v2678
          %v2711 = vunpack.c.l.b16 %v2679
          %v2712 = vunpack.c.l.b16 %v2680
          %v2713 = vunpack.c.l.b16 %v2681
          %v2714 = vunpack.c.l.b16 %v2682
          %v2715 = vunpack.c.l.b16 %v2683
          %v2716 = vunpack.c.l.b16 %v2684
          %v2717 = vunpack.c.l.b16 %v2685
          %v2718 = vunpack.c.l.b16 %v2686
          %v2719 = vunpack.c.l.b16 %v2687
          %v2720 = vpack.c.b16 %v2705, %v2704
          %v2721 = vpack.c.b16 %v2707, %v2706
          %v2722 = vpack.c.b16 %v2709, %v2708
          %v2723 = vpack.c.b16 %v2711, %v2710
          %v2724 = vpack.c.b16 %v2713, %v2712
          %v2725 = vpack.c.b16 %v2715, %v2714
          %v2726 = vpack.c.b16 %v2717, %v2716
          %v2727 = vpack.c.b16 %v2719, %v2718
          %2736 = vmatprep.subr.bf16.mxu0 0
          %2737 = vmatpush1.bf16.msra.mxu0 %v2720
          %2738 = vmatprep.subr.bf16.mxu0 0
          %2739 = vmatpush1.bf16.msra.mxu0 %v2721
          %2740 = vmatprep.subr.bf16.mxu0 0
          %2741 = vmatpush1.bf16.msra.mxu0 %v2722
          %2742 = vmatprep.subr.bf16.mxu0 0
          %2743 = vmatpush1.bf16.msra.mxu0 %v2723
          %2744 = vmatprep.subr.bf16.mxu0 0
          %2745 = vmatpush1.bf16.msra.mxu0 %v2724
          %2746 = vmatprep.subr.bf16.mxu0 0
          %2747 = vmatpush1.bf16.msra.mxu0 %v2725
          %2748 = vmatprep.subr.bf16.mxu0 0
          %2749 = vmatpush1.bf16.msra.mxu0 %v2726
          %2750 = vmatprep.subr.bf16.mxu0 0
          %2751 = vmatpush1.bf16.msra.mxu0 %v2727
          %2752 = vmatprep.subr.bf16.mxu0 0
          %2753 = vmatpush1.bf16.msra.mxu0 0
          %2754 = vmatprep.subr.bf16.mxu0 0
          %2755 = vmatpush1.bf16.msra.mxu0 0
          %2756 = vmatprep.subr.bf16.mxu0 0
          %2757 = vmatpush1.bf16.msra.mxu0 0
          %2758 = vmatprep.subr.bf16.mxu0 0
          %2759 = vmatpush1.bf16.msra.mxu0 0
          %2760 = vmatprep.subr.bf16.mxu0 0
          %2761 = vmatpush1.bf16.msra.mxu0 0
          %2762 = vmatprep.subr.bf16.mxu0 0
          %2763 = vmatpush1.bf16.msra.mxu0 0
          %2764 = vmatprep.subr.bf16.mxu0 0
          %2765 = vmatpush1.bf16.msra.mxu0 0
          %2766 = vmatprep.subr.bf16.mxu0 0
          %2767 = vmatpush1.bf16.msra.mxu0 0
          %2768 = vmatprep.mubr.bf16.mxu0 0
          %2769 = vmatmul.mubr.bf16.gmra.mrb[0].mxu0 %v2647
          %v2770 = vpop.f32.mrb[0].mxu0
          %v2771 = vadd.f32 0.0, %v2770
          %v2772 = vpop.f32.mrb[0].mxu0
          %v2773 = vpop.f32.mrb[0].mxu0
          %v2774 = vadd.f32 0.0, %v2773
          %v2775 = vpop.f32.mrb[0].mxu0
          %2776 = vmatprep.mubr.bf16.mxu0 0
          %2777 = vmatmul.mubr.bf16.gmra.mrb[0].mxu0 %v2648
          %v2778 = vpop.f32.mrb[0].mxu0
          %v2779 = vadd.f32 0.0, %v2778
          %v2780 = vpop.f32.mrb[0].mxu0
          %v2781 = vpop.f32.mrb[0].mxu0
          %v2782 = vadd.f32 0.0, %v2781
          %v2783 = vpop.f32.mrb[0].mxu0
          %2784 = vmatprep.mubr.bf16.mxu0 0
          %2785 = vmatmul.mubr.bf16.gmra.mrb[0].mxu0 %v2649
          %v2786 = vpop.f32.mrb[0].mxu0
          %v2787 = vadd.f32 0.0, %v2786
          %v2788 = vpop.f32.mrb[0].mxu0
          %v2789 = vpop.f32.mrb[0].mxu0
          %v2790 = vadd.f32 0.0, %v2789
          %v2791 = vpop.f32.mrb[0].mxu0
          %2792 = vmatprep.mubr.bf16.mxu0 0
          %2793 = vmatmul.mubr.bf16.gmra.mrb[0].mxu0 %v2650
          %v2794 = vpop.f32.mrb[0].mxu0
          %v2795 = vadd.f32 0.0, %v2794
          %v2796 = vpop.f32.mrb[0].mxu0
          %v2797 = vpop.f32.mrb[0].mxu0
          %v2798 = vadd.f32 0.0, %v2797
          %v2799 = vpop.f32.mrb[0].mxu0
          %2800 = vmatprep.mubr.bf16.mxu0 0
          %2801 = vmatmul.mubr.bf16.gmra.mrb[0].mxu0 %v2651
          %v2802 = vpop.f32.mrb[0].mxu0
          %v2803 = vadd.f32 0.0, %v2802
          %v2804 = vpop.f32.mrb[0].mxu0
          %v2805 = vpop.f32.mrb[0].mxu0
          %v2806 = vadd.f32 0.0, %v2805
          %v2807 = vpop.f32.mrb[0].mxu0
          %2808 = vmatprep.mubr.bf16.mxu0 0
          %2809 = vmatmul.mubr.bf16.gmra.mrb[0].mxu0 %v2652
          %v2810 = vpop.f32.mrb[0].mxu0
          %v2811 = vadd.f32 0.0, %v2810
          %v2812 = vpop.f32.mrb[0].mxu0
          %v2813 = vpop.f32.mrb[0].mxu0
          %v2814 = vadd.f32 0.0, %v2813
          %v2815 = vpop.f32.mrb[0].mxu0
          %2816 = vmatprep.mubr.bf16.mxu0 0
          %2817 = vmatmul.mubr.bf16.gmra.mrb[0].mxu0 %v2653
          %v2818 = vpop.f32.mrb[0].mxu0
          %v2819 = vadd.f32 0.0, %v2818
          %v2820 = vpop.f32.mrb[0].mxu0
          %v2821 = vpop.f32.mrb[0].mxu0
          %v2822 = vadd.f32 0.0, %v2821
          %v2823 = vpop.f32.mrb[0].mxu0
          %2824 = vmatprep.mubr.bf16.mxu0 0
          %2825 = vmatmul.mubr.bf16.gmra.mrb[0].mxu0 %v2654
          %v2826 = vpop.f32.mrb[0].mxu0
          %v2827 = vadd.f32 0.0, %v2826
          %v2828 = vpop.f32.mrb[0].mxu0
          %v2829 = vpop.f32.mrb[0].mxu0
          %v2830 = vadd.f32 0.0, %v2829
          %v2831 = vpop.f32.mrb[0].mxu0
          %2832 = vdwg.mxu0
          %v2849 = vunpack.c.l.b16 %v2655
          %v2850 = vunpack.c.l.b16 %v2656
          %v2851 = vunpack.c.l.b16 %v2657
          %v2852 = vunpack.c.l.b16 %v2658
          %v2853 = vunpack.c.l.b16 %v2659
          %v2854 = vunpack.c.l.b16 %v2660
          %v2855 = vunpack.c.l.b16 %v2661
          %v2856 = vunpack.c.l.b16 %v2662
          %v2857 = vunpack.c.l.b16 %v2663
          %v2858 = vunpack.c.l.b16 %v2664
          %v2859 = vunpack.c.l.b16 %v2665
          %v2860 = vunpack.c.l.b16 %v2666
          %v2861 = vunpack.c.l.b16 %v2667
          %v2862 = vunpack.c.l.b16 %v2668
          %v2863 = vunpack.c.l.b16 %v2669
          %v2864 = vunpack.c.l.b16 %v2670
          %v2865 = vpack.c.b16 %v2850, %v2849
          %v2866 = vpack.c.b16 %v2852, %v2851
          %v2867 = vpack.c.b16 %v2854, %v2853
          %v2868 = vpack.c.b16 %v2856, %v2855
          %v2869 = vpack.c.b16 %v2858, %v2857
          %v2870 = vpack.c.b16 %v2860, %v2859
          %v2871 = vpack.c.b16 %v2862, %v2861
          %v2872 = vpack.c.b16 %v2864, %v2863
          %2881 = vmatprep.subr.bf16.mxu0 0
          %2882 = vmatpush1.bf16.msra.mxu0 %v2865
          %2883 = vmatprep.subr.bf16.mxu0 0
          %2884 = vmatpush1.bf16.msra.mxu0 %v2866
          %2885 = vmatprep.subr.bf16.mxu0 0
          %2886 = vmatpush1.bf16.msra.mxu0 %v2867
          %2887 = vmatprep.subr.bf16.mxu0 0
          %2888 = vmatpush1.bf16.msra.mxu0 %v2868
          %2889 = vmatprep.subr.bf16.mxu0 0
          %2890 = vmatpush1.bf16.msra.mxu0 %v2869
          %2891 = vmatprep.subr.bf16.mxu0 0
          %2892 = vmatpush1.bf16.msra.mxu0 %v2870
          %2893 = vmatprep.subr.bf16.mxu0 0
          %2894 = vmatpush1.bf16.msra.mxu0 %v2871
          %2895 = vmatprep.subr.bf16.mxu0 0
          %2896 = vmatpush1.bf16.msra.mxu0 %v2872
          %2897 = vmatprep.subr.bf16.mxu0 0
          %2898 = vmatpush1.bf16.msra.mxu0 0
          %2899 = vmatprep.subr.bf16.mxu0 0
          %2900 = vmatpush1.bf16.msra.mxu0 0
          %2901 = vmatprep.subr.bf16.mxu0 0
          %2902 = vmatpush1.bf16.msra.mxu0 0
          %2903 = vmatprep.subr.bf16.mxu0 0
          %2904 = vmatpush1.bf16.msra.mxu0 0
          %2905 = vmatprep.subr.bf16.mxu0 0
          %2906 = vmatpush1.bf16.msra.mxu0 0
          %2907 = vmatprep.subr.bf16.mxu0 0
          %2908 = vmatpush1.bf16.msra.mxu0 0
          %2909 = vmatprep.subr.bf16.mxu0 0
          %2910 = vmatpush1.bf16.msra.mxu0 0
          %2911 = vmatprep.subr.bf16.mxu0 0
          %2912 = vmatpush1.bf16.msra.mxu0 0
          %2913 = vmatprep.mubr.bf16.mxu0 0
          %2914 = vmatmul.mubr.bf16.gmra.mrb[0].mxu0 %v2637
          %v2915 = vpop.f32.mrb[0].mxu0
          %v2916 = vadd.f32 %v2771, %v2915
          %v2917 = vpop.f32.mrb[0].mxu0
          %v2918 = vpop.f32.mrb[0].mxu0
          %v2919 = vadd.f32 %v2774, %v2918
          %v2920 = vpop.f32.mrb[0].mxu0
          %2921 = vmatprep.mubr.bf16.mxu0 0
          %2922 = vmatmul.mubr.bf16.gmra.mrb[0].mxu0 %v2638
          %v2923 = vpop.f32.mrb[0].mxu0
          %v2924 = vadd.f32 %v2779, %v2923
          %v2925 = vpop.f32.mrb[0].mxu0
          %v2926 = vpop.f32.mrb[0].mxu0
          %v2927 = vadd.f32 %v2782, %v2926
          %v2928 = vpop.f32.mrb[0].mxu0
          %2929 = vmatprep.mubr.bf16.mxu0 0
          %2930 = vmatmul.mubr.bf16.gmra.mrb[0].mxu0 %v2639
          %v2931 = vpop.f32.mrb[0].mxu0
          %v2932 = vadd.f32 %v2787, %v2931
          %v2933 = vpop.f32.mrb[0].mxu0
          %v2934 = vpop.f32.mrb[0].mxu0
          %v2935 = vadd.f32 %v2790, %v2934
          %v2936 = vpop.f32.mrb[0].mxu0
          %2937 = vmatprep.mubr.bf16.mxu0 0
          %2938 = vmatmul.mubr.bf16.gmra.mrb[0].mxu0 %v2640
          %v2939 = vpop.f32.mrb[0].mxu0
          %v2940 = vadd.f32 %v2795, %v2939
          %v2941 = vpop.f32.mrb[0].mxu0
          %v2942 = vpop.f32.mrb[0].mxu0
          %v2943 = vadd.f32 %v2798, %v2942
          %v2944 = vpop.f32.mrb[0].mxu0
          %2945 = vmatprep.mubr.bf16.mxu0 0
          %2946 = vmatmul.mubr.bf16.gmra.mrb[0].mxu0 %v2641
          %v2947 = vpop.f32.mrb[0].mxu0
          %v2948 = vadd.f32 %v2803, %v2947
          %v2949 = vpop.f32.mrb[0].mxu0
          %v2950 = vpop.f32.mrb[0].mxu0
          %v2951 = vadd.f32 %v2806, %v2950
          %v2952 = vpop.f32.mrb[0].mxu0
          %2953 = vmatprep.mubr.bf16.mxu0 0
          %2954 = vmatmul.mubr.bf16.gmra.mrb[0].mxu0 %v2642
          %v2955 = vpop.f32.mrb[0].mxu0
          %v2956 = vadd.f32 %v2811, %v2955
          %v2957 = vpop.f32.mrb[0].mxu0
          %v2958 = vpop.f32.mrb[0].mxu0
          %v2959 = vadd.f32 %v2814, %v2958
          %v2960 = vpop.f32.mrb[0].mxu0
          %2961 = vmatprep.mubr.bf16.mxu0 0
          %2962 = vmatmul.mubr.bf16.gmra.mrb[0].mxu0 %v2643
          %v2963 = vpop.f32.mrb[0].mxu0
          %v2964 = vadd.f32 %v2819, %v2963
          %v2965 = vpop.f32.mrb[0].mxu0
          %v2966 = vpop.f32.mrb[0].mxu0
          %v2967 = vadd.f32 %v2822, %v2966
          %v2968 = vpop.f32.mrb[0].mxu0
          %2969 = vmatprep.mubr.bf16.mxu0 0
          %2970 = vmatmul.mubr.bf16.gmra.mrb[0].mxu0 %v2644
          %v2971 = vpop.f32.mrb[0].mxu0
          %v2972 = vadd.f32 %v2827, %v2971
          %v2973 = vpop.f32.mrb[0].mxu0
          %v2974 = vpop.f32.mrb[0].mxu0
          %v2975 = vadd.f32 %v2830, %v2974
          %v2976 = vpop.f32.mrb[0].mxu0
          %2977 = vdwg.mxu0
          %s2978 = scalar_lea.vmem %s14, 128
          %v2979 = vld [vmem:[%s2978] sm:$0xf]
          %v2980 = vld [vmem:[%s2978 + $0x4] sm:$0xf]
          %v2981 = vld [vmem:[%s2978 + $0x8] sm:$0xf]
          %v2982 = vld [vmem:[%s2978 + $0xc] sm:$0xf]
          %v2983 = vld [vmem:[%s2978 + $0x10] sm:$0xf]
          %v2984 = vld [vmem:[%s2978 + $0x14] sm:$0xf]
          %v2985 = vld [vmem:[%s2978 + $0x18] sm:$0xf]
          %v2986 = vld [vmem:[%s2978 + $0x1c] sm:$0xf]
          %v2987 = vld [vmem:[%s2978 + $0x20] sm:$0xf]
          %v2988 = vld [vmem:[%s2978 + $0x24] sm:$0xf]
          %v2989 = vld [vmem:[%s2978 + $0x28] sm:$0xf]
          %v2990 = vld [vmem:[%s2978 + $0x2c] sm:$0xf]
          %v2991 = vld [vmem:[%s2978 + $0x30] sm:$0xf]
          %v2992 = vld [vmem:[%s2978 + $0x34] sm:$0xf]
          %v2993 = vld [vmem:[%s2978 + $0x38] sm:$0xf]
          %v2994 = vld [vmem:[%s2978 + $0x3c] sm:$0xf]
          %v3011 = vunpack.c.l.b16 %v2979
          %v3012 = vunpack.c.l.b16 %v2980
          %v3013 = vunpack.c.l.b16 %v2981
          %v3014 = vunpack.c.l.b16 %v2982
          %v3015 = vunpack.c.l.b16 %v2983
          %v3016 = vunpack.c.l.b16 %v2984
          %v3017 = vunpack.c.l.b16 %v2985
          %v3018 = vunpack.c.l.b16 %v2986
          %v3019 = vunpack.c.l.b16 %v2987
          %v3020 = vunpack.c.l.b16 %v2988
          %v3021 = vunpack.c.l.b16 %v2989
          %v3022 = vunpack.c.l.b16 %v2990
          %v3023 = vunpack.c.l.b16 %v2991
          %v3024 = vunpack.c.l.b16 %v2992
          %v3025 = vunpack.c.l.b16 %v2993
          %v3026 = vunpack.c.l.b16 %v2994
          %v3027 = vpack.c.b16 %v3012, %v3011
          %v3028 = vpack.c.b16 %v3014, %v3013
          %v3029 = vpack.c.b16 %v3016, %v3015
          %v3030 = vpack.c.b16 %v3018, %v3017
          %v3031 = vpack.c.b16 %v3020, %v3019
          %v3032 = vpack.c.b16 %v3022, %v3021
          %v3033 = vpack.c.b16 %v3024, %v3023
          %v3034 = vpack.c.b16 %v3026, %v3025
          %3043 = vmatprep.subr.bf16.mxu0 0
          %3044 = vmatpush1.bf16.msra.mxu0 %v3027
          %3045 = vmatprep.subr.bf16.mxu0 0
          %3046 = vmatpush1.bf16.msra.mxu0 %v3028
          %3047 = vmatprep.subr.bf16.mxu0 0
          %3048 = vmatpush1.bf16.msra.mxu0 %v3029
          %3049 = vmatprep.subr.bf16.mxu0 0
          %3050 = vmatpush1.bf16.msra.mxu0 %v3030
          %3051 = vmatprep.subr.bf16.mxu0 0
          %3052 = vmatpush1.bf16.msra.mxu0 %v3031
          %3053 = vmatprep.subr.bf16.mxu0 0
          %3054 = vmatpush1.bf16.msra.mxu0 %v3032
          %3055 = vmatprep.subr.bf16.mxu0 0
          %3056 = vmatpush1.bf16.msra.mxu0 %v3033
          %3057 = vmatprep.subr.bf16.mxu0 0
          %3058 = vmatpush1.bf16.msra.mxu0 %v3034
          %3059 = vmatprep.subr.bf16.mxu0 0
          %3060 = vmatpush1.bf16.msra.mxu0 0
          %3061 = vmatprep.subr.bf16.mxu0 0
          %3062 = vmatpush1.bf16.msra.mxu0 0
          %3063 = vmatprep.subr.bf16.mxu0 0
          %3064 = vmatpush1.bf16.msra.mxu0 0
          %3065 = vmatprep.subr.bf16.mxu0 0
          %3066 = vmatpush1.bf16.msra.mxu0 0
          %3067 = vmatprep.subr.bf16.mxu0 0
          %3068 = vmatpush1.bf16.msra.mxu0 0
          %3069 = vmatprep.subr.bf16.mxu0 0
          %3070 = vmatpush1.bf16.msra.mxu0 0
          %3071 = vmatprep.subr.bf16.mxu0 0
          %3072 = vmatpush1.bf16.msra.mxu0 0
          %3073 = vmatprep.subr.bf16.mxu0 0
          %3074 = vmatpush1.bf16.msra.mxu0 0
          %3075 = vmatprep.mubr.bf16.mxu0 0
          %3076 = vmatmul.mubr.bf16.gmra.mrb[0].mxu0 %v2625
          %v3077 = vpop.f32.mrb[0].mxu0
          %v3078 = vadd.f32 0.0, %v3077
          %v3079 = vpop.f32.mrb[0].mxu0
          %v3080 = vpop.f32.mrb[0].mxu0
          %v3081 = vadd.f32 0.0, %v3080
          %v3082 = vpop.f32.mrb[0].mxu0
          %3083 = vmatprep.mubr.bf16.mxu0 0
          %3084 = vmatmul.mubr.bf16.gmra.mrb[0].mxu0 %v2626
          %v3085 = vpop.f32.mrb[0].mxu0
          %v3086 = vadd.f32 0.0, %v3085
          %v3087 = vpop.f32.mrb[0].mxu0
          %v3088 = vpop.f32.mrb[0].mxu0
          %v3089 = vadd.f32 0.0, %v3088
          %v3090 = vpop.f32.mrb[0].mxu0
          %3091 = vmatprep.mubr.bf16.mxu0 0
          %3092 = vmatmul.mubr.bf16.gmra.mrb[0].mxu0 %v2627
          %v3093 = vpop.f32.mrb[0].mxu0
          %v3094 = vadd.f32 0.0, %v3093
          %v3095 = vpop.f32.mrb[0].mxu0
          %v3096 = vpop.f32.mrb[0].mxu0
          %v3097 = vadd.f32 0.0, %v3096
          %v3098 = vpop.f32.mrb[0].mxu0
          %3099 = vmatprep.mubr.bf16.mxu0 0
          %3100 = vmatmul.mubr.bf16.gmra.mrb[0].mxu0 %v2628
          %v3101 = vpop.f32.mrb[0].mxu0
          %v3102 = vadd.f32 0.0, %v3101
          %v3103 = vpop.f32.mrb[0].mxu0
          %v3104 = vpop.f32.mrb[0].mxu0
          %v3105 = vadd.f32 0.0, %v3104
          %v3106 = vpop.f32.mrb[0].mxu0
          %3107 = vmatprep.mubr.bf16.mxu0 0
          %3108 = vmatmul.mubr.bf16.gmra.mrb[0].mxu0 %v2629
          %v3109 = vpop.f32.mrb[0].mxu0
          %v3110 = vadd.f32 0.0, %v3109
          %v3111 = vpop.f32.mrb[0].mxu0
          %v3112 = vpop.f32.mrb[0].mxu0
          %v3113 = vadd.f32 0.0, %v3112
          %v3114 = vpop.f32.mrb[0].mxu0
          %3115 = vmatprep.mubr.bf16.mxu0 0
          %3116 = vmatmul.mubr.bf16.gmra.mrb[0].mxu0 %v2630
          %v3117 = vpop.f32.mrb[0].mxu0
          %v3118 = vadd.f32 0.0, %v3117
          %v3119 = vpop.f32.mrb[0].mxu0
          %v3120 = vpop.f32.mrb[0].mxu0
          %v3121 = vadd.f32 0.0, %v3120
          %v3122 = vpop.f32.mrb[0].mxu0
          %3123 = vmatprep.mubr.bf16.mxu0 0
          %3124 = vmatmul.mubr.bf16.gmra.mrb[0].mxu0 %v2631
          %v3125 = vpop.f32.mrb[0].mxu0
          %v3126 = vadd.f32 0.0, %v3125
          %v3127 = vpop.f32.mrb[0].mxu0
          %v3128 = vpop.f32.mrb[0].mxu0
          %v3129 = vadd.f32 0.0, %v3128
          %v3130 = vpop.f32.mrb[0].mxu0
          %3131 = vmatprep.mubr.bf16.mxu0 0
          %3132 = vmatmul.mubr.bf16.gmra.mrb[0].mxu0 %v2632
          %v3133 = vpop.f32.mrb[0].mxu0
          %v3134 = vadd.f32 0.0, %v3133
          %v3135 = vpop.f32.mrb[0].mxu0
          %v3136 = vpop.f32.mrb[0].mxu0
          %v3137 = vadd.f32 0.0, %v3136
          %v3138 = vpop.f32.mrb[0].mxu0
          %3139 = vdwg.mxu0
          %v3140 = vadd.f32 %v2916, %v3078
          %v3141 = vadd.f32 %v2919, %v3081
          %v3142 = vadd.f32 %v2924, %v3086
          %v3143 = vadd.f32 %v2927, %v3089
          %v3144 = vadd.f32 %v2932, %v3094
          %v3145 = vadd.f32 %v2935, %v3097
          %v3146 = vadd.f32 %v2940, %v3102
          %v3147 = vadd.f32 %v2943, %v3105
          %v3148 = vadd.f32 %v2948, %v3110
          %v3149 = vadd.f32 %v2951, %v3113
          %v3150 = vadd.f32 %v2956, %v3118
          %v3151 = vadd.f32 %v2959, %v3121
          %v3152 = vadd.f32 %v2964, %v3126
          %v3153 = vadd.f32 %v2967, %v3129
          %v3154 = vadd.f32 %v2972, %v3134
          %v3155 = vadd.f32 %v2975, %v3137
          %v3156 = vld [vmem:[%s15] sm:$0x1]
          %v3158 = vlaneseq
          %v3159 = vshrl.u32 %v3158, 7
          %v3160 = vsub.s32 0, %v3159
          %v3161 = vrot.slane %v3156, %v3160
          %v3163 = vadd.f32 %v3140, %v3161
          %v3164 = vadd.f32 %v3141, %v3161
          %v3165 = vadd.f32 %v3142, %v3161
          %v3166 = vadd.f32 %v3143, %v3161
          %v3167 = vadd.f32 %v3144, %v3161
          %v3168 = vadd.f32 %v3145, %v3161
          %v3169 = vadd.f32 %v3146, %v3161
          %v3170 = vadd.f32 %v3147, %v3161
          %v3171 = vadd.f32 %v3148, %v3161
          %v3172 = vadd.f32 %v3149, %v3161
          %v3173 = vadd.f32 %v3150, %v3161
          %v3174 = vadd.f32 %v3151, %v3161
          %v3175 = vadd.f32 %v3152, %v3161
          %v3176 = vadd.f32 %v3153, %v3161
          %v3177 = vadd.f32 %v3154, %v3161
          %v3178 = vadd.f32 %v3155, %v3161
          %v3179 = vmax.f32 %v3163, 0.0
          %v3180 = vmax.f32 %v3164, 0.0
          %v3181 = vmax.f32 %v3165, 0.0
          %v3182 = vmax.f32 %v3166, 0.0
          %v3183 = vmax.f32 %v3167, 0.0
          %v3184 = vmax.f32 %v3168, 0.0
          %v3185 = vmax.f32 %v3169, 0.0
          %v3186 = vmax.f32 %v3170, 0.0
          %v3187 = vmax.f32 %v3171, 0.0
          %v3188 = vmax.f32 %v3172, 0.0
          %v3189 = vmax.f32 %v3173, 0.0
          %v3190 = vmax.f32 %v3174, 0.0
          %v3191 = vmax.f32 %v3175, 0.0
          %v3192 = vmax.f32 %v3176, 0.0
          %v3193 = vmax.f32 %v3177, 0.0
          %v3194 = vmax.f32 %v3178, 0.0
          %v3195 = vpack.c.bf16 %v3180, %v3179
          %v3196 = vpack.c.bf16 %v3182, %v3181
          %v3197 = vpack.c.bf16 %v3184, %v3183
          %v3198 = vpack.c.bf16 %v3186, %v3185
          %v3199 = vpack.c.bf16 %v3188, %v3187
          %v3200 = vpack.c.bf16 %v3190, %v3189
          %v3201 = vpack.c.bf16 %v3192, %v3191
          %v3202 = vpack.c.bf16 %v3194, %v3193
          %v3203 = vld [vmem:[%s16] sm:$0xf]
          %v3204 = vld [vmem:[%s16 + $0x4] sm:$0xf]
          %v3205 = vld [vmem:[%s16 + $0x8] sm:$0xf]
          %v3206 = vld [vmem:[%s16 + $0xc] sm:$0xf]
          %v3207 = vld [vmem:[%s16 + $0x10] sm:$0xf]
          %v3208 = vld [vmem:[%s16 + $0x14] sm:$0xf]
          %v3209 = vld [vmem:[%s16 + $0x18] sm:$0xf]
          %v3210 = vld [vmem:[%s16 + $0x1c] sm:$0xf]
          %v3211 = vld [vmem:[%s16 + $0x20] sm:$0xf]
          %v3212 = vld [vmem:[%s16 + $0x24] sm:$0xf]
          %v3213 = vld [vmem:[%s16 + $0x28] sm:$0xf]
          %v3214 = vld [vmem:[%s16 + $0x2c] sm:$0xf]
          %v3215 = vld [vmem:[%s16 + $0x30] sm:$0xf]
          %v3216 = vld [vmem:[%s16 + $0x34] sm:$0xf]
          %v3217 = vld [vmem:[%s16 + $0x38] sm:$0xf]
          %v3218 = vld [vmem:[%s16 + $0x3c] sm:$0xf]
          %v3219 = vld [vmem:[%s17] sm:$0x1]
          %v3221 = vlaneseq
          %v3222 = vshrl.u32 %v3221, 7
          %v3223 = vsub.s32 0, %v3222
          %v3224 = vrot.slane %v3219, %v3223
          %v3242 = vunpack.c.l.b16 %v3203
          %v3243 = vunpack.c.l.b16 %v3204
          %v3244 = vunpack.c.l.b16 %v3205
          %v3245 = vunpack.c.l.b16 %v3206
          %v3246 = vunpack.c.l.b16 %v3207
          %v3247 = vunpack.c.l.b16 %v3208
          %v3248 = vunpack.c.l.b16 %v3209
          %v3249 = vunpack.c.l.b16 %v3210
          %v3250 = vunpack.c.l.b16 %v3211
          %v3251 = vunpack.c.l.b16 %v3212
          %v3252 = vunpack.c.l.b16 %v3213
          %v3253 = vunpack.c.l.b16 %v3214
          %v3254 = vunpack.c.l.b16 %v3215
          %v3255 = vunpack.c.l.b16 %v3216
          %v3256 = vunpack.c.l.b16 %v3217
          %v3257 = vunpack.c.l.b16 %v3218
          %v3258 = vpack.c.b16 %v3243, %v3242
          %v3259 = vpack.c.b16 %v3245, %v3244
          %v3260 = vpack.c.b16 %v3247, %v3246
          %v3261 = vpack.c.b16 %v3249, %v3248
          %v3262 = vpack.c.b16 %v3251, %v3250
          %v3263 = vpack.c.b16 %v3253, %v3252
          %v3264 = vpack.c.b16 %v3255, %v3254
          %v3265 = vpack.c.b16 %v3257, %v3256
          %3274 = vmatprep.subr.bf16.mxu0 0
          %3275 = vmatpush1.bf16.msra.mxu0 %v3258
          %3276 = vmatprep.subr.bf16.mxu0 0
          %3277 = vmatpush1.bf16.msra.mxu0 %v3259
          %3278 = vmatprep.subr.bf16.mxu0 0
          %3279 = vmatpush1.bf16.msra.mxu0 %v3260
          %3280 = vmatprep.subr.bf16.mxu0 0
          %3281 = vmatpush1.bf16.msra.mxu0 %v3261
          %3282 = vmatprep.subr.bf16.mxu0 0
          %3283 = vmatpush1.bf16.msra.mxu0 %v3262
          %3284 = vmatprep.subr.bf16.mxu0 0
          %3285 = vmatpush1.bf16.msra.mxu0 %v3263
          %3286 = vmatprep.subr.bf16.mxu0 0
          %3287 = vmatpush1.bf16.msra.mxu0 %v3264
          %3288 = vmatprep.subr.bf16.mxu0 0
          %3289 = vmatpush1.bf16.msra.mxu0 %v3265
          %3290 = vmatprep.subr.bf16.mxu0 0
          %3291 = vmatpush1.bf16.msra.mxu0 0
          %3292 = vmatprep.subr.bf16.mxu0 0
          %3293 = vmatpush1.bf16.msra.mxu0 0
          %3294 = vmatprep.subr.bf16.mxu0 0
          %3295 = vmatpush1.bf16.msra.mxu0 0
          %3296 = vmatprep.subr.bf16.mxu0 0
          %3297 = vmatpush1.bf16.msra.mxu0 0
          %3298 = vmatprep.subr.bf16.mxu0 0
          %3299 = vmatpush1.bf16.msra.mxu0 0
          %3300 = vmatprep.subr.bf16.mxu0 0
          %3301 = vmatpush1.bf16.msra.mxu0 0
          %3302 = vmatprep.subr.bf16.mxu0 0
          %3303 = vmatpush1.bf16.msra.mxu0 0
          %3304 = vmatprep.subr.bf16.mxu0 0
          %3305 = vmatpush1.bf16.msra.mxu0 0
          %3306 = vmatprep.mubr.bf16.mxu0 0
          %3307 = vmatmul.mubr.bf16.gmra.mrb[0].mxu0 %v3195
          %v3308 = vpop.f32.mrb[0].mxu0
          %v3309 = vadd.f32 %v3224, %v3308
          %v3310 = vpop.f32.mrb[0].mxu0
          %v3311 = vpop.f32.mrb[0].mxu0
          %v3312 = vadd.f32 %v3224, %v3311
          %v3313 = vpop.f32.mrb[0].mxu0
          %3314 = vmatprep.mubr.bf16.mxu0 0
          %3315 = vmatmul.mubr.bf16.gmra.mrb[0].mxu0 %v3196
          %v3316 = vpop.f32.mrb[0].mxu0
          %v3317 = vadd.f32 %v3224, %v3316
          %v3318 = vpop.f32.mrb[0].mxu0
          %v3319 = vpop.f32.mrb[0].mxu0
          %v3320 = vadd.f32 %v3224, %v3319
          %v3321 = vpop.f32.mrb[0].mxu0
          %3322 = vmatprep.mubr.bf16.mxu0 0
          %3323 = vmatmul.mubr.bf16.gmra.mrb[0].mxu0 %v3197
          %v3324 = vpop.f32.mrb[0].mxu0
          %v3325 = vadd.f32 %v3224, %v3324
          %v3326 = vpop.f32.mrb[0].mxu0
          %v3327 = vpop.f32.mrb[0].mxu0
          %v3328 = vadd.f32 %v3224, %v3327
          %v3329 = vpop.f32.mrb[0].mxu0
          %3330 = vmatprep.mubr.bf16.mxu0 0
          %3331 = vmatmul.mubr.bf16.gmra.mrb[0].mxu0 %v3198
          %v3332 = vpop.f32.mrb[0].mxu0
          %v3333 = vadd.f32 %v3224, %v3332
          %v3334 = vpop.f32.mrb[0].mxu0
          %v3335 = vpop.f32.mrb[0].mxu0
          %v3336 = vadd.f32 %v3224, %v3335
          %v3337 = vpop.f32.mrb[0].mxu0
          %3338 = vmatprep.mubr.bf16.mxu0 0
          %3339 = vmatmul.mubr.bf16.gmra.mrb[0].mxu0 %v3199
          %v3340 = vpop.f32.mrb[0].mxu0
          %v3341 = vadd.f32 %v3224, %v3340
          %v3342 = vpop.f32.mrb[0].mxu0
          %v3343 = vpop.f32.mrb[0].mxu0
          %v3344 = vadd.f32 %v3224, %v3343
          %v3345 = vpop.f32.mrb[0].mxu0
          %3346 = vmatprep.mubr.bf16.mxu0 0
          %3347 = vmatmul.mubr.bf16.gmra.mrb[0].mxu0 %v3200
          %v3348 = vpop.f32.mrb[0].mxu0
          %v3349 = vadd.f32 %v3224, %v3348
          %v3350 = vpop.f32.mrb[0].mxu0
          %v3351 = vpop.f32.mrb[0].mxu0
          %v3352 = vadd.f32 %v3224, %v3351
          %v3353 = vpop.f32.mrb[0].mxu0
          %3354 = vmatprep.mubr.bf16.mxu0 0
          %3355 = vmatmul.mubr.bf16.gmra.mrb[0].mxu0 %v3201
          %v3356 = vpop.f32.mrb[0].mxu0
          %v3357 = vadd.f32 %v3224, %v3356
          %v3358 = vpop.f32.mrb[0].mxu0
          %v3359 = vpop.f32.mrb[0].mxu0
          %v3360 = vadd.f32 %v3224, %v3359
          %v3361 = vpop.f32.mrb[0].mxu0
          %3362 = vmatprep.mubr.bf16.mxu0 0
          %3363 = vmatmul.mubr.bf16.gmra.mrb[0].mxu0 %v3202
          %v3364 = vpop.f32.mrb[0].mxu0
          %v3365 = vadd.f32 %v3224, %v3364
          %v3366 = vpop.f32.mrb[0].mxu0
          %v3367 = vpop.f32.mrb[0].mxu0
          %v3368 = vadd.f32 %v3224, %v3367
          %v3369 = vpop.f32.mrb[0].mxu0
          %3370 = vdwg.mxu0
          %v3371 = vlaneseq
          %v3372 = vand.u32 %v3371, 127
          %vm3373 = vcmp.lt.s32.totalorder %v3372, 8
          %v3374 = vsel %vm3373, %v3309, -1e+30
          %v3375 = vsel %vm3373, %v3312, -1e+30
          %v3376 = vsel %vm3373, %v3317, -1e+30
          %v3377 = vsel %vm3373, %v3320, -1e+30
          %v3378 = vsel %vm3373, %v3325, -1e+30
          %v3379 = vsel %vm3373, %v3328, -1e+30
          %v3380 = vsel %vm3373, %v3333, -1e+30
          %v3381 = vsel %vm3373, %v3336, -1e+30
          %v3382 = vsel %vm3373, %v3341, -1e+30
          %v3383 = vsel %vm3373, %v3344, -1e+30
          %v3384 = vsel %vm3373, %v3349, -1e+30
          %v3385 = vsel %vm3373, %v3352, -1e+30
          %v3386 = vsel %vm3373, %v3357, -1e+30
          %v3387 = vsel %vm3373, %v3360, -1e+30
          %v3388 = vsel %vm3373, %v3365, -1e+30
          %v3389 = vsel %vm3373, %v3368, -1e+30
          %3390 = vmax.xlane.f32.xlu0 %v3374
          %v3391 = vpop.xlane.xlu0 %3390
          %3392 = vmax.xlane.f32.xlu0 %v3375
          %v3393 = vpop.xlane.xlu0 %3392
          %3394 = vmax.xlane.f32.xlu0 %v3376
          %v3395 = vpop.xlane.xlu0 %3394
          %3396 = vmax.xlane.f32.xlu0 %v3377
          %v3397 = vpop.xlane.xlu0 %3396
          %3398 = vmax.xlane.f32.xlu0 %v3378
          %v3399 = vpop.xlane.xlu0 %3398
          %3400 = vmax.xlane.f32.xlu0 %v3379
          %v3401 = vpop.xlane.xlu0 %3400
          %3402 = vmax.xlane.f32.xlu0 %v3380
          %v3403 = vpop.xlane.xlu0 %3402
          %3404 = vmax.xlane.f32.xlu0 %v3381
          %v3405 = vpop.xlane.xlu0 %3404
          %3406 = vmax.xlane.f32.xlu0 %v3382
          %v3407 = vpop.xlane.xlu0 %3406
          %3408 = vmax.xlane.f32.xlu0 %v3383
          %v3409 = vpop.xlane.xlu0 %3408
          %3410 = vmax.xlane.f32.xlu0 %v3384
          %v3411 = vpop.xlane.xlu0 %3410
          %3412 = vmax.xlane.f32.xlu0 %v3385
          %v3413 = vpop.xlane.xlu0 %3412
          %3414 = vmax.xlane.f32.xlu0 %v3386
          %v3415 = vpop.xlane.xlu0 %3414
          %3416 = vmax.xlane.f32.xlu0 %v3387
          %v3417 = vpop.xlane.xlu0 %3416
          %3418 = vmax.xlane.f32.xlu0 %v3388
          %v3419 = vpop.xlane.xlu0 %3418
          %3420 = vmax.xlane.f32.xlu0 %v3389
          %v3421 = vpop.xlane.xlu0 %3420
          %v3422 = vsub.f32 %v3374, %v3391
          %v3423 = vsub.f32 %v3375, %v3393
          %v3424 = vsub.f32 %v3376, %v3395
          %v3425 = vsub.f32 %v3377, %v3397
          %v3426 = vsub.f32 %v3378, %v3399
          %v3427 = vsub.f32 %v3379, %v3401
          %v3428 = vsub.f32 %v3380, %v3403
          %v3429 = vsub.f32 %v3381, %v3405
          %v3430 = vsub.f32 %v3382, %v3407
          %v3431 = vsub.f32 %v3383, %v3409
          %v3432 = vsub.f32 %v3384, %v3411
          %v3433 = vsub.f32 %v3385, %v3413
          %v3434 = vsub.f32 %v3386, %v3415
          %v3435 = vsub.f32 %v3387, %v3417
          %v3436 = vsub.f32 %v3388, %v3419
          %v3437 = vsub.f32 %v3389, %v3421
          %v3438 = vmul.f32 %v3422, 1.442695
          %v3439 = vpow.pop %v3438
          %v3440 = vmul.f32 %v3423, 1.442695
          %v3441 = vpow.pop %v3440
          %v3442 = vmul.f32 %v3424, 1.442695
          %v3443 = vpow.pop %v3442
          %v3444 = vmul.f32 %v3425, 1.442695
          %v3445 = vpow.pop %v3444
          %v3446 = vmul.f32 %v3426, 1.442695
          %v3447 = vpow.pop %v3446
          %v3448 = vmul.f32 %v3427, 1.442695
          %v3449 = vpow.pop %v3448
          %v3450 = vmul.f32 %v3428, 1.442695
          %v3451 = vpow.pop %v3450
          %v3452 = vmul.f32 %v3429, 1.442695
          %v3453 = vpow.pop %v3452
          %v3454 = vmul.f32 %v3430, 1.442695
          %v3455 = vpow.pop %v3454
          %v3456 = vmul.f32 %v3431, 1.442695
          %v3457 = vpow.pop %v3456
          %v3458 = vmul.f32 %v3432, 1.442695
          %v3459 = vpow.pop %v3458
          %v3460 = vmul.f32 %v3433, 1.442695
          %v3461 = vpow.pop %v3460
          %v3462 = vmul.f32 %v3434, 1.442695
          %v3463 = vpow.pop %v3462
          %v3464 = vmul.f32 %v3435, 1.442695
          %v3465 = vpow.pop %v3464
          %v3466 = vmul.f32 %v3436, 1.442695
          %v3467 = vpow.pop %v3466
          %v3468 = vmul.f32 %v3437, 1.442695
          %v3469 = vpow.pop %v3468
          %3470 = vadd.xlane.f32.xlu0 %v3439
          %v3471 = vpop.xlane.xlu0 %3470
          %3472 = vadd.xlane.f32.xlu0 %v3441
          %v3473 = vpop.xlane.xlu0 %3472
          %3474 = vadd.xlane.f32.xlu0 %v3443
          %v3475 = vpop.xlane.xlu0 %3474
          %3476 = vadd.xlane.f32.xlu0 %v3445
          %v3477 = vpop.xlane.xlu0 %3476
          %3478 = vadd.xlane.f32.xlu0 %v3447
          %v3479 = vpop.xlane.xlu0 %3478
          %3480 = vadd.xlane.f32.xlu0 %v3449
          %v3481 = vpop.xlane.xlu0 %3480
          %3482 = vadd.xlane.f32.xlu0 %v3451
          %v3483 = vpop.xlane.xlu0 %3482
          %3484 = vadd.xlane.f32.xlu0 %v3453
          %v3485 = vpop.xlane.xlu0 %3484
          %3486 = vadd.xlane.f32.xlu0 %v3455
          %v3487 = vpop.xlane.xlu0 %3486
          %3488 = vadd.xlane.f32.xlu0 %v3457
          %v3489 = vpop.xlane.xlu0 %3488
          %3490 = vadd.xlane.f32.xlu0 %v3459
          %v3491 = vpop.xlane.xlu0 %3490
          %3492 = vadd.xlane.f32.xlu0 %v3461
          %v3493 = vpop.xlane.xlu0 %3492
          %3494 = vadd.xlane.f32.xlu0 %v3463
          %v3495 = vpop.xlane.xlu0 %3494
          %3496 = vadd.xlane.f32.xlu0 %v3465
          %v3497 = vpop.xlane.xlu0 %3496
          %3498 = vadd.xlane.f32.xlu0 %v3467
          %v3499 = vpop.xlane.xlu0 %3498
          %3500 = vadd.xlane.f32.xlu0 %v3469
          %v3501 = vpop.xlane.xlu0 %3500
          %v3502 = vlog2.pop %v3471
          %v3503 = vmul.f32 %v3502, 0.6931472
          %v3504 = vlog2.pop %v3473
          %v3505 = vmul.f32 %v3504, 0.6931472
          %v3506 = vlog2.pop %v3475
          %v3507 = vmul.f32 %v3506, 0.6931472
          %v3508 = vlog2.pop %v3477
          %v3509 = vmul.f32 %v3508, 0.6931472
          %v3510 = vlog2.pop %v3479
          %v3511 = vmul.f32 %v3510, 0.6931472
          %v3512 = vlog2.pop %v3481
          %v3513 = vmul.f32 %v3512, 0.6931472
          %v3514 = vlog2.pop %v3483
          %v3515 = vmul.f32 %v3514, 0.6931472
          %v3516 = vlog2.pop %v3485
          %v3517 = vmul.f32 %v3516, 0.6931472
          %v3518 = vlog2.pop %v3487
          %v3519 = vmul.f32 %v3518, 0.6931472
          %v3520 = vlog2.pop %v3489
          %v3521 = vmul.f32 %v3520, 0.6931472
          %v3522 = vlog2.pop %v3491
          %v3523 = vmul.f32 %v3522, 0.6931472
          %v3524 = vlog2.pop %v3493
          %v3525 = vmul.f32 %v3524, 0.6931472
          %v3526 = vlog2.pop %v3495
          %v3527 = vmul.f32 %v3526, 0.6931472
          %v3528 = vlog2.pop %v3497
          %v3529 = vmul.f32 %v3528, 0.6931472
          %v3530 = vlog2.pop %v3499
          %v3531 = vmul.f32 %v3530, 0.6931472
          %v3532 = vlog2.pop %v3501
          %v3533 = vmul.f32 %v3532, 0.6931472
          %v3534 = vadd.f32 %v3503, %v3391
          %v3535 = vadd.f32 %v3505, %v3393
          %v3536 = vadd.f32 %v3507, %v3395
          %v3537 = vadd.f32 %v3509, %v3397
          %v3538 = vadd.f32 %v3511, %v3399
          %v3539 = vadd.f32 %v3513, %v3401
          %v3540 = vadd.f32 %v3515, %v3403
          %v3541 = vadd.f32 %v3517, %v3405
          %v3542 = vadd.f32 %v3519, %v3407
          %v3543 = vadd.f32 %v3521, %v3409
          %v3544 = vadd.f32 %v3523, %v3411
          %v3545 = vadd.f32 %v3525, %v3413
          %v3546 = vadd.f32 %v3527, %v3415
          %v3547 = vadd.f32 %v3529, %v3417
          %v3548 = vadd.f32 %v3531, %v3419
          %v3549 = vadd.f32 %v3533, %v3421
          %v3550 = vsub.f32 %v3374, %v3534
          %v3551 = vsub.f32 %v3375, %v3535
          %v3552 = vsub.f32 %v3376, %v3536
          %v3553 = vsub.f32 %v3377, %v3537
          %v3554 = vsub.f32 %v3378, %v3538
          %v3555 = vsub.f32 %v3379, %v3539
          %v3556 = vsub.f32 %v3380, %v3540
          %v3557 = vsub.f32 %v3381, %v3541
          %v3558 = vsub.f32 %v3382, %v3542
          %v3559 = vsub.f32 %v3383, %v3543
          %v3560 = vsub.f32 %v3384, %v3544
          %v3561 = vsub.f32 %v3385, %v3545
          %v3562 = vsub.f32 %v3386, %v3546
          %v3563 = vsub.f32 %v3387, %v3547
          %v3564 = vsub.f32 %v3388, %v3548
          %v3565 = vsub.f32 %v3389, %v3549
          %3566 = vst [vmem:[%s651] sm:$0xff] %v3550
          %3567 = vst [vmem:[%s651 + $0x8] sm:$0xff] %v3551
          %3568 = vst [vmem:[%s651 + $0x10] sm:$0xff] %v3552
          %3569 = vst [vmem:[%s651 + $0x18] sm:$0xff] %v3553
          %3570 = vst [vmem:[%s651 + $0x20] sm:$0xff] %v3554
          %3571 = vst [vmem:[%s651 + $0x28] sm:$0xff] %v3555
          %3572 = vst [vmem:[%s651 + $0x30] sm:$0xff] %v3556
          %3573 = vst [vmem:[%s651 + $0x38] sm:$0xff] %v3557
          %3574 = vst [vmem:[%s651 + $0x40] sm:$0xff] %v3558
          %3575 = vst [vmem:[%s651 + $0x48] sm:$0xff] %v3559
          %3576 = vst [vmem:[%s651 + $0x50] sm:$0xff] %v3560
          %3577 = vst [vmem:[%s651 + $0x58] sm:$0xff] %v3561
          %3578 = vst [vmem:[%s651 + $0x60] sm:$0xff] %v3562
          %3579 = vst [vmem:[%s651 + $0x68] sm:$0xff] %v3563
          %3580 = vst [vmem:[%s651 + $0x70] sm:$0xff] %v3564
          %3581 = vst [vmem:[%s651 + $0x78] sm:$0xff] %v3565
        $region124: #{gin_forward.1} parent=111 // pred_fallthru
          _
      $region112: #{gin_forward.1} parent=91 // pred_fallthru
        _
      %p3582 = scmp.eq.s32.totalorder %s34, 2
      %s3583 = scalar_select %p3582, %s35, 0
      %s3584 = smul.u32 16, %s3583
      %p3585 = scmp.lt.s32.totalorder %s3584, 15
      %s3586 = scalar_select %p3585, %s3584, 15
      %s3587 = smul.addr %s3586, 8
      %s3588 = scalar_lea.vmem %s18, %s3587
      // Predicated region
      $region125: #{gin_forward.1} parent=91 // pred_check
        %p3589 = pneg %p464
      $region126: #{gin_forward.1} parent=91 // pred_check_branch
        %3591 = sbr.rel (%p3589) target = $region128
      $region127: #{gin_forward.1} parent=91 // pred_region
        %p3592 = scmp.eq.s32.totalorder %s34, 2
        %s3593 = scalar_select %p3592, %s35, 0
        %s3594 = smul.u32 16, %s3593
      $region128: #{gin_forward.1} parent=91 // pred_fallthru
        _
    $region92: #{gin_forward.1} parent=5 // pred_fallthru
      _
    %p3595 = scmp.le.s32.totalorder 2, %s24
    // Predicated region
    $region129: #{gin_forward.1} parent=5 // pred_check
      %p3596 = pneg %p3595
    $region130: #{gin_forward.1} parent=5 // pred_check_branch
      %3598 = sbr.rel (%p3596) target = $region132
    $region131: #{gin_forward.1} parent=5 // pred_region
      %s3599 = ssub.s32 %s24, 2
      // Predicated region
      $region133: #{gin_forward.1} parent=131 // pred_check
        %p3600 = pneg %p470
      $region134: #{gin_forward.1} parent=131 // pred_check_branch
        %3602 = sbr.rel (%p3600) target = $region136
      $region135: #{gin_forward.1} parent=131 // pred_region
        %p3603 = scmp.eq.s32.totalorder %s37, 2
        %s3604 = scalar_select %p3603, %s38, 0
        %s3605 = smul.u32 16, %s3604
        %p3606 = scmp.lt.s32.totalorder %s3605, 15
        %s3607 = scalar_select %p3606, %s3605, 15
        %s3608 = smul.addr %s3607, 8
        %s3609 = scalar_lea.vmem %s18, %s3608
      $region136: #{gin_forward.1} parent=131 // pred_fallthru
        _
    $region132: #{gin_forward.1} parent=5 // pred_fallthru
      _
  $region6: #{gin_forward.1} parent=0 // loop_footer
    %s28 = sadd.s32 1, %s24
  $region7: #{gin_forward.1} parent=0 // loop_footer_branch
    %23 = sbr.rel target = $region3
  $region8: #{gin_forward.1} parent=0 // loop_exit
    _

</llo_original>
